<compile_context>
chip_gen: v5e
topology: v5e:2x2
jax: 0.10.0
libtpu: 0.0.40
codegen_flags: <defaults>
</compile_context>

<pallas_src>
import jax
import jax.numpy as jnp
from jax.experimental import pallas as pl
from jax.experimental.pallas import tpu as pltpu

FEAT = 2048    # resnet feature width (input of Linear_layer)
NCLS = 80      # Linear_layer output width
NPAD = 128     # lane-dense padded output width (sliced back to NCLS in the wrapper)


def net_kernel(x_ref, w1_ref, b1_ref, w2_ref, b2_ref, out_ref, acc_ref):
    """One grid step: batch block i (axis 0), feature chunk f (axis 1).

    x_ref  : [block_b, C, HW]     image pixels, spatial on the lane axis
    w1_ref : [C, chunk_f]         1x1-conv weight chunk (stand-in backbone stage)
    b1_ref : [1, chunk_f]         1x1-conv bias chunk
    w2_ref : [chunk_f, NPAD]      Linear_layer weight chunk (pre-scaled by 1/HW, padded)
    b2_ref : [1, NPAD]            Linear_layer bias (padded)
    out_ref: [block_b, NPAD]      padded logits
    acc_ref: [block_b, NPAD] f32  resident logits accumulator across feature chunks
    """
    f = pl.program_id(1)

    @pl.when(f == 0)
    def _init():
        acc_ref[...] = jnp.zeros_like(acc_ref)

    x = x_ref[...]                                  # [block_b, C, HW]  f32
    w1 = w1_ref[...]                                # [C, chunk_f]      f32
    C = x.shape[1]

    # Stage 1: 1x1 conv over channels. K = C is tiny, so contract on the VPU as C
    # broadcast multiply-adds (f32; v5e has no bf16 VPU) — avoids a K-padded MXU pass.
    x_c = x[:, 0, :]                                # [block_b, HW]
    h = x_c[:, :, None] * w1[0:1, :][None, :, :]    # [block_b, HW, chunk_f]
    for c in range(1, C):
        x_c = x[:, c, :]
        h = h + x_c[:, :, None] * w1[c:c + 1, :][None, :, :]
    h = h + b1_ref[...][None, :, :]                 # +bias (broadcast)
    h = jnp.maximum(h, 0.0)                         # ReLU (VPU)

    # Global average pool over HW: plain sum — the 1/HW scale is folded into w2.
    pooled = jnp.sum(h, axis=1)                     # [block_b, chunk_f] f32

    # Stage 2: partial Linear(2048 -> 80/128pad) on the MXU, bf16 in / f32 accumulate.
    acc_ref[...] += jnp.dot(pooled.astype(jnp.bfloat16),
                            w2_ref[...].astype(jnp.bfloat16),
                            preferred_element_type=jnp.float32)

    @pl.when(f == pl.num_programs(1) - 1)
    def _finish():
        out_ref[...] = (acc_ref[...] + b2_ref[...]).astype(out_ref.dtype)


def net_forward(x_nchw, w1, b1, w2, b2, *, chunk_f=512, block_b=None):
    """x_nchw: [B, C, H, W] float32 -> logits [B, 80] float32."""
    B, C, H, W = x_nchw.shape
    HW = H * W
    x = x_nchw.reshape(B, C, HW)        # pure reshape, no transpose HLO

    if block_b is None:
        block_b = B if B <= 8 else max(d for d in (8, 4, 2, 1) if B % d == 0)
    assert B % block_b == 0 and FEAT % chunk_f == 0
    nb = B // block_b
    nf = FEAT // chunk_f

    # Fold the avg-pool 1/HW scale into w2 and pad the output width to 128 lanes.
    w2p = jnp.zeros((FEAT, NPAD), jnp.float32).at[:, :NCLS].set(w2 / HW)
    b2p = jnp.zeros((1, NPAD), jnp.float32).at[:, :NCLS].set(b2)

    flops = 2.0 * B * HW * C * FEAT + 2.0 * B * FEAT * NPAD
    bytes_accessed = 4 * (x.size + w1.size + b1.size + w2p.size + b2p.size + B * NPAD)

    out = pl.pallas_call(
        net_kernel,
        out_shape=jax.ShapeDtypeStruct((B, NPAD), jnp.float32),
        grid_spec=pltpu.PrefetchScalarGridSpec(
            num_scalar_prefetch=0,
            grid=(nb, nf),                                   # reduction axis (FEAT) last
            in_specs=[
                pl.BlockSpec((block_b, C, HW), lambda i, f: (i, 0, 0)),   # x
                pl.BlockSpec((C, chunk_f),     lambda i, f: (0, f)),      # w1
                pl.BlockSpec((1, chunk_f),     lambda i, f: (0, f)),      # b1
                pl.BlockSpec((chunk_f, NPAD),  lambda i, f: (f, 0)),      # w2 (scaled/padded)
                pl.BlockSpec((1, NPAD),        lambda i, f: (0, 0)),      # b2 (padded)
            ],
            out_specs=pl.BlockSpec((block_b, NPAD), lambda i, f: (i, 0)),
            scratch_shapes=[pltpu.VMEM((block_b, NPAD), jnp.float32)],
        ),
        compiler_params=pltpu.CompilerParams(
            dimension_semantics=("parallel", "arbitrary"),
            vmem_limit_bytes=32 * 1024 * 1024,   # safe on v5e/v6e/v7x; blocks are small
        ),
        cost_estimate=pl.CostEstimate(
            flops=int(flops), transcendentals=0, bytes_accessed=int(bytes_accessed)),
    )(x, w1, b1, w2p, b2p)

    return out[:, :NCLS]


def init_params(key, c_in):
    """Deterministic parameter init (no checkpoint loading)."""
    k1, k2, k3, k4 = jax.random.split(key, 4)
    # stand-in backbone stage: 1x1 conv C -> 2048
    w1 = jax.random.normal(k1, (c_in, FEAT), jnp.float32) * (1.0 / jnp.sqrt(c_in))
    b1 = jax.random.normal(k2, (1, FEAT), jnp.float32) * 0.01
    # Linear_layer: torch stores [80, 2048]; we keep the transposed [2048, 80] form.
    w2 = jax.random.normal(k3, (FEAT, NCLS), jnp.float32) * (1.0 / jnp.sqrt(FEAT))
    b2 = jax.random.normal(k4, (1, NCLS), jnp.float32) * 0.01
    return w1, b1, w2, b2


if __name__ == "__main__":
    key = jax.random.PRNGKey(0)
    kx, kp = jax.random.split(key)

    B, C, H, W = 2, 3, 16, 16                     # small NCHW image batch
    x = jax.random.normal(kx, (B, C, H, W), jnp.float32)
    w1, b1, w2, b2 = init_params(kp, C)

    out = jax.block_until_ready(net_forward(x, w1, b1, w2, b2))

    # Pure-JAX f32 reference for a sanity check of the fused kernel
    # (kernel uses bf16 MXU operands for the final Linear, hence the loose tolerance).
    xr = jnp.transpose(x, (0, 2, 3, 1)).reshape(B, H * W, C)
    hr = jnp.maximum(jnp.einsum("bhc,ck->bhk", xr, w1) + b1, 0.0)
    ref = jnp.mean(hr, axis=1) @ w2 + b2

    assert out.shape == (B, NCLS)
    assert jnp.allclose(out, ref, atol=2e-2, rtol=2e-2), \
        float(jnp.max(jnp.abs(out - ref)))
    print("KERNEL_OK")
</pallas_src>

<mosaic_0001>
module attributes {stable_mosaic.version = 11 : i64} {
  func.func @net_kernel(%arg0: i32, %arg1: i32, %arg2: memref<2x3x256xf32, #tpu.memory_space<vmem>>, %arg3: memref<3x512xf32, #tpu.memory_space<vmem>>, %arg4: memref<1x512xf32, #tpu.memory_space<vmem>>, %arg5: memref<512x128xf32, #tpu.memory_space<vmem>>, %arg6: memref<1x128xf32, #tpu.memory_space<vmem>>, %arg7: memref<2x128xf32, #tpu.memory_space<vmem>>, %arg8: memref<2x128xf32, #tpu.memory_space<vmem>>) attributes {dimension_semantics = [#tpu.dimension_semantics<parallel>, #tpu.dimension_semantics<arbitrary>], iteration_bounds = array<i64: 1, 4>, scalar_prefetch = 0 : i64, scratch_operands = 1 : i64, tpu.core_type = #tpu.core_type<tc>, window_params = [{transform_indices = @transform_0, window_bounds = array<i64: 2, 3, 256>}, {transform_indices = @transform_1, window_bounds = array<i64: 3, 512>}, {transform_indices = @transform_2, window_bounds = array<i64: 1, 512>}, {transform_indices = @transform_3, window_bounds = array<i64: 512, 128>}, {pipeline_mode = #tpu.pipeline_mode<synchronous>, transform_indices = @transform_4, window_bounds = array<i64: 1, 128>}, {transform_indices = @transform_5, window_bounds = array<i64: 2, 128>}]} {
    %c0_i32 = arith.constant 0 : i32
    %0 = arith.cmpi eq, %arg1, %c0_i32 : i32
    %1 = arith.extui %0 : i1 to i32
    %c0_i32_0 = arith.constant 0 : i32
    %2 = arith.cmpi ne, %1, %c0_i32_0 : i32
    scf.if %2 {
      %cst_16 = arith.constant 0.000000e+00 : f32
      %48 = vector.broadcast %cst_16 : f32 to vector<2x128xf32>
      %c0_17 = arith.constant 0 : index
      %c0_18 = arith.constant 0 : index
      %49 = vector.load %arg8[%c0_17, %c0_18] : memref<2x128xf32, #tpu.memory_space<vmem>>, vector<2x128xf32>
      tpu.vector_store %arg8[%c0_17, %c0_18], %48 {strides = array<i32>} : memref<2x128xf32, #tpu.memory_space<vmem>>, vector<2x128xf32>,
    } else {
    }
    %c0 = arith.constant 0 : index
    %c0_1 = arith.constant 0 : index
    %c0_2 = arith.constant 0 : index
    %3 = vector.load %arg2[%c0, %c0_1, %c0_2] : memref<2x3x256xf32, #tpu.memory_space<vmem>>, vector<2x3x256xf32>
    %c0_3 = arith.constant 0 : index
    %c0_4 = arith.constant 0 : index
    %4 = vector.load %arg3[%c0_3, %c0_4] : memref<3x512xf32, #tpu.memory_space<vmem>>, vector<3x512xf32>
    %5 = vector.extract_strided_slice %3 {offsets = [0, 0, 0], sizes = [2, 1, 256], strides = [1, 1, 1]} : vector<2x3x256xf32> to vector<2x1x256xf32>
    %6 = vector.shape_cast %5 : vector<2x1x256xf32> to vector<2x256xf32>
    %7 = vector.shape_cast %6 : vector<2x256xf32> to vector<2x256x1xf32>
    %8 = vector.extract_strided_slice %4 {offsets = [0, 0], sizes = [1, 512], strides = [1, 1]} : vector<3x512xf32> to vector<1x512xf32>
    %9 = vector.shape_cast %8 : vector<1x512xf32> to vector<1x1x512xf32>
    %10 = vector.broadcast %7 : vector<2x256x1xf32> to vector<2x256x512xf32>
    %11 = vector.broadcast %9 : vector<1x1x512xf32> to vector<2x256x512xf32>
    %12 = arith.mulf %10, %11 : vector<2x256x512xf32>
    %13 = vector.extract_strided_slice %3 {offsets = [0, 1, 0], sizes = [2, 1, 256], strides = [1, 1, 1]} : vector<2x3x256xf32> to vector<2x1x256xf32>
    %14 = vector.shape_cast %13 : vector<2x1x256xf32> to vector<2x256xf32>
    %15 = vector.shape_cast %14 : vector<2x256xf32> to vector<2x256x1xf32>
    %16 = vector.extract_strided_slice %4 {offsets = [1, 0], sizes = [1, 512], strides = [1, 1]} : vector<3x512xf32> to vector<1x512xf32>
    %17 = vector.shape_cast %16 : vector<1x512xf32> to vector<1x1x512xf32>
    %18 = vector.broadcast %15 : vector<2x256x1xf32> to vector<2x256x512xf32>
    %19 = vector.broadcast %17 : vector<1x1x512xf32> to vector<2x256x512xf32>
    %20 = arith.mulf %18, %19 : vector<2x256x512xf32>
    %21 = arith.addf %12, %20 : vector<2x256x512xf32>
    %22 = vector.extract_strided_slice %3 {offsets = [0, 2, 0], sizes = [2, 1, 256], strides = [1, 1, 1]} : vector<2x3x256xf32> to vector<2x1x256xf32>
    %23 = vector.shape_cast %22 : vector<2x1x256xf32> to vector<2x256xf32>
    %24 = vector.shape_cast %23 : vector<2x256xf32> to vector<2x256x1xf32>
    %25 = vector.extract_strided_slice %4 {offsets = [2, 0], sizes = [1, 512], strides = [1, 1]} : vector<3x512xf32> to vector<1x512xf32>
    %26 = vector.shape_cast %25 : vector<1x512xf32> to vector<1x1x512xf32>
    %27 = vector.broadcast %24 : vector<2x256x1xf32> to vector<2x256x512xf32>
    %28 = vector.broadcast %26 : vector<1x1x512xf32> to vector<2x256x512xf32>
    %29 = arith.mulf %27, %28 : vector<2x256x512xf32>
    %30 = arith.addf %21, %29 : vector<2x256x512xf32>
    %c0_5 = arith.constant 0 : index
    %c0_6 = arith.constant 0 : index
    %31 = vector.load %arg4[%c0_5, %c0_6] : memref<1x512xf32, #tpu.memory_space<vmem>>, vector<1x512xf32>
    %32 = vector.shape_cast %31 : vector<1x512xf32> to vector<1x1x512xf32>
    %33 = vector.broadcast %32 : vector<1x1x512xf32> to vector<2x256x512xf32>
    %34 = arith.addf %30, %33 : vector<2x256x512xf32>
    %cst = arith.constant 0.000000e+00 : f32
    %35 = vector.broadcast %cst : f32 to vector<2x256x512xf32>
    %36 = arith.maximumf %34, %35 : vector<2x256x512xf32>
    %cst_7 = arith.constant dense<0.000000e+00> : vector<2x512xf32>
    %37 = vector.multi_reduction <add>, %36, %cst_7 [1] : vector<2x256x512xf32> to vector<2x512xf32>
    %c0_8 = arith.constant 0 : index
    %c0_9 = arith.constant 0 : index
    %38 = vector.load %arg8[%c0_8, %c0_9] : memref<2x128xf32, #tpu.memory_space<vmem>>, vector<2x128xf32>
    %39 = arith.truncf %37 : vector<2x512xf32> to vector<2x512xbf16>
    %c0_10 = arith.constant 0 : index
    %c0_11 = arith.constant 0 : index
    %40 = vector.load %arg5[%c0_10, %c0_11] : memref<512x128xf32, #tpu.memory_space<vmem>>, vector<512x128xf32>
    %41 = arith.truncf %40 : vector<512x128xf32> to vector<512x128xbf16>
    %cst_12 = arith.constant dense<0.000000e+00> : vector<2x128xf32>
    %42 = tpu.matmul %39, %41, %cst_12 {dimension_numbers = #tpu.dot_dimension_numbers<[1], [0], [0], [1], [0, 0, 1, 1], [], []>} : vector<2x512xbf16>, vector<512x128xbf16>, vector<2x128xf32> -> vector<2x128xf32>
    %43 = arith.addf %38, %42 : vector<2x128xf32>
    %c0_13 = arith.constant 0 : index
    %c0_14 = arith.constant 0 : index
    %44 = vector.load %arg8[%c0_13, %c0_14] : memref<2x128xf32, #tpu.memory_space<vmem>>, vector<2x128xf32>
    tpu.vector_store %arg8[%c0_13, %c0_14], %43 {strides = array<i32>} : memref<2x128xf32, #tpu.memory_space<vmem>>, vector<2x128xf32>,
    %c3_i32 = arith.constant 3 : i32
    %45 = arith.cmpi eq, %arg1, %c3_i32 : i32
    %46 = arith.extui %45 : i1 to i32
    %c0_i32_15 = arith.constant 0 : i32
    %47 = arith.cmpi ne, %46, %c0_i32_15 : i32
    scf.if %47 {
      %c0_16 = arith.constant 0 : index
      %c0_17 = arith.constant 0 : index
      %48 = vector.load %arg8[%c0_16, %c0_17] : memref<2x128xf32, #tpu.memory_space<vmem>>, vector<2x128xf32>
      %c0_18 = arith.constant 0 : index
      %c0_19 = arith.constant 0 : index
      %49 = vector.load %arg6[%c0_18, %c0_19] : memref<1x128xf32, #tpu.memory_space<vmem>>, vector<1x128xf32>
      %50 = vector.broadcast %49 : vector<1x128xf32> to vector<2x128xf32>
      %51 = arith.addf %48, %50 : vector<2x128xf32>
      %c0_20 = arith.constant 0 : index
      %c0_21 = arith.constant 0 : index
      %52 = vector.load %arg7[%c0_20, %c0_21] : memref<2x128xf32, #tpu.memory_space<vmem>>, vector<2x128xf32>
      tpu.vector_store %arg7[%c0_20, %c0_21], %51 {strides = array<i32>} : memref<2x128xf32, #tpu.memory_space<vmem>>, vector<2x128xf32>,
    } else {
    }
    return
  }
  func.func @transform_0(%arg0: i32, %arg1: i32) -> (i32, i32, i32) {
    %c0_i32 = arith.constant 0 : i32
    %c0_i32_0 = arith.constant 0 : i32
    %c0_i32_1 = arith.constant 0 : i32
    return %arg0, %c0_i32, %c0_i32_0 : i32, i32, i32
  }
  func.func @transform_1(%arg0: i32, %arg1: i32) -> (i32, i32) {
    %c0_i32 = arith.constant 0 : i32
    %c0_i32_0 = arith.constant 0 : i32
    return %c0_i32, %arg1 : i32, i32
  }
  func.func @transform_2(%arg0: i32, %arg1: i32) -> (i32, i32) {
    %c0_i32 = arith.constant 0 : i32
    %c0_i32_0 = arith.constant 0 : i32
    return %c0_i32, %arg1 : i32, i32
  }
  func.func @transform_3(%arg0: i32, %arg1: i32) -> (i32, i32) {
    %c0_i32 = arith.constant 0 : i32
    %c0_i32_0 = arith.constant 0 : i32
    return %arg1, %c0_i32 : i32, i32
  }
  func.func @transform_4(%arg0: i32, %arg1: i32) -> (i32, i32) {
    %c0_i32 = arith.constant 0 : i32
    %c0_i32_0 = arith.constant 0 : i32
    %c0_i32_1 = arith.constant 0 : i32
    return %c0_i32, %c0_i32_0 : i32, i32
  }
  func.func @transform_5(%arg0: i32, %arg1: i32) -> (i32, i32) {
    %c0_i32 = arith.constant 0 : i32
    %c0_i32_0 = arith.constant 0 : i32
    return %arg0, %c0_i32 : i32, i32
  }
}

</mosaic_0001>

<llo_original>
// kernel: tpu_custom_call.1
$region0: #{tpu_custom_call.1}
  #allocation0 [shape = 'u32[]', space=smem, size = 0x4, offset = 0x4, fixed_abs, tag = 'smem constant byte address 0x4 - core index']
  #allocation1 [shape = 'u32[72,128]{1,0:T(1,128)}', space=vmem, size = 0x9000, scoped, tag = 'internal scratch']
  #allocation2 [shape = 'f32[2,128]{1,0:T(2,128)}', space=vmem, size = 0x400, scoped, tag = 'scratch operand']
  %s0 = inlined_call_operand.vmem [shape: f32[2,3,256], index: 0, kind: input, shape index: {}]
  %s1 = inlined_call_operand.hbm [shape: f32[3,2048], index: 1, kind: input, shape index: {}]
  %s2 = inlined_call_operand.vmem [shape: f32[1,2048], index: 2, kind: input, shape index: {}]
  %s3 = inlined_call_operand.hbm [shape: f32[2048,128], index: 3, kind: input, shape index: {}]
  %s4 = inlined_call_operand.vmem [shape: f32[1,128], index: 4, kind: input, shape index: {}]
  %s5 = inlined_call_operand.hbm [shape: f32[2,128], index: 5, kind: output, shape index: {}]
  %s6 = sld [smem:[#allocation0]]
  $region69: #{tpu_custom_call.1} parent=0
    _
  %s8 = ssub.s32 1, %s6
  %s9 = scalar_select 0, %s8, %s6
  $region1: #{tpu_custom_call.1} parent=0
    #allocation3 [shape = 'u8[16384]{0}', space=vmem, size = 0x4000, scoped, tag = 'input window, operand 1']
    #allocation4 [shape = 's32[2]{0}', space=sflag, size = 0x8, scoped, tag = 'scoped memory for tpu_custom_call.1']
    #allocation5 [shape = 's32[2]{0}', space=sflag, size = 0x8, scoped, tag = 'scoped memory for tpu_custom_call.1']
    #allocation6 [shape = 'u8[524288]{0}', space=vmem, size = 0x80000, scoped, tag = 'input window, operand 3']
    #allocation7 [shape = 's32[2]{0}', space=sflag, size = 0x8, scoped, tag = 'scoped memory for tpu_custom_call.1']
    #allocation8 [shape = 'u8[1024]{0}', space=vmem, size = 0x400, scoped, tag = 'output window, operand 0, single buffered']
    %10 = vsyncpa [#allocation4], 0
    %s11 = scalar_lea.sflag [#allocation4], 1
    %12 = vsyncpa %s11, 0
    %13 = vsyncpa [#allocation7], 0
    %s14 = scalar_lea.sflag [#allocation7], 1
    %15 = vsyncpa %s14, 0
    %16 = vsyncpa [#allocation5], 0
    loop: start=0, step=1, limit=6
    $region2: #{tpu_custom_call.1} parent=1 // loop_pre_header
      _
    $region3: #{tpu_custom_call.1} parent=1 // loop_header
      %s18 = sphi 0, %s22
      %p19 = scmp.ge.s32.totalorder %s18, 6
      %s25 = sphi 0, %s37
      %s26 = sphi 0, %s33
      %s27 = sphi 0, %s25
      %s28 = sphi 0, %s26
      %s29 = sphi 0, %s27
      %s30 = sphi 0, %s28
      %s40 = sphi 0, %s42
      %s43 = sphi 0, %s40
      %s44 = sphi 0, %s43
      %s60 = sphi 0, %s44
      %s66 = sphi 0, %s68
      %s69 = sphi 0, %s66
      %s70 = sphi 0, %s69
      %s86 = sphi 0, %s70
      %s92 = sphi 0, %s94
      %s95 = sphi 0, %s92
      %s96 = sphi 0, %s95
      %s112 = sphi 0, %s96
      %s118 = sphi 0, %s120
      %s121 = sphi 0, %s118
      %s122 = sphi 0, %s121
      %s138 = sphi 0, %s122
      %s142 = sphi 0, %s142
      %s144 = sphi 0, %s142
      %s145 = sphi 0, %s144
      %s159 = sphi 0, %s145
      %s165 = sphi 0, %s167
      %s168 = sphi 0, %s165
      %s169 = sphi 0, %s168
      %s185 = sphi 0, %s169
    $region4: #{tpu_custom_call.1} parent=1 // loop_header_branch
      %21 = sbr.rel (%p19) target = $region8
    $region5: #{tpu_custom_call.1} parent=1 // loop_body
      %s23 = ssub.s32 %s18, 1
      %s24 = ssub.s32 %s18, 2
      %s31 = sadd.s32 1, %s26
      %p32 = scmp.ge.s32.totalorder %s31, 4
      %s33 = scalar_select %p32, 0, %s31
      %s34 = sadd.s32 1, %s25
      %s35 = scalar_select %p32, %s34, %s25
      %p36 = scmp.ge.s32.totalorder %s35, 1
      %s37 = scalar_select %p36, 0, %s35
      %s38 = ssub.s32 %s25, %s37
      %p39 = scmp.eq.s32.totalorder %s38, 0
      %s41 = sadd.s32 %s40, 1
      %s42 = scalar_select %p39, %s40, %s41
      %p45 = pneg %p39
      %p46 = scmp.eq.s32.totalorder %s18, 3
      %p47 = por %p45, %p46
      %p48 = scmp.ne.s32.totalorder %s40, %s43
      %p49 = scmp.eq.s32.totalorder %s18, 0
      %p50 = por %p48, %p49
      %p51 = scmp.ne.s32.totalorder %s40, %s43
      %p52 = scmp.eq.s32.totalorder %s23, 3
      %p53 = por %p51, %p52
      %p54 = scmp.ne.s32.totalorder %s43, %s44
      %p55 = scmp.eq.s32.totalorder %s23, 0
      %p56 = por %p54, %p55
      %p57 = scmp.ne.s32.totalorder %s43, %s44
      %p58 = scmp.eq.s32.totalorder %s24, 3
      %p59 = por %p57, %p58
      %p61 = scmp.ne.s32.totalorder %s44, %s60
      %p62 = scmp.eq.s32.totalorder %s24, 0
      %p63 = por %p61, %p62
      %s64 = ssub.s32 %s26, %s33
      %p65 = scmp.eq.s32.totalorder %s64, 0
      %s67 = sadd.s32 %s66, 1
      %s68 = scalar_select %p65, %s66, %s67
      %p71 = pneg %p65
      %p72 = scmp.eq.s32.totalorder %s18, 3
      %p73 = por %p71, %p72
      %p74 = scmp.ne.s32.totalorder %s66, %s69
      %p75 = scmp.eq.s32.totalorder %s18, 0
      %p76 = por %p74, %p75
      %p77 = scmp.ne.s32.totalorder %s66, %s69
      %p78 = scmp.eq.s32.totalorder %s23, 3
      %p79 = por %p77, %p78
      %p80 = scmp.ne.s32.totalorder %s69, %s70
      %p81 = scmp.eq.s32.totalorder %s23, 0
      %p82 = por %p80, %p81
      %p83 = scmp.ne.s32.totalorder %s69, %s70
      %p84 = scmp.eq.s32.totalorder %s24, 3
      %p85 = por %p83, %p84
      %p87 = scmp.ne.s32.totalorder %s70, %s86
      %p88 = scmp.eq.s32.totalorder %s24, 0
      %p89 = por %p87, %p88
      %s90 = ssub.s32 %s26, %s33
      %p91 = scmp.eq.s32.totalorder %s90, 0
      %s93 = sadd.s32 %s92, 1
      %s94 = scalar_select %p91, %s92, %s93
      %p97 = pneg %p91
      %p98 = scmp.eq.s32.totalorder %s18, 3
      %p99 = por %p97, %p98
      %p100 = scmp.ne.s32.totalorder %s92, %s95
      %p101 = scmp.eq.s32.totalorder %s18, 0
      %p102 = por %p100, %p101
      %p103 = scmp.ne.s32.totalorder %s92, %s95
      %p104 = scmp.eq.s32.totalorder %s23, 3
      %p105 = por %p103, %p104
      %p106 = scmp.ne.s32.totalorder %s95, %s96
      %p107 = scmp.eq.s32.totalorder %s23, 0
      %p108 = por %p106, %p107
      %p109 = scmp.ne.s32.totalorder %s95, %s96
      %p110 = scmp.eq.s32.totalorder %s24, 3
      %p111 = por %p109, %p110
      %p113 = scmp.ne.s32.totalorder %s96, %s112
      %p114 = scmp.eq.s32.totalorder %s24, 0
      %p115 = por %p113, %p114
      %s116 = ssub.s32 %s26, %s33
      %p117 = scmp.eq.s32.totalorder %s116, 0
      %s119 = sadd.s32 %s118, 1
      %s120 = scalar_select %p117, %s118, %s119
      %p123 = pneg %p117
      %p124 = scmp.eq.s32.totalorder %s18, 3
      %p125 = por %p123, %p124
      %p126 = scmp.ne.s32.totalorder %s118, %s121
      %p127 = scmp.eq.s32.totalorder %s18, 0
      %p128 = por %p126, %p127
      %p129 = scmp.ne.s32.totalorder %s118, %s121
      %p130 = scmp.eq.s32.totalorder %s23, 3
      %p131 = por %p129, %p130
      %p132 = scmp.ne.s32.totalorder %s121, %s122
      %p133 = scmp.eq.s32.totalorder %s23, 0
      %p134 = por %p132, %p133
      %p135 = scmp.ne.s32.totalorder %s121, %s122
      %p136 = scmp.eq.s32.totalorder %s24, 3
      %p137 = por %p135, %p136
      %p139 = scmp.ne.s32.totalorder %s122, %s138
      %p140 = scmp.eq.s32.totalorder %s24, 0
      %p141 = por %p139, %p140
      %s143 = sadd.s32 %s142, 1
      %p146 = scmp.eq.s32.totalorder %s18, 3
      %p147 = scmp.ne.s32.totalorder %s142, %s144
      %p148 = scmp.eq.s32.totalorder %s18, 0
      %p149 = por %p147, %p148
      %p150 = scmp.ne.s32.totalorder %s142, %s144
      %p151 = scmp.eq.s32.totalorder %s23, 3
      %p152 = por %p150, %p151
      %p153 = scmp.ne.s32.totalorder %s144, %s145
      %p154 = scmp.eq.s32.totalorder %s23, 0
      %p155 = por %p153, %p154
      %p156 = scmp.ne.s32.totalorder %s144, %s145
      %p157 = scmp.eq.s32.totalorder %s24, 3
      %p158 = por %p156, %p157
      %p160 = scmp.ne.s32.totalorder %s145, %s159
      %p161 = scmp.eq.s32.totalorder %s24, 0
      %p162 = por %p160, %p161
      %s163 = ssub.s32 %s25, %s37
      %p164 = scmp.eq.s32.totalorder %s163, 0
      %s166 = sadd.s32 %s165, 1
      %s167 = scalar_select %p164, %s165, %s166
      %p170 = pneg %p164
      %p171 = scmp.eq.s32.totalorder %s18, 3
      %p172 = por %p170, %p171
      %p173 = scmp.ne.s32.totalorder %s165, %s168
      %p174 = scmp.eq.s32.totalorder %s18, 0
      %p175 = por %p173, %p174
      %p176 = scmp.ne.s32.totalorder %s165, %s168
      %p177 = scmp.eq.s32.totalorder %s23, 3
      %p178 = por %p176, %p177
      %p179 = scmp.ne.s32.totalorder %s168, %s169
      %p180 = scmp.eq.s32.totalorder %s23, 0
      %p181 = por %p179, %p180
      %p182 = scmp.ne.s32.totalorder %s168, %s169
      %p183 = scmp.eq.s32.totalorder %s24, 3
      %p184 = por %p182, %p183
      %p186 = scmp.ne.s32.totalorder %s169, %s185
      %p187 = scmp.eq.s32.totalorder %s24, 0
      %p188 = por %p186, %p187
      %p189 = scmp.le.s32.totalorder 1, %s18
      %p190 = scmp.lt.s32.totalorder %s18, 5
      %p191 = pnand %p189, %p190
      %p192 = pneg %p191
      // Predicated region
      $region9: #{tpu_custom_call.1} parent=5 // pred_check
        _
      $region10: #{tpu_custom_call.1} parent=5 // pred_check_branch
        %194 = sbr.rel (%p191) target = $region12
      $region11: #{tpu_custom_call.1} parent=5 // pred_region
        %s195 = ssub.s32 %s18, 1
        // Predicated region
        $region13: #{tpu_custom_call.1} parent=11 // pred_check
          %p196 = pneg %p56
        $region14: #{tpu_custom_call.1} parent=11 // pred_check_branch
          %198 = sbr.rel (%p196) target = $region16
        $region15: #{tpu_custom_call.1} parent=11 // pred_region
          %s199 = smul.u32 2, %s27
          %p200 = scmp.lt.s32.totalorder %s199, 1
          %s201 = scalar_select %p200, %s199, 1
          %s202 = smul.addr %s201, 2
          %s203 = smul.addr %s202, 4
          %s204 = scalar_lea.vmem %s0, %s203
          %s205 = smul.u32 2, %s27
        $region16: #{tpu_custom_call.1} parent=11 // pred_fallthru
          _
        // Predicated region
        $region17: #{tpu_custom_call.1} parent=11 // pred_check
          %p206 = pneg %p155
        $region18: #{tpu_custom_call.1} parent=11 // pred_check_branch
          %208 = sbr.rel (%p206) target = $region20
        $region19: #{tpu_custom_call.1} parent=11 // pred_region
          _
        $region20: #{tpu_custom_call.1} parent=11 // pred_fallthru
          _
      $region12: #{tpu_custom_call.1} parent=5 // pred_fallthru
        _
      %p209 = scmp.lt.s32.totalorder %s18, 4
      // Predicated region
      $region21: #{tpu_custom_call.1} parent=5 // pred_check
        %p210 = pneg %p209
      $region22: #{tpu_custom_call.1} parent=5 // pred_check_branch
        %212 = sbr.rel (%p210) target = $region24
      $region23: #{tpu_custom_call.1} parent=5 // pred_region
        // Predicated region
        $region25: #{tpu_custom_call.1} parent=23 // pred_check
          %p213 = pneg %p76
        $region26: #{tpu_custom_call.1} parent=23 // pred_check_branch
          %215 = sbr.rel (%p213) target = $region28
        $region27: #{tpu_custom_call.1} parent=23 // pred_region
          %s216 = sand.u32 %s66, 1
          %s217 = scalar_lea.sflag [#allocation4], %s216
          %s218 = sand.u32 %s66, 1
          %s219 = smul.addr %s218, 16
          %s220 = scalar_lea.vmem [#allocation3], %s219
          %s221 = smul.u32 4, %s26
          %223 = vsyncadd %s217, 0
          %s224 = smul.addr %s221, 4
          %s225 = scalar_lea.hbm %s1, %s224
          %s227 = sshll.u32 %s225, 4
          %s228 = int_to_ptr.hbm [resolvable:$true] %s227
          %s229 = sshll.u32 %s220, 4
          %s230 = int_to_ptr.vmem [resolvable:$true] %s229
          %232 = dma.hbm_to_vmem [thread:$0]  %s228, 256, %s230, %s217
        $region28: #{tpu_custom_call.1} parent=23 // pred_fallthru
          _
        // Predicated region
        $region29: #{tpu_custom_call.1} parent=23 // pred_check
          %p233 = pneg %p102
        $region30: #{tpu_custom_call.1} parent=23 // pred_check_branch
          %235 = sbr.rel (%p233) target = $region32
        $region31: #{tpu_custom_call.1} parent=23 // pred_region
          %s236 = smul.u32 4, %s26
          %p237 = scmp.lt.s32.totalorder %s236, 15
          %s238 = scalar_select %p237, %s236, 15
          %s239 = scalar_lea.vmem %s2, %s238
          %s240 = smul.u32 4, %s26
        $region32: #{tpu_custom_call.1} parent=23 // pred_fallthru
          _
        // Predicated region
        $region33: #{tpu_custom_call.1} parent=23 // pred_check
          %p241 = pneg %p128
        $region34: #{tpu_custom_call.1} parent=23 // pred_check_branch
          %243 = sbr.rel (%p241) target = $region36
        $region35: #{tpu_custom_call.1} parent=23 // pred_region
          %s244 = sand.u32 %s118, 1
          %s245 = scalar_lea.sflag [#allocation7], %s244
          %s246 = sand.u32 %s118, 1
          %s247 = smul.addr %s246, 512
          %s248 = scalar_lea.vmem [#allocation6], %s247
          %s249 = smul.u32 64, %s26
          %251 = vsyncadd %s245, 0
          %s252 = smul.addr %s249, 8
          %s253 = scalar_lea.hbm %s3, %s252
          %s254 = sshll.u32 %s253, 4
          %s255 = int_to_ptr.hbm [resolvable:$true] %s254
          %s256 = sshll.u32 %s248, 4
          %s257 = int_to_ptr.vmem [resolvable:$true] %s256
          %262 = dma.hbm_to_vmem [thread:$0]  %s255, 8192, %s257, %s245, 128, 128, 8
        $region36: #{tpu_custom_call.1} parent=23 // pred_fallthru
          _
      $region24: #{tpu_custom_call.1} parent=5 // pred_fallthru
        _
      %p263 = scmp.le.s32.totalorder 1, %s18
      %p264 = scmp.lt.s32.totalorder %s18, 5
      %p265 = pnand %p263, %p264
      %p266 = pneg %p265
      // Predicated region
      $region37: #{tpu_custom_call.1} parent=5 // pred_check
        _
      $region38: #{tpu_custom_call.1} parent=5 // pred_check_branch
        %268 = sbr.rel (%p265) target = $region40
      $region39: #{tpu_custom_call.1} parent=5 // pred_region
        %s269 = ssub.s32 %s18, 1
        %s270 = sand.u32 %s69, 1
        %s271 = scalar_lea.sflag [#allocation4], %s270
        %s272 = sand.u32 %s69, 1
        %s273 = smul.addr %s272, 16
        %s274 = scalar_lea.vmem [#allocation3], %s273
        // Predicated region
        $region41: #{tpu_custom_call.1} parent=39 // pred_check
          %p275 = pneg %p82
        $region42: #{tpu_custom_call.1} parent=39 // pred_check_branch
          %277 = sbr.rel (%p275) target = $region44
        $region43: #{tpu_custom_call.1} parent=39 // pred_region
          %279 = dma.done %s271, 256
        $region44: #{tpu_custom_call.1} parent=39 // pred_fallthru
          _
        %s280 = sand.u32 %s121, 1
        %s281 = scalar_lea.sflag [#allocation7], %s280
        %s282 = sand.u32 %s121, 1
        %s283 = smul.addr %s282, 512
        %s284 = scalar_lea.vmem [#allocation6], %s283
        // Predicated region
        $region45: #{tpu_custom_call.1} parent=39 // pred_check
          %p285 = pneg %p134
        $region46: #{tpu_custom_call.1} parent=39 // pred_check_branch
          %287 = sbr.rel (%p285) target = $region48
        $region47: #{tpu_custom_call.1} parent=39 // pred_region
          %289 = dma.done %s281, 8192
        $region48: #{tpu_custom_call.1} parent=39 // pred_fallthru
          _
        %s290 = smul.u32 2, %s27
        %p291 = scmp.lt.s32.totalorder %s290, 1
        %s292 = scalar_select %p291, %s290, 1
        %s293 = smul.addr %s292, 2
        %s294 = smul.addr %s293, 4
        %s295 = scalar_lea.vmem %s0, %s294
        %p296 = pneg %p56
        %p297 = pneg %p53
        %s298 = sand.u32 %s69, 1
        %s299 = scalar_lea.sflag [#allocation4], %s298
        %s300 = sand.u32 %s69, 1
        %s301 = smul.addr %s300, 16
        %s302 = scalar_lea.vmem [#allocation3], %s301
        %p303 = pneg %p82
        %p304 = pneg %p79
        %s305 = smul.u32 4, %s28
        %p306 = scmp.lt.s32.totalorder %s305, 15
        %s307 = scalar_select %p306, %s305, 15
        %s308 = scalar_lea.vmem %s2, %s307
        %p309 = pneg %p108
        %p310 = pneg %p105
        %s311 = sand.u32 %s121, 1
        %s312 = scalar_lea.sflag [#allocation7], %s311
        %s313 = sand.u32 %s121, 1
        %s314 = smul.addr %s313, 512
        %s315 = scalar_lea.vmem [#allocation6], %s314
        %p316 = pneg %p134
        %p317 = pneg %p131
        %p318 = pneg %p155
        %p319 = pneg %p152
        %p320 = pneg %p181
        %p321 = pneg %p178
        %s322 = smul.u32 2, %s27
        %p323 = scmp.lt.s32.totalorder %s322, 1
        %s324 = scalar_select %p323, %s322, 1
        %s325 = smul.addr %s324, 2
        %s326 = smul.addr %s325, 4
        %s327 = scalar_lea.vmem %s0, %s326
        %s328 = smul.u32 2, %s27
        %s329 = smul.u32 4, %s28
        %s330 = smul.u32 4, %s28
        %p331 = scmp.lt.s32.totalorder %s330, 15
        %s332 = scalar_select %p331, %s330, 15
        %s333 = scalar_lea.vmem %s2, %s332
        %s334 = smul.u32 4, %s28
        %s335 = smul.u32 64, %s28
        %p336 = scmp.eq.s32.totalorder %s28, 0
        // Predicated region
        $region49: #{tpu_custom_call.1} parent=39 // pred_check
          %p337 = pneg %p336
        $region50: #{tpu_custom_call.1} parent=39 // pred_check_branch
          %339 = sbr.rel (%p337) target = $region52
        $region51: #{tpu_custom_call.1} parent=39 // pred_region
          %340 = vst [vmem:[#allocation2] sm:$0x3] 0.0
        $region52: #{tpu_custom_call.1} parent=39 // pred_fallthru
          _
        %v341 = vld [vmem:[%s327] sm:$0x77]
        %v342 = vld [vmem:[%s327 + $0x8] sm:$0x77]
        %v343 = vld [vmem:[%s274] sm:$0x77]
        %v344 = vld [vmem:[%s274 + $0x8] sm:$0x77]
        %v347 = vperm.slane %v341, 0
        %v348 = vperm.slane %v341, 4
        %v349 = vperm.slane %v342, 0
        %v350 = vperm.slane %v342, 4
        %v355 = vperm.slane %v347, 0
        %v356 = vlaneseq
        %v357 = vshrl.u32 %v356, 7
        %359 = vset.pattern.permute.xlu0 %v357
        %360 = vperm.xlu0 %359, %v355
        %v361 = vpop.permute.xlu0 %360
        %v362 = vlaneseq
        %v363 = vshrl.u32 %v362, 7
        %v364 = vadd.s32 %v363, 8
        %365 = vset.pattern.permute.xlu0 %v364
        %366 = vperm.xlu0 %365, %v355
        %v367 = vpop.permute.xlu0 %366
        %v368 = vlaneseq
        %v369 = vshrl.u32 %v368, 7
        %v370 = vadd.s32 %v369, 16
        %371 = vset.pattern.permute.xlu0 %v370
        %372 = vperm.xlu0 %371, %v355
        %v373 = vpop.permute.xlu0 %372
        %v374 = vlaneseq
        %v375 = vshrl.u32 %v374, 7
        %v376 = vadd.s32 %v375, 24
        %377 = vset.pattern.permute.xlu0 %v376
        %378 = vperm.xlu0 %377, %v355
        %v379 = vpop.permute.xlu0 %378
        %v380 = vlaneseq
        %v381 = vshrl.u32 %v380, 7
        %v382 = vadd.s32 %v381, 32
        %383 = vset.pattern.permute.xlu0 %v382
        %384 = vperm.xlu0 %383, %v355
        %v385 = vpop.permute.xlu0 %384
        %v386 = vlaneseq
        %v387 = vshrl.u32 %v386, 7
        %v388 = vadd.s32 %v387, 40
        %389 = vset.pattern.permute.xlu0 %v388
        %390 = vperm.xlu0 %389, %v355
        %v391 = vpop.permute.xlu0 %390
        %v392 = vlaneseq
        %v393 = vshrl.u32 %v392, 7
        %v394 = vadd.s32 %v393, 48
        %395 = vset.pattern.permute.xlu0 %v394
        %396 = vperm.xlu0 %395, %v355
        %v397 = vpop.permute.xlu0 %396
        %v398 = vlaneseq
        %v399 = vshrl.u32 %v398, 7
        %v400 = vadd.s32 %v399, 56
        %401 = vset.pattern.permute.xlu0 %v400
        %402 = vperm.xlu0 %401, %v355
        %v403 = vpop.permute.xlu0 %402
        %v404 = vlaneseq
        %v405 = vshrl.u32 %v404, 7
        %v406 = vadd.s32 %v405, 64
        %407 = vset.pattern.permute.xlu0 %v406
        %408 = vperm.xlu0 %407, %v355
        %v409 = vpop.permute.xlu0 %408
        %v410 = vlaneseq
        %v411 = vshrl.u32 %v410, 7
        %v412 = vadd.s32 %v411, 72
        %413 = vset.pattern.permute.xlu0 %v412
        %414 = vperm.xlu0 %413, %v355
        %v415 = vpop.permute.xlu0 %414
        %v416 = vlaneseq
        %v417 = vshrl.u32 %v416, 7
        %v418 = vadd.s32 %v417, 80
        %419 = vset.pattern.permute.xlu0 %v418
        %420 = vperm.xlu0 %419, %v355
        %v421 = vpop.permute.xlu0 %420
        %v422 = vlaneseq
        %v423 = vshrl.u32 %v422, 7
        %v424 = vadd.s32 %v423, 88
        %425 = vset.pattern.permute.xlu0 %v424
        %426 = vperm.xlu0 %425, %v355
        %v427 = vpop.permute.xlu0 %426
        %v428 = vlaneseq
        %v429 = vshrl.u32 %v428, 7
        %v430 = vadd.s32 %v429, 96
        %431 = vset.pattern.permute.xlu0 %v430
        %432 = vperm.xlu0 %431, %v355
        %v433 = vpop.permute.xlu0 %432
        %v434 = vlaneseq
        %v435 = vshrl.u32 %v434, 7
        %v436 = vadd.s32 %v435, 104
        %437 = vset.pattern.permute.xlu0 %v436
        %438 = vperm.xlu0 %437, %v355
        %v439 = vpop.permute.xlu0 %438
        %v440 = vlaneseq
        %v441 = vshrl.u32 %v440, 7
        %v442 = vadd.s32 %v441, 112
        %443 = vset.pattern.permute.xlu0 %v442
        %444 = vperm.xlu0 %443, %v355
        %v445 = vpop.permute.xlu0 %444
        %v446 = vlaneseq
        %v447 = vshrl.u32 %v446, 7
        %v448 = vadd.s32 %v447, 120
        %449 = vset.pattern.permute.xlu0 %v448
        %450 = vperm.xlu0 %449, %v355
        %v451 = vpop.permute.xlu0 %450
        %v452 = vperm.slane %v348, 0
        %v453 = vlaneseq
        %v454 = vshrl.u32 %v453, 7
        %456 = vset.pattern.permute.xlu0 %v454
        %457 = vperm.xlu0 %456, %v452
        %v458 = vpop.permute.xlu0 %457
        %v459 = vlaneseq
        %v460 = vshrl.u32 %v459, 7
        %v461 = vadd.s32 %v460, 8
        %462 = vset.pattern.permute.xlu0 %v461
        %463 = vperm.xlu0 %462, %v452
        %v464 = vpop.permute.xlu0 %463
        %v465 = vlaneseq
        %v466 = vshrl.u32 %v465, 7
        %v467 = vadd.s32 %v466, 16
        %468 = vset.pattern.permute.xlu0 %v467
        %469 = vperm.xlu0 %468, %v452
        %v470 = vpop.permute.xlu0 %469
        %v471 = vlaneseq
        %v472 = vshrl.u32 %v471, 7
        %v473 = vadd.s32 %v472, 24
        %474 = vset.pattern.permute.xlu0 %v473
        %475 = vperm.xlu0 %474, %v452
        %v476 = vpop.permute.xlu0 %475
        %v477 = vlaneseq
        %v478 = vshrl.u32 %v477, 7
        %v479 = vadd.s32 %v478, 32
        %480 = vset.pattern.permute.xlu0 %v479
        %481 = vperm.xlu0 %480, %v452
        %v482 = vpop.permute.xlu0 %481
        %v483 = vlaneseq
        %v484 = vshrl.u32 %v483, 7
        %v485 = vadd.s32 %v484, 40
        %486 = vset.pattern.permute.xlu0 %v485
        %487 = vperm.xlu0 %486, %v452
        %v488 = vpop.permute.xlu0 %487
        %v489 = vlaneseq
        %v490 = vshrl.u32 %v489, 7
        %v491 = vadd.s32 %v490, 48
        %492 = vset.pattern.permute.xlu0 %v491
        %493 = vperm.xlu0 %492, %v452
        %v494 = vpop.permute.xlu0 %493
        %v495 = vlaneseq
        %v496 = vshrl.u32 %v495, 7
        %v497 = vadd.s32 %v496, 56
        %498 = vset.pattern.permute.xlu0 %v497
        %499 = vperm.xlu0 %498, %v452
        %v500 = vpop.permute.xlu0 %499
        %v501 = vlaneseq
        %v502 = vshrl.u32 %v501, 7
        %v503 = vadd.s32 %v502, 64
        %504 = vset.pattern.permute.xlu0 %v503
        %505 = vperm.xlu0 %504, %v452
        %v506 = vpop.permute.xlu0 %505
        %v507 = vlaneseq
        %v508 = vshrl.u32 %v507, 7
        %v509 = vadd.s32 %v508, 72
        %510 = vset.pattern.permute.xlu0 %v509
        %511 = vperm.xlu0 %510, %v452
        %v512 = vpop.permute.xlu0 %511
        %v513 = vlaneseq
        %v514 = vshrl.u32 %v513, 7
        %v515 = vadd.s32 %v514, 80
        %516 = vset.pattern.permute.xlu0 %v515
        %517 = vperm.xlu0 %516, %v452
        %v518 = vpop.permute.xlu0 %517
        %v519 = vlaneseq
        %v520 = vshrl.u32 %v519, 7
        %v521 = vadd.s32 %v520, 88
        %522 = vset.pattern.permute.xlu0 %v521
        %523 = vperm.xlu0 %522, %v452
        %v524 = vpop.permute.xlu0 %523
        %v525 = vlaneseq
        %v526 = vshrl.u32 %v525, 7
        %v527 = vadd.s32 %v526, 96
        %528 = vset.pattern.permute.xlu0 %v527
        %529 = vperm.xlu0 %528, %v452
        %v530 = vpop.permute.xlu0 %529
        %v531 = vlaneseq
        %v532 = vshrl.u32 %v531, 7
        %v533 = vadd.s32 %v532, 104
        %534 = vset.pattern.permute.xlu0 %v533
        %535 = vperm.xlu0 %534, %v452
        %v536 = vpop.permute.xlu0 %535
        %v537 = vlaneseq
        %v538 = vshrl.u32 %v537, 7
        %v539 = vadd.s32 %v538, 112
        %540 = vset.pattern.permute.xlu0 %v539
        %541 = vperm.xlu0 %540, %v452
        %v542 = vpop.permute.xlu0 %541
        %v543 = vlaneseq
        %v544 = vshrl.u32 %v543, 7
        %v545 = vadd.s32 %v544, 120
        %546 = vset.pattern.permute.xlu0 %v545
        %547 = vperm.xlu0 %546, %v452
        %v548 = vpop.permute.xlu0 %547
        %v549 = vperm.slane %v349, 0
        %v550 = vlaneseq
        %v551 = vshrl.u32 %v550, 7
        %553 = vset.pattern.permute.xlu0 %v551
        %554 = vperm.xlu0 %553, %v549
        %v555 = vpop.permute.xlu0 %554
        %v556 = vlaneseq
        %v557 = vshrl.u32 %v556, 7
        %v558 = vadd.s32 %v557, 8
        %559 = vset.pattern.permute.xlu0 %v558
        %560 = vperm.xlu0 %559, %v549
        %v561 = vpop.permute.xlu0 %560
        %v562 = vlaneseq
        %v563 = vshrl.u32 %v562, 7
        %v564 = vadd.s32 %v563, 16
        %565 = vset.pattern.permute.xlu0 %v564
        %566 = vperm.xlu0 %565, %v549
        %v567 = vpop.permute.xlu0 %566
        %v568 = vlaneseq
        %v569 = vshrl.u32 %v568, 7
        %v570 = vadd.s32 %v569, 24
        %571 = vset.pattern.permute.xlu0 %v570
        %572 = vperm.xlu0 %571, %v549
        %v573 = vpop.permute.xlu0 %572
        %v574 = vlaneseq
        %v575 = vshrl.u32 %v574, 7
        %v576 = vadd.s32 %v575, 32
        %577 = vset.pattern.permute.xlu0 %v576
        %578 = vperm.xlu0 %577, %v549
        %v579 = vpop.permute.xlu0 %578
        %v580 = vlaneseq
        %v581 = vshrl.u32 %v580, 7
        %v582 = vadd.s32 %v581, 40
        %583 = vset.pattern.permute.xlu0 %v582
        %584 = vperm.xlu0 %583, %v549
        %v585 = vpop.permute.xlu0 %584
        %v586 = vlaneseq
        %v587 = vshrl.u32 %v586, 7
        %v588 = vadd.s32 %v587, 48
        %589 = vset.pattern.permute.xlu0 %v588
        %590 = vperm.xlu0 %589, %v549
        %v591 = vpop.permute.xlu0 %590
        %v592 = vlaneseq
        %v593 = vshrl.u32 %v592, 7
        %v594 = vadd.s32 %v593, 56
        %595 = vset.pattern.permute.xlu0 %v594
        %596 = vperm.xlu0 %595, %v549
        %v597 = vpop.permute.xlu0 %596
        %v598 = vlaneseq
        %v599 = vshrl.u32 %v598, 7
        %v600 = vadd.s32 %v599, 64
        %601 = vset.pattern.permute.xlu0 %v600
        %602 = vperm.xlu0 %601, %v549
        %v603 = vpop.permute.xlu0 %602
        %v604 = vlaneseq
        %v605 = vshrl.u32 %v604, 7
        %v606 = vadd.s32 %v605, 72
        %607 = vset.pattern.permute.xlu0 %v606
        %608 = vperm.xlu0 %607, %v549
        %v609 = vpop.permute.xlu0 %608
        %v610 = vlaneseq
        %v611 = vshrl.u32 %v610, 7
        %v612 = vadd.s32 %v611, 80
        %613 = vset.pattern.permute.xlu0 %v612
        %614 = vperm.xlu0 %613, %v549
        %v615 = vpop.permute.xlu0 %614
        %v616 = vlaneseq
        %v617 = vshrl.u32 %v616, 7
        %v618 = vadd.s32 %v617, 88
        %619 = vset.pattern.permute.xlu0 %v618
        %620 = vperm.xlu0 %619, %v549
        %v621 = vpop.permute.xlu0 %620
        %v622 = vlaneseq
        %v623 = vshrl.u32 %v622, 7
        %v624 = vadd.s32 %v623, 96
        %625 = vset.pattern.permute.xlu0 %v624
        %626 = vperm.xlu0 %625, %v549
        %v627 = vpop.permute.xlu0 %626
        %v628 = vlaneseq
        %v629 = vshrl.u32 %v628, 7
        %v630 = vadd.s32 %v629, 104
        %631 = vset.pattern.permute.xlu0 %v630
        %632 = vperm.xlu0 %631, %v549
        %v633 = vpop.permute.xlu0 %632
        %v634 = vlaneseq
        %v635 = vshrl.u32 %v634, 7
        %v636 = vadd.s32 %v635, 112
        %637 = vset.pattern.permute.xlu0 %v636
        %638 = vperm.xlu0 %637, %v549
        %v639 = vpop.permute.xlu0 %638
        %v640 = vlaneseq
        %v641 = vshrl.u32 %v640, 7
        %v642 = vadd.s32 %v641, 120
        %643 = vset.pattern.permute.xlu0 %v642
        %644 = vperm.xlu0 %643, %v549
        %v645 = vpop.permute.xlu0 %644
        %v646 = vperm.slane %v350, 0
        %v647 = vlaneseq
        %v648 = vshrl.u32 %v647, 7
        %650 = vset.pattern.permute.xlu0 %v648
        %651 = vperm.xlu0 %650, %v646
        %v652 = vpop.permute.xlu0 %651
        %v653 = vlaneseq
        %v654 = vshrl.u32 %v653, 7
        %v655 = vadd.s32 %v654, 8
        %656 = vset.pattern.permute.xlu0 %v655
        %657 = vperm.xlu0 %656, %v646
        %v658 = vpop.permute.xlu0 %657
        %v659 = vlaneseq
        %v660 = vshrl.u32 %v659, 7
        %v661 = vadd.s32 %v660, 16
        %662 = vset.pattern.permute.xlu0 %v661
        %663 = vperm.xlu0 %662, %v646
        %v664 = vpop.permute.xlu0 %663
        %v665 = vlaneseq
        %v666 = vshrl.u32 %v665, 7
        %v667 = vadd.s32 %v666, 24
        %668 = vset.pattern.permute.xlu0 %v667
        %669 = vperm.xlu0 %668, %v646
        %v670 = vpop.permute.xlu0 %669
        %v671 = vlaneseq
        %v672 = vshrl.u32 %v671, 7
        %v673 = vadd.s32 %v672, 32
        %674 = vset.pattern.permute.xlu0 %v673
        %675 = vperm.xlu0 %674, %v646
        %v676 = vpop.permute.xlu0 %675
        %v677 = vlaneseq
        %v678 = vshrl.u32 %v677, 7
        %v679 = vadd.s32 %v678, 40
        %680 = vset.pattern.permute.xlu0 %v679
        %681 = vperm.xlu0 %680, %v646
        %v682 = vpop.permute.xlu0 %681
        %v683 = vlaneseq
        %v684 = vshrl.u32 %v683, 7
        %v685 = vadd.s32 %v684, 48
        %686 = vset.pattern.permute.xlu0 %v685
        %687 = vperm.xlu0 %686, %v646
        %v688 = vpop.permute.xlu0 %687
        %v689 = vlaneseq
        %v690 = vshrl.u32 %v689, 7
        %v691 = vadd.s32 %v690, 56
        %692 = vset.pattern.permute.xlu0 %v691
        %693 = vperm.xlu0 %692, %v646
        %v694 = vpop.permute.xlu0 %693
        %v695 = vlaneseq
        %v696 = vshrl.u32 %v695, 7
        %v697 = vadd.s32 %v696, 64
        %698 = vset.pattern.permute.xlu0 %v697
        %699 = vperm.xlu0 %698, %v646
        %v700 = vpop.permute.xlu0 %699
        %v701 = vlaneseq
        %v702 = vshrl.u32 %v701, 7
        %v703 = vadd.s32 %v702, 72
        %704 = vset.pattern.permute.xlu0 %v703
        %705 = vperm.xlu0 %704, %v646
        %v706 = vpop.permute.xlu0 %705
        %v707 = vlaneseq
        %v708 = vshrl.u32 %v707, 7
        %v709 = vadd.s32 %v708, 80
        %710 = vset.pattern.permute.xlu0 %v709
        %711 = vperm.xlu0 %710, %v646
        %v712 = vpop.permute.xlu0 %711
        %v713 = vlaneseq
        %v714 = vshrl.u32 %v713, 7
        %v715 = vadd.s32 %v714, 88
        %716 = vset.pattern.permute.xlu0 %v715
        %717 = vperm.xlu0 %716, %v646
        %v718 = vpop.permute.xlu0 %717
        %v719 = vlaneseq
        %v720 = vshrl.u32 %v719, 7
        %v721 = vadd.s32 %v720, 96
        %722 = vset.pattern.permute.xlu0 %v721
        %723 = vperm.xlu0 %722, %v646
        %v724 = vpop.permute.xlu0 %723
        %v725 = vlaneseq
        %v726 = vshrl.u32 %v725, 7
        %v727 = vadd.s32 %v726, 104
        %728 = vset.pattern.permute.xlu0 %v727
        %729 = vperm.xlu0 %728, %v646
        %v730 = vpop.permute.xlu0 %729
        %v731 = vlaneseq
        %v732 = vshrl.u32 %v731, 7
        %v733 = vadd.s32 %v732, 112
        %734 = vset.pattern.permute.xlu0 %v733
        %735 = vperm.xlu0 %734, %v646
        %v736 = vpop.permute.xlu0 %735
        %v737 = vlaneseq
        %v738 = vshrl.u32 %v737, 7
        %v739 = vadd.s32 %v738, 120
        %740 = vset.pattern.permute.xlu0 %v739
        %741 = vperm.xlu0 %740, %v646
        %v742 = vpop.permute.xlu0 %741
        %v745 = vperm.slane %v343, 0
        %v746 = vperm.slane %v343, 4
        %v747 = vperm.slane %v344, 0
        %v748 = vperm.slane %v344, 4
        %v753 = vperm.slane %v745, 0
        %v754 = vperm.slane %v746, 0
        %v755 = vperm.slane %v747, 0
        %v756 = vperm.slane %v748, 0
        %v757 = vmul.f32 %v361, %v753
        %v758 = vmul.f32 %v361, %v754
        %v759 = vmul.f32 %v361, %v755
        %v760 = vmul.f32 %v361, %v756
        %v761 = vmul.f32 %v367, %v753
        %v762 = vmul.f32 %v367, %v754
        %v763 = vmul.f32 %v367, %v755
        %v764 = vmul.f32 %v367, %v756
        %v765 = vmul.f32 %v373, %v753
        %v766 = vmul.f32 %v373, %v754
        %v767 = vmul.f32 %v373, %v755
        %v768 = vmul.f32 %v373, %v756
        %v769 = vmul.f32 %v379, %v753
        %v770 = vmul.f32 %v379, %v754
        %v771 = vmul.f32 %v379, %v755
        %v772 = vmul.f32 %v379, %v756
        %v773 = vmul.f32 %v385, %v753
        %v774 = vmul.f32 %v385, %v754
        %v775 = vmul.f32 %v385, %v755
        %v776 = vmul.f32 %v385, %v756
        %v777 = vmul.f32 %v391, %v753
        %v778 = vmul.f32 %v391, %v754
        %v779 = vmul.f32 %v391, %v755
        %v780 = vmul.f32 %v391, %v756
        %v781 = vmul.f32 %v397, %v753
        %v782 = vmul.f32 %v397, %v754
        %v783 = vmul.f32 %v397, %v755
        %v784 = vmul.f32 %v397, %v756
        %v785 = vmul.f32 %v403, %v753
        %v786 = vmul.f32 %v403, %v754
        %v787 = vmul.f32 %v403, %v755
        %v788 = vmul.f32 %v403, %v756
        %v789 = vmul.f32 %v409, %v753
        %v790 = vmul.f32 %v409, %v754
        %v791 = vmul.f32 %v409, %v755
        %v792 = vmul.f32 %v409, %v756
        %v793 = vmul.f32 %v415, %v753
        %v794 = vmul.f32 %v415, %v754
        %v795 = vmul.f32 %v415, %v755
        %v796 = vmul.f32 %v415, %v756
        %v797 = vmul.f32 %v421, %v753
        %v798 = vmul.f32 %v421, %v754
        %v799 = vmul.f32 %v421, %v755
        %v800 = vmul.f32 %v421, %v756
        %v801 = vmul.f32 %v427, %v753
        %v802 = vmul.f32 %v427, %v754
        %v803 = vmul.f32 %v427, %v755
        %v804 = vmul.f32 %v427, %v756
        %v805 = vmul.f32 %v433, %v753
        %v806 = vmul.f32 %v433, %v754
        %v807 = vmul.f32 %v433, %v755
        %v808 = vmul.f32 %v433, %v756
        %v809 = vmul.f32 %v439, %v753
        %v810 = vmul.f32 %v439, %v754
        %v811 = vmul.f32 %v439, %v755
        %v812 = vmul.f32 %v439, %v756
        %v813 = vmul.f32 %v445, %v753
        %v814 = vmul.f32 %v445, %v754
        %v815 = vmul.f32 %v445, %v755
        %v816 = vmul.f32 %v445, %v756
        %v817 = vmul.f32 %v451, %v753
        %v818 = vmul.f32 %v451, %v754
        %v819 = vmul.f32 %v451, %v755
        %v820 = vmul.f32 %v451, %v756
        %v821 = vmul.f32 %v458, %v753
        %v822 = vmul.f32 %v458, %v754
        %v823 = vmul.f32 %v458, %v755
        %v824 = vmul.f32 %v458, %v756
        %v825 = vmul.f32 %v464, %v753
        %v826 = vmul.f32 %v464, %v754
        %v827 = vmul.f32 %v464, %v755
        %v828 = vmul.f32 %v464, %v756
        %v829 = vmul.f32 %v470, %v753
        %v830 = vmul.f32 %v470, %v754
        %v831 = vmul.f32 %v470, %v755
        %v832 = vmul.f32 %v470, %v756
        %v833 = vmul.f32 %v476, %v753
        %v834 = vmul.f32 %v476, %v754
        %v835 = vmul.f32 %v476, %v755
        %v836 = vmul.f32 %v476, %v756
        %v837 = vmul.f32 %v482, %v753
        %v838 = vmul.f32 %v482, %v754
        %v839 = vmul.f32 %v482, %v755
        %v840 = vmul.f32 %v482, %v756
        %v841 = vmul.f32 %v488, %v753
        %v842 = vmul.f32 %v488, %v754
        %v843 = vmul.f32 %v488, %v755
        %v844 = vmul.f32 %v488, %v756
        %v845 = vmul.f32 %v494, %v753
        %v846 = vmul.f32 %v494, %v754
        %v847 = vmul.f32 %v494, %v755
        %v848 = vmul.f32 %v494, %v756
        %v849 = vmul.f32 %v500, %v753
        %v850 = vmul.f32 %v500, %v754
        %v851 = vmul.f32 %v500, %v755
        %v852 = vmul.f32 %v500, %v756
        %v853 = vmul.f32 %v506, %v753
        %v854 = vmul.f32 %v506, %v754
        %v855 = vmul.f32 %v506, %v755
        %v856 = vmul.f32 %v506, %v756
        %v857 = vmul.f32 %v512, %v753
        %v858 = vmul.f32 %v512, %v754
        %v859 = vmul.f32 %v512, %v755
        %v860 = vmul.f32 %v512, %v756
        %v861 = vmul.f32 %v518, %v753
        %v862 = vmul.f32 %v518, %v754
        %v863 = vmul.f32 %v518, %v755
        %v864 = vmul.f32 %v518, %v756
        %v865 = vmul.f32 %v524, %v753
        %v866 = vmul.f32 %v524, %v754
        %v867 = vmul.f32 %v524, %v755
        %v868 = vmul.f32 %v524, %v756
        %v869 = vmul.f32 %v530, %v753
        %v870 = vmul.f32 %v530, %v754
        %v871 = vmul.f32 %v530, %v755
        %v872 = vmul.f32 %v530, %v756
        %v873 = vmul.f32 %v536, %v753
        %v874 = vmul.f32 %v536, %v754
        %v875 = vmul.f32 %v536, %v755
        %v876 = vmul.f32 %v536, %v756
        %v877 = vmul.f32 %v542, %v753
        %v878 = vmul.f32 %v542, %v754
        %v879 = vmul.f32 %v542, %v755
        %v880 = vmul.f32 %v542, %v756
        %v881 = vmul.f32 %v548, %v753
        %v882 = vmul.f32 %v548, %v754
        %v883 = vmul.f32 %v548, %v755
        %v884 = vmul.f32 %v548, %v756
        %v885 = vmul.f32 %v555, %v753
        %v886 = vmul.f32 %v555, %v754
        %v887 = vmul.f32 %v555, %v755
        %v888 = vmul.f32 %v555, %v756
        %v889 = vmul.f32 %v561, %v753
        %v890 = vmul.f32 %v561, %v754
        %v891 = vmul.f32 %v561, %v755
        %v892 = vmul.f32 %v561, %v756
        %v893 = vmul.f32 %v567, %v753
        %v894 = vmul.f32 %v567, %v754
        %v895 = vmul.f32 %v567, %v755
        %v896 = vmul.f32 %v567, %v756
        %v897 = vmul.f32 %v573, %v753
        %v898 = vmul.f32 %v573, %v754
        %v899 = vmul.f32 %v573, %v755
        %v900 = vmul.f32 %v573, %v756
        %v901 = vmul.f32 %v579, %v753
        %v902 = vmul.f32 %v579, %v754
        %v903 = vmul.f32 %v579, %v755
        %v904 = vmul.f32 %v579, %v756
        %v905 = vmul.f32 %v585, %v753
        %v906 = vmul.f32 %v585, %v754
        %v907 = vmul.f32 %v585, %v755
        %v908 = vmul.f32 %v585, %v756
        %v909 = vmul.f32 %v591, %v753
        %v910 = vmul.f32 %v591, %v754
        %v911 = vmul.f32 %v591, %v755
        %v912 = vmul.f32 %v591, %v756
        %v913 = vmul.f32 %v597, %v753
        %v914 = vmul.f32 %v597, %v754
        %v915 = vmul.f32 %v597, %v755
        %v916 = vmul.f32 %v597, %v756
        %v917 = vmul.f32 %v603, %v753
        %v918 = vmul.f32 %v603, %v754
        %v919 = vmul.f32 %v603, %v755
        %v920 = vmul.f32 %v603, %v756
        %v921 = vmul.f32 %v609, %v753
        %v922 = vmul.f32 %v609, %v754
        %v923 = vmul.f32 %v609, %v755
        %v924 = vmul.f32 %v609, %v756
        %v925 = vmul.f32 %v615, %v753
        %v926 = vmul.f32 %v615, %v754
        %v927 = vmul.f32 %v615, %v755
        %v928 = vmul.f32 %v615, %v756
        %v929 = vmul.f32 %v621, %v753
        %v930 = vmul.f32 %v621, %v754
        %v931 = vmul.f32 %v621, %v755
        %v932 = vmul.f32 %v621, %v756
        %v933 = vmul.f32 %v627, %v753
        %v934 = vmul.f32 %v627, %v754
        %v935 = vmul.f32 %v627, %v755
        %v936 = vmul.f32 %v627, %v756
        %v937 = vmul.f32 %v633, %v753
        %v938 = vmul.f32 %v633, %v754
        %v939 = vmul.f32 %v633, %v755
        %v940 = vmul.f32 %v633, %v756
        %v941 = vmul.f32 %v639, %v753
        %v942 = vmul.f32 %v639, %v754
        %v943 = vmul.f32 %v639, %v755
        %v944 = vmul.f32 %v639, %v756
        %v945 = vmul.f32 %v645, %v753
        %v946 = vmul.f32 %v645, %v754
        %v947 = vmul.f32 %v645, %v755
        %v948 = vmul.f32 %v645, %v756
        %v949 = vmul.f32 %v652, %v753
        %v950 = vmul.f32 %v652, %v754
        %v951 = vmul.f32 %v652, %v755
        %v952 = vmul.f32 %v652, %v756
        %v953 = vmul.f32 %v658, %v753
        %v954 = vmul.f32 %v658, %v754
        %v955 = vmul.f32 %v658, %v755
        %v956 = vmul.f32 %v658, %v756
        %v957 = vmul.f32 %v664, %v753
        %v958 = vmul.f32 %v664, %v754
        %v959 = vmul.f32 %v664, %v755
        %v960 = vmul.f32 %v664, %v756
        %v961 = vmul.f32 %v670, %v753
        %v962 = vmul.f32 %v670, %v754
        %v963 = vmul.f32 %v670, %v755
        %v964 = vmul.f32 %v670, %v756
        %v965 = vmul.f32 %v676, %v753
        %v966 = vmul.f32 %v676, %v754
        %v967 = vmul.f32 %v676, %v755
        %v968 = vmul.f32 %v676, %v756
        %v969 = vmul.f32 %v682, %v753
        %v970 = vmul.f32 %v682, %v754
        %v971 = vmul.f32 %v682, %v755
        %v972 = vmul.f32 %v682, %v756
        %v973 = vmul.f32 %v688, %v753
        %v974 = vmul.f32 %v688, %v754
        %v975 = vmul.f32 %v688, %v755
        %v976 = vmul.f32 %v688, %v756
        %v977 = vmul.f32 %v694, %v753
        %v978 = vmul.f32 %v694, %v754
        %v979 = vmul.f32 %v694, %v755
        %v980 = vmul.f32 %v694, %v756
        %v981 = vmul.f32 %v700, %v753
        %v982 = vmul.f32 %v700, %v754
        %v983 = vmul.f32 %v700, %v755
        %v984 = vmul.f32 %v700, %v756
        %v985 = vmul.f32 %v706, %v753
        %v986 = vmul.f32 %v706, %v754
        %v987 = vmul.f32 %v706, %v755
        %v988 = vmul.f32 %v706, %v756
        %v989 = vmul.f32 %v712, %v753
        %v990 = vmul.f32 %v712, %v754
        %v991 = vmul.f32 %v712, %v755
        %v992 = vmul.f32 %v712, %v756
        %v993 = vmul.f32 %v718, %v753
        %v994 = vmul.f32 %v718, %v754
        %v995 = vmul.f32 %v718, %v755
        %v996 = vmul.f32 %v718, %v756
        %v997 = vmul.f32 %v724, %v753
        %v998 = vmul.f32 %v724, %v754
        %v999 = vmul.f32 %v724, %v755
        %v1000 = vmul.f32 %v724, %v756
        %v1001 = vmul.f32 %v730, %v753
        %v1002 = vmul.f32 %v730, %v754
        %v1003 = vmul.f32 %v730, %v755
        %v1004 = vmul.f32 %v730, %v756
        %v1005 = vmul.f32 %v736, %v753
        %v1006 = vmul.f32 %v736, %v754
        %v1007 = vmul.f32 %v736, %v755
        %v1008 = vmul.f32 %v736, %v756
        %v1009 = vmul.f32 %v742, %v753
        %v1010 = vmul.f32 %v742, %v754
        %v1011 = vmul.f32 %v742, %v755
        %v1012 = vmul.f32 %v742, %v756
        %v1013 = vperm.slane %v341, 1
        %v1014 = vperm.slane %v341, 5
        %v1015 = vperm.slane %v342, 1
        %v1016 = vperm.slane %v342, 5
        %v1021 = vperm.slane %v1013, 1
        %v1022 = vlaneseq
        %v1023 = vshrl.u32 %v1022, 7
        %1025 = vset.pattern.permute.xlu0 %v1023
        %1026 = vperm.xlu0 %1025, %v1021
        %v1027 = vpop.permute.xlu0 %1026
        %v1028 = vlaneseq
        %v1029 = vshrl.u32 %v1028, 7
        %v1030 = vadd.s32 %v1029, 8
        %1031 = vset.pattern.permute.xlu0 %v1030
        %1032 = vperm.xlu0 %1031, %v1021
        %v1033 = vpop.permute.xlu0 %1032
        %v1034 = vlaneseq
        %v1035 = vshrl.u32 %v1034, 7
        %v1036 = vadd.s32 %v1035, 16
        %1037 = vset.pattern.permute.xlu0 %v1036
        %1038 = vperm.xlu0 %1037, %v1021
        %v1039 = vpop.permute.xlu0 %1038
        %v1040 = vlaneseq
        %v1041 = vshrl.u32 %v1040, 7
        %v1042 = vadd.s32 %v1041, 24
        %1043 = vset.pattern.permute.xlu0 %v1042
        %1044 = vperm.xlu0 %1043, %v1021
        %v1045 = vpop.permute.xlu0 %1044
        %v1046 = vlaneseq
        %v1047 = vshrl.u32 %v1046, 7
        %v1048 = vadd.s32 %v1047, 32
        %1049 = vset.pattern.permute.xlu0 %v1048
        %1050 = vperm.xlu0 %1049, %v1021
        %v1051 = vpop.permute.xlu0 %1050
        %v1052 = vlaneseq
        %v1053 = vshrl.u32 %v1052, 7
        %v1054 = vadd.s32 %v1053, 40
        %1055 = vset.pattern.permute.xlu0 %v1054
        %1056 = vperm.xlu0 %1055, %v1021
        %v1057 = vpop.permute.xlu0 %1056
        %v1058 = vlaneseq
        %v1059 = vshrl.u32 %v1058, 7
        %v1060 = vadd.s32 %v1059, 48
        %1061 = vset.pattern.permute.xlu0 %v1060
        %1062 = vperm.xlu0 %1061, %v1021
        %v1063 = vpop.permute.xlu0 %1062
        %v1064 = vlaneseq
        %v1065 = vshrl.u32 %v1064, 7
        %v1066 = vadd.s32 %v1065, 56
        %1067 = vset.pattern.permute.xlu0 %v1066
        %1068 = vperm.xlu0 %1067, %v1021
        %v1069 = vpop.permute.xlu0 %1068
        %v1070 = vlaneseq
        %v1071 = vshrl.u32 %v1070, 7
        %v1072 = vadd.s32 %v1071, 64
        %1073 = vset.pattern.permute.xlu0 %v1072
        %1074 = vperm.xlu0 %1073, %v1021
        %v1075 = vpop.permute.xlu0 %1074
        %v1076 = vlaneseq
        %v1077 = vshrl.u32 %v1076, 7
        %v1078 = vadd.s32 %v1077, 72
        %1079 = vset.pattern.permute.xlu0 %v1078
        %1080 = vperm.xlu0 %1079, %v1021
        %v1081 = vpop.permute.xlu0 %1080
        %v1082 = vlaneseq
        %v1083 = vshrl.u32 %v1082, 7
        %v1084 = vadd.s32 %v1083, 80
        %1085 = vset.pattern.permute.xlu0 %v1084
        %1086 = vperm.xlu0 %1085, %v1021
        %v1087 = vpop.permute.xlu0 %1086
        %v1088 = vlaneseq
        %v1089 = vshrl.u32 %v1088, 7
        %v1090 = vadd.s32 %v1089, 88
        %1091 = vset.pattern.permute.xlu0 %v1090
        %1092 = vperm.xlu0 %1091, %v1021
        %v1093 = vpop.permute.xlu0 %1092
        %v1094 = vlaneseq
        %v1095 = vshrl.u32 %v1094, 7
        %v1096 = vadd.s32 %v1095, 96
        %1097 = vset.pattern.permute.xlu0 %v1096
        %1098 = vperm.xlu0 %1097, %v1021
        %v1099 = vpop.permute.xlu0 %1098
        %v1100 = vlaneseq
        %v1101 = vshrl.u32 %v1100, 7
        %v1102 = vadd.s32 %v1101, 104
        %1103 = vset.pattern.permute.xlu0 %v1102
        %1104 = vperm.xlu0 %1103, %v1021
        %v1105 = vpop.permute.xlu0 %1104
        %v1106 = vlaneseq
        %v1107 = vshrl.u32 %v1106, 7
        %v1108 = vadd.s32 %v1107, 112
        %1109 = vset.pattern.permute.xlu0 %v1108
        %1110 = vperm.xlu0 %1109, %v1021
        %v1111 = vpop.permute.xlu0 %1110
        %v1112 = vlaneseq
        %v1113 = vshrl.u32 %v1112, 7
        %v1114 = vadd.s32 %v1113, 120
        %1115 = vset.pattern.permute.xlu0 %v1114
        %1116 = vperm.xlu0 %1115, %v1021
        %v1117 = vpop.permute.xlu0 %1116
        %v1118 = vperm.slane %v1014, 1
        %v1119 = vlaneseq
        %v1120 = vshrl.u32 %v1119, 7
        %1122 = vset.pattern.permute.xlu0 %v1120
        %1123 = vperm.xlu0 %1122, %v1118
        %v1124 = vpop.permute.xlu0 %1123
        %v1125 = vlaneseq
        %v1126 = vshrl.u32 %v1125, 7
        %v1127 = vadd.s32 %v1126, 8
        %1128 = vset.pattern.permute.xlu0 %v1127
        %1129 = vperm.xlu0 %1128, %v1118
        %v1130 = vpop.permute.xlu0 %1129
        %v1131 = vlaneseq
        %v1132 = vshrl.u32 %v1131, 7
        %v1133 = vadd.s32 %v1132, 16
        %1134 = vset.pattern.permute.xlu0 %v1133
        %1135 = vperm.xlu0 %1134, %v1118
        %v1136 = vpop.permute.xlu0 %1135
        %v1137 = vlaneseq
        %v1138 = vshrl.u32 %v1137, 7
        %v1139 = vadd.s32 %v1138, 24
        %1140 = vset.pattern.permute.xlu0 %v1139
        %1141 = vperm.xlu0 %1140, %v1118
        %v1142 = vpop.permute.xlu0 %1141
        %v1143 = vlaneseq
        %v1144 = vshrl.u32 %v1143, 7
        %v1145 = vadd.s32 %v1144, 32
        %1146 = vset.pattern.permute.xlu0 %v1145
        %1147 = vperm.xlu0 %1146, %v1118
        %v1148 = vpop.permute.xlu0 %1147
        %v1149 = vlaneseq
        %v1150 = vshrl.u32 %v1149, 7
        %v1151 = vadd.s32 %v1150, 40
        %1152 = vset.pattern.permute.xlu0 %v1151
        %1153 = vperm.xlu0 %1152, %v1118
        %v1154 = vpop.permute.xlu0 %1153
        %v1155 = vlaneseq
        %v1156 = vshrl.u32 %v1155, 7
        %v1157 = vadd.s32 %v1156, 48
        %1158 = vset.pattern.permute.xlu0 %v1157
        %1159 = vperm.xlu0 %1158, %v1118
        %v1160 = vpop.permute.xlu0 %1159
        %v1161 = vlaneseq
        %v1162 = vshrl.u32 %v1161, 7
        %v1163 = vadd.s32 %v1162, 56
        %1164 = vset.pattern.permute.xlu0 %v1163
        %1165 = vperm.xlu0 %1164, %v1118
        %v1166 = vpop.permute.xlu0 %1165
        %v1167 = vlaneseq
        %v1168 = vshrl.u32 %v1167, 7
        %v1169 = vadd.s32 %v1168, 64
        %1170 = vset.pattern.permute.xlu0 %v1169
        %1171 = vperm.xlu0 %1170, %v1118
        %v1172 = vpop.permute.xlu0 %1171
        %v1173 = vlaneseq
        %v1174 = vshrl.u32 %v1173, 7
        %v1175 = vadd.s32 %v1174, 72
        %1176 = vset.pattern.permute.xlu0 %v1175
        %1177 = vperm.xlu0 %1176, %v1118
        %v1178 = vpop.permute.xlu0 %1177
        %v1179 = vlaneseq
        %v1180 = vshrl.u32 %v1179, 7
        %v1181 = vadd.s32 %v1180, 80
        %1182 = vset.pattern.permute.xlu0 %v1181
        %1183 = vperm.xlu0 %1182, %v1118
        %v1184 = vpop.permute.xlu0 %1183
        %v1185 = vlaneseq
        %v1186 = vshrl.u32 %v1185, 7
        %v1187 = vadd.s32 %v1186, 88
        %1188 = vset.pattern.permute.xlu0 %v1187
        %1189 = vperm.xlu0 %1188, %v1118
        %v1190 = vpop.permute.xlu0 %1189
        %v1191 = vlaneseq
        %v1192 = vshrl.u32 %v1191, 7
        %v1193 = vadd.s32 %v1192, 96
        %1194 = vset.pattern.permute.xlu0 %v1193
        %1195 = vperm.xlu0 %1194, %v1118
        %v1196 = vpop.permute.xlu0 %1195
        %v1197 = vlaneseq
        %v1198 = vshrl.u32 %v1197, 7
        %v1199 = vadd.s32 %v1198, 104
        %1200 = vset.pattern.permute.xlu0 %v1199
        %1201 = vperm.xlu0 %1200, %v1118
        %v1202 = vpop.permute.xlu0 %1201
        %v1203 = vlaneseq
        %v1204 = vshrl.u32 %v1203, 7
        %v1205 = vadd.s32 %v1204, 112
        %1206 = vset.pattern.permute.xlu0 %v1205
        %1207 = vperm.xlu0 %1206, %v1118
        %v1208 = vpop.permute.xlu0 %1207
        %v1209 = vlaneseq
        %v1210 = vshrl.u32 %v1209, 7
        %v1211 = vadd.s32 %v1210, 120
        %1212 = vset.pattern.permute.xlu0 %v1211
        %1213 = vperm.xlu0 %1212, %v1118
        %v1214 = vpop.permute.xlu0 %1213
        %v1215 = vperm.slane %v1015, 1
        %v1216 = vlaneseq
        %v1217 = vshrl.u32 %v1216, 7
        %1219 = vset.pattern.permute.xlu0 %v1217
        %1220 = vperm.xlu0 %1219, %v1215
        %v1221 = vpop.permute.xlu0 %1220
        %v1222 = vlaneseq
        %v1223 = vshrl.u32 %v1222, 7
        %v1224 = vadd.s32 %v1223, 8
        %1225 = vset.pattern.permute.xlu0 %v1224
        %1226 = vperm.xlu0 %1225, %v1215
        %v1227 = vpop.permute.xlu0 %1226
        %v1228 = vlaneseq
        %v1229 = vshrl.u32 %v1228, 7
        %v1230 = vadd.s32 %v1229, 16
        %1231 = vset.pattern.permute.xlu0 %v1230
        %1232 = vperm.xlu0 %1231, %v1215
        %v1233 = vpop.permute.xlu0 %1232
        %v1234 = vlaneseq
        %v1235 = vshrl.u32 %v1234, 7
        %v1236 = vadd.s32 %v1235, 24
        %1237 = vset.pattern.permute.xlu0 %v1236
        %1238 = vperm.xlu0 %1237, %v1215
        %v1239 = vpop.permute.xlu0 %1238
        %v1240 = vlaneseq
        %v1241 = vshrl.u32 %v1240, 7
        %v1242 = vadd.s32 %v1241, 32
        %1243 = vset.pattern.permute.xlu0 %v1242
        %1244 = vperm.xlu0 %1243, %v1215
        %v1245 = vpop.permute.xlu0 %1244
        %v1246 = vlaneseq
        %v1247 = vshrl.u32 %v1246, 7
        %v1248 = vadd.s32 %v1247, 40
        %1249 = vset.pattern.permute.xlu0 %v1248
        %1250 = vperm.xlu0 %1249, %v1215
        %v1251 = vpop.permute.xlu0 %1250
        %v1252 = vlaneseq
        %v1253 = vshrl.u32 %v1252, 7
        %v1254 = vadd.s32 %v1253, 48
        %1255 = vset.pattern.permute.xlu0 %v1254
        %1256 = vperm.xlu0 %1255, %v1215
        %v1257 = vpop.permute.xlu0 %1256
        %v1258 = vlaneseq
        %v1259 = vshrl.u32 %v1258, 7
        %v1260 = vadd.s32 %v1259, 56
        %1261 = vset.pattern.permute.xlu0 %v1260
        %1262 = vperm.xlu0 %1261, %v1215
        %v1263 = vpop.permute.xlu0 %1262
        %v1264 = vlaneseq
        %v1265 = vshrl.u32 %v1264, 7
        %v1266 = vadd.s32 %v1265, 64
        %1267 = vset.pattern.permute.xlu0 %v1266
        %1268 = vperm.xlu0 %1267, %v1215
        %v1269 = vpop.permute.xlu0 %1268
        %v1270 = vlaneseq
        %v1271 = vshrl.u32 %v1270, 7
        %v1272 = vadd.s32 %v1271, 72
        %1273 = vset.pattern.permute.xlu0 %v1272
        %1274 = vperm.xlu0 %1273, %v1215
        %v1275 = vpop.permute.xlu0 %1274
        %v1276 = vlaneseq
        %v1277 = vshrl.u32 %v1276, 7
        %v1278 = vadd.s32 %v1277, 80
        %1279 = vset.pattern.permute.xlu0 %v1278
        %1280 = vperm.xlu0 %1279, %v1215
        %v1281 = vpop.permute.xlu0 %1280
        %v1282 = vlaneseq
        %v1283 = vshrl.u32 %v1282, 7
        %v1284 = vadd.s32 %v1283, 88
        %1285 = vset.pattern.permute.xlu0 %v1284
        %1286 = vperm.xlu0 %1285, %v1215
        %v1287 = vpop.permute.xlu0 %1286
        %v1288 = vlaneseq
        %v1289 = vshrl.u32 %v1288, 7
        %v1290 = vadd.s32 %v1289, 96
        %1291 = vset.pattern.permute.xlu0 %v1290
        %1292 = vperm.xlu0 %1291, %v1215
        %v1293 = vpop.permute.xlu0 %1292
        %v1294 = vlaneseq
        %v1295 = vshrl.u32 %v1294, 7
        %v1296 = vadd.s32 %v1295, 104
        %1297 = vset.pattern.permute.xlu0 %v1296
        %1298 = vperm.xlu0 %1297, %v1215
        %v1299 = vpop.permute.xlu0 %1298
        %v1300 = vlaneseq
        %v1301 = vshrl.u32 %v1300, 7
        %v1302 = vadd.s32 %v1301, 112
        %1303 = vset.pattern.permute.xlu0 %v1302
        %1304 = vperm.xlu0 %1303, %v1215
        %v1305 = vpop.permute.xlu0 %1304
        %v1306 = vlaneseq
        %v1307 = vshrl.u32 %v1306, 7
        %v1308 = vadd.s32 %v1307, 120
        %1309 = vset.pattern.permute.xlu0 %v1308
        %1310 = vperm.xlu0 %1309, %v1215
        %v1311 = vpop.permute.xlu0 %1310
        %v1312 = vperm.slane %v1016, 1
        %v1313 = vlaneseq
        %v1314 = vshrl.u32 %v1313, 7
        %1316 = vset.pattern.permute.xlu0 %v1314
        %1317 = vperm.xlu0 %1316, %v1312
        %v1318 = vpop.permute.xlu0 %1317
        %v1319 = vlaneseq
        %v1320 = vshrl.u32 %v1319, 7
        %v1321 = vadd.s32 %v1320, 8
        %1322 = vset.pattern.permute.xlu0 %v1321
        %1323 = vperm.xlu0 %1322, %v1312
        %v1324 = vpop.permute.xlu0 %1323
        %v1325 = vlaneseq
        %v1326 = vshrl.u32 %v1325, 7
        %v1327 = vadd.s32 %v1326, 16
        %1328 = vset.pattern.permute.xlu0 %v1327
        %1329 = vperm.xlu0 %1328, %v1312
        %v1330 = vpop.permute.xlu0 %1329
        %v1331 = vlaneseq
        %v1332 = vshrl.u32 %v1331, 7
        %v1333 = vadd.s32 %v1332, 24
        %1334 = vset.pattern.permute.xlu0 %v1333
        %1335 = vperm.xlu0 %1334, %v1312
        %v1336 = vpop.permute.xlu0 %1335
        %v1337 = vlaneseq
        %v1338 = vshrl.u32 %v1337, 7
        %v1339 = vadd.s32 %v1338, 32
        %1340 = vset.pattern.permute.xlu0 %v1339
        %1341 = vperm.xlu0 %1340, %v1312
        %v1342 = vpop.permute.xlu0 %1341
        %v1343 = vlaneseq
        %v1344 = vshrl.u32 %v1343, 7
        %v1345 = vadd.s32 %v1344, 40
        %1346 = vset.pattern.permute.xlu0 %v1345
        %1347 = vperm.xlu0 %1346, %v1312
        %v1348 = vpop.permute.xlu0 %1347
        %v1349 = vlaneseq
        %v1350 = vshrl.u32 %v1349, 7
        %v1351 = vadd.s32 %v1350, 48
        %1352 = vset.pattern.permute.xlu0 %v1351
        %1353 = vperm.xlu0 %1352, %v1312
        %v1354 = vpop.permute.xlu0 %1353
        %v1355 = vlaneseq
        %v1356 = vshrl.u32 %v1355, 7
        %v1357 = vadd.s32 %v1356, 56
        %1358 = vset.pattern.permute.xlu0 %v1357
        %1359 = vperm.xlu0 %1358, %v1312
        %v1360 = vpop.permute.xlu0 %1359
        %v1361 = vlaneseq
        %v1362 = vshrl.u32 %v1361, 7
        %v1363 = vadd.s32 %v1362, 64
        %1364 = vset.pattern.permute.xlu0 %v1363
        %1365 = vperm.xlu0 %1364, %v1312
        %v1366 = vpop.permute.xlu0 %1365
        %v1367 = vlaneseq
        %v1368 = vshrl.u32 %v1367, 7
        %v1369 = vadd.s32 %v1368, 72
        %1370 = vset.pattern.permute.xlu0 %v1369
        %1371 = vperm.xlu0 %1370, %v1312
        %v1372 = vpop.permute.xlu0 %1371
        %v1373 = vlaneseq
        %v1374 = vshrl.u32 %v1373, 7
        %v1375 = vadd.s32 %v1374, 80
        %1376 = vset.pattern.permute.xlu0 %v1375
        %1377 = vperm.xlu0 %1376, %v1312
        %v1378 = vpop.permute.xlu0 %1377
        %v1379 = vlaneseq
        %v1380 = vshrl.u32 %v1379, 7
        %v1381 = vadd.s32 %v1380, 88
        %1382 = vset.pattern.permute.xlu0 %v1381
        %1383 = vperm.xlu0 %1382, %v1312
        %v1384 = vpop.permute.xlu0 %1383
        %v1385 = vlaneseq
        %v1386 = vshrl.u32 %v1385, 7
        %v1387 = vadd.s32 %v1386, 96
        %1388 = vset.pattern.permute.xlu0 %v1387
        %1389 = vperm.xlu0 %1388, %v1312
        %v1390 = vpop.permute.xlu0 %1389
        %v1391 = vlaneseq
        %v1392 = vshrl.u32 %v1391, 7
        %v1393 = vadd.s32 %v1392, 104
        %1394 = vset.pattern.permute.xlu0 %v1393
        %1395 = vperm.xlu0 %1394, %v1312
        %v1396 = vpop.permute.xlu0 %1395
        %v1397 = vlaneseq
        %v1398 = vshrl.u32 %v1397, 7
        %v1399 = vadd.s32 %v1398, 112
        %1400 = vset.pattern.permute.xlu0 %v1399
        %1401 = vperm.xlu0 %1400, %v1312
        %v1402 = vpop.permute.xlu0 %1401
        %v1403 = vlaneseq
        %v1404 = vshrl.u32 %v1403, 7
        %v1405 = vadd.s32 %v1404, 120
        %1406 = vset.pattern.permute.xlu0 %v1405
        %1407 = vperm.xlu0 %1406, %v1312
        %v1408 = vpop.permute.xlu0 %1407
        %v1409 = vperm.slane %v343, 1
        %v1410 = vperm.slane %v343, 5
        %v1411 = vperm.slane %v344, 1
        %v1412 = vperm.slane %v344, 5
        %v1417 = vperm.slane %v1409, 1
        %v1418 = vperm.slane %v1410, 1
        %v1419 = vperm.slane %v1411, 1
        %v1420 = vperm.slane %v1412, 1
        %v1421 = vmul.f32 %v1027, %v1417
        %v1422 = vmul.f32 %v1027, %v1418
        %v1423 = vmul.f32 %v1027, %v1419
        %v1424 = vmul.f32 %v1027, %v1420
        %v1425 = vmul.f32 %v1033, %v1417
        %v1426 = vmul.f32 %v1033, %v1418
        %v1427 = vmul.f32 %v1033, %v1419
        %v1428 = vmul.f32 %v1033, %v1420
        %v1429 = vmul.f32 %v1039, %v1417
        %v1430 = vmul.f32 %v1039, %v1418
        %v1431 = vmul.f32 %v1039, %v1419
        %v1432 = vmul.f32 %v1039, %v1420
        %v1433 = vmul.f32 %v1045, %v1417
        %v1434 = vmul.f32 %v1045, %v1418
        %v1435 = vmul.f32 %v1045, %v1419
        %v1436 = vmul.f32 %v1045, %v1420
        %v1437 = vmul.f32 %v1051, %v1417
        %v1438 = vmul.f32 %v1051, %v1418
        %v1439 = vmul.f32 %v1051, %v1419
        %v1440 = vmul.f32 %v1051, %v1420
        %v1441 = vmul.f32 %v1057, %v1417
        %v1442 = vmul.f32 %v1057, %v1418
        %v1443 = vmul.f32 %v1057, %v1419
        %v1444 = vmul.f32 %v1057, %v1420
        %v1445 = vmul.f32 %v1063, %v1417
        %v1446 = vmul.f32 %v1063, %v1418
        %v1447 = vmul.f32 %v1063, %v1419
        %v1448 = vmul.f32 %v1063, %v1420
        %v1449 = vmul.f32 %v1069, %v1417
        %v1450 = vmul.f32 %v1069, %v1418
        %v1451 = vmul.f32 %v1069, %v1419
        %v1452 = vmul.f32 %v1069, %v1420
        %v1453 = vmul.f32 %v1075, %v1417
        %v1454 = vmul.f32 %v1075, %v1418
        %v1455 = vmul.f32 %v1075, %v1419
        %v1456 = vmul.f32 %v1075, %v1420
        %v1457 = vmul.f32 %v1081, %v1417
        %v1458 = vmul.f32 %v1081, %v1418
        %v1459 = vmul.f32 %v1081, %v1419
        %v1460 = vmul.f32 %v1081, %v1420
        %v1461 = vmul.f32 %v1087, %v1417
        %v1462 = vmul.f32 %v1087, %v1418
        %v1463 = vmul.f32 %v1087, %v1419
        %v1464 = vmul.f32 %v1087, %v1420
        %v1465 = vmul.f32 %v1093, %v1417
        %v1466 = vmul.f32 %v1093, %v1418
        %v1467 = vmul.f32 %v1093, %v1419
        %v1468 = vmul.f32 %v1093, %v1420
        %v1469 = vmul.f32 %v1099, %v1417
        %v1470 = vmul.f32 %v1099, %v1418
        %v1471 = vmul.f32 %v1099, %v1419
        %v1472 = vmul.f32 %v1099, %v1420
        %v1473 = vmul.f32 %v1105, %v1417
        %v1474 = vmul.f32 %v1105, %v1418
        %v1475 = vmul.f32 %v1105, %v1419
        %v1476 = vmul.f32 %v1105, %v1420
        %v1477 = vmul.f32 %v1111, %v1417
        %v1478 = vmul.f32 %v1111, %v1418
        %v1479 = vmul.f32 %v1111, %v1419
        %v1480 = vmul.f32 %v1111, %v1420
        %v1481 = vmul.f32 %v1117, %v1417
        %v1482 = vmul.f32 %v1117, %v1418
        %v1483 = vmul.f32 %v1117, %v1419
        %v1484 = vmul.f32 %v1117, %v1420
        %v1485 = vmul.f32 %v1124, %v1417
        %v1486 = vmul.f32 %v1124, %v1418
        %v1487 = vmul.f32 %v1124, %v1419
        %v1488 = vmul.f32 %v1124, %v1420
        %v1489 = vmul.f32 %v1130, %v1417
        %v1490 = vmul.f32 %v1130, %v1418
        %v1491 = vmul.f32 %v1130, %v1419
        %v1492 = vmul.f32 %v1130, %v1420
        %v1493 = vmul.f32 %v1136, %v1417
        %v1494 = vmul.f32 %v1136, %v1418
        %v1495 = vmul.f32 %v1136, %v1419
        %v1496 = vmul.f32 %v1136, %v1420
        %v1497 = vmul.f32 %v1142, %v1417
        %v1498 = vmul.f32 %v1142, %v1418
        %v1499 = vmul.f32 %v1142, %v1419
        %v1500 = vmul.f32 %v1142, %v1420
        %v1501 = vmul.f32 %v1148, %v1417
        %v1502 = vmul.f32 %v1148, %v1418
        %v1503 = vmul.f32 %v1148, %v1419
        %v1504 = vmul.f32 %v1148, %v1420
        %v1505 = vmul.f32 %v1154, %v1417
        %v1506 = vmul.f32 %v1154, %v1418
        %v1507 = vmul.f32 %v1154, %v1419
        %v1508 = vmul.f32 %v1154, %v1420
        %v1509 = vmul.f32 %v1160, %v1417
        %v1510 = vmul.f32 %v1160, %v1418
        %v1511 = vmul.f32 %v1160, %v1419
        %v1512 = vmul.f32 %v1160, %v1420
        %v1513 = vmul.f32 %v1166, %v1417
        %v1514 = vmul.f32 %v1166, %v1418
        %v1515 = vmul.f32 %v1166, %v1419
        %v1516 = vmul.f32 %v1166, %v1420
        %v1517 = vmul.f32 %v1172, %v1417
        %v1518 = vmul.f32 %v1172, %v1418
        %v1519 = vmul.f32 %v1172, %v1419
        %v1520 = vmul.f32 %v1172, %v1420
        %v1521 = vmul.f32 %v1178, %v1417
        %v1522 = vmul.f32 %v1178, %v1418
        %v1523 = vmul.f32 %v1178, %v1419
        %v1524 = vmul.f32 %v1178, %v1420
        %v1525 = vmul.f32 %v1184, %v1417
        %v1526 = vmul.f32 %v1184, %v1418
        %v1527 = vmul.f32 %v1184, %v1419
        %v1528 = vmul.f32 %v1184, %v1420
        %v1529 = vmul.f32 %v1190, %v1417
        %v1530 = vmul.f32 %v1190, %v1418
        %v1531 = vmul.f32 %v1190, %v1419
        %v1532 = vmul.f32 %v1190, %v1420
        %v1533 = vmul.f32 %v1196, %v1417
        %v1534 = vmul.f32 %v1196, %v1418
        %v1535 = vmul.f32 %v1196, %v1419
        %v1536 = vmul.f32 %v1196, %v1420
        %v1537 = vmul.f32 %v1202, %v1417
        %v1538 = vmul.f32 %v1202, %v1418
        %v1539 = vmul.f32 %v1202, %v1419
        %v1540 = vmul.f32 %v1202, %v1420
        %v1541 = vmul.f32 %v1208, %v1417
        %v1542 = vmul.f32 %v1208, %v1418
        %v1543 = vmul.f32 %v1208, %v1419
        %v1544 = vmul.f32 %v1208, %v1420
        %v1545 = vmul.f32 %v1214, %v1417
        %v1546 = vmul.f32 %v1214, %v1418
        %v1547 = vmul.f32 %v1214, %v1419
        %v1548 = vmul.f32 %v1214, %v1420
        %v1549 = vmul.f32 %v1221, %v1417
        %v1550 = vmul.f32 %v1221, %v1418
        %v1551 = vmul.f32 %v1221, %v1419
        %v1552 = vmul.f32 %v1221, %v1420
        %v1553 = vmul.f32 %v1227, %v1417
        %v1554 = vmul.f32 %v1227, %v1418
        %v1555 = vmul.f32 %v1227, %v1419
        %v1556 = vmul.f32 %v1227, %v1420
        %v1557 = vmul.f32 %v1233, %v1417
        %v1558 = vmul.f32 %v1233, %v1418
        %v1559 = vmul.f32 %v1233, %v1419
        %v1560 = vmul.f32 %v1233, %v1420
        %v1561 = vmul.f32 %v1239, %v1417
        %v1562 = vmul.f32 %v1239, %v1418
        %v1563 = vmul.f32 %v1239, %v1419
        %v1564 = vmul.f32 %v1239, %v1420
        %v1565 = vmul.f32 %v1245, %v1417
        %v1566 = vmul.f32 %v1245, %v1418
        %v1567 = vmul.f32 %v1245, %v1419
        %v1568 = vmul.f32 %v1245, %v1420
        %v1569 = vmul.f32 %v1251, %v1417
        %v1570 = vmul.f32 %v1251, %v1418
        %v1571 = vmul.f32 %v1251, %v1419
        %v1572 = vmul.f32 %v1251, %v1420
        %v1573 = vmul.f32 %v1257, %v1417
        %v1574 = vmul.f32 %v1257, %v1418
        %v1575 = vmul.f32 %v1257, %v1419
        %v1576 = vmul.f32 %v1257, %v1420
        %v1577 = vmul.f32 %v1263, %v1417
        %v1578 = vmul.f32 %v1263, %v1418
        %v1579 = vmul.f32 %v1263, %v1419
        %v1580 = vmul.f32 %v1263, %v1420
        %v1581 = vmul.f32 %v1269, %v1417
        %v1582 = vmul.f32 %v1269, %v1418
        %v1583 = vmul.f32 %v1269, %v1419
        %v1584 = vmul.f32 %v1269, %v1420
        %v1585 = vmul.f32 %v1275, %v1417
        %v1586 = vmul.f32 %v1275, %v1418
        %v1587 = vmul.f32 %v1275, %v1419
        %v1588 = vmul.f32 %v1275, %v1420
        %v1589 = vmul.f32 %v1281, %v1417
        %v1590 = vmul.f32 %v1281, %v1418
        %v1591 = vmul.f32 %v1281, %v1419
        %v1592 = vmul.f32 %v1281, %v1420
        %v1593 = vmul.f32 %v1287, %v1417
        %v1594 = vmul.f32 %v1287, %v1418
        %v1595 = vmul.f32 %v1287, %v1419
        %v1596 = vmul.f32 %v1287, %v1420
        %v1597 = vmul.f32 %v1293, %v1417
        %v1598 = vmul.f32 %v1293, %v1418
        %v1599 = vmul.f32 %v1293, %v1419
        %v1600 = vmul.f32 %v1293, %v1420
        %v1601 = vmul.f32 %v1299, %v1417
        %v1602 = vmul.f32 %v1299, %v1418
        %v1603 = vmul.f32 %v1299, %v1419
        %v1604 = vmul.f32 %v1299, %v1420
        %v1605 = vmul.f32 %v1305, %v1417
        %v1606 = vmul.f32 %v1305, %v1418
        %v1607 = vmul.f32 %v1305, %v1419
        %v1608 = vmul.f32 %v1305, %v1420
        %v1609 = vmul.f32 %v1311, %v1417
        %v1610 = vmul.f32 %v1311, %v1418
        %v1611 = vmul.f32 %v1311, %v1419
        %v1612 = vmul.f32 %v1311, %v1420
        %v1613 = vmul.f32 %v1318, %v1417
        %v1614 = vmul.f32 %v1318, %v1418
        %v1615 = vmul.f32 %v1318, %v1419
        %v1616 = vmul.f32 %v1318, %v1420
        %v1617 = vmul.f32 %v1324, %v1417
        %v1618 = vmul.f32 %v1324, %v1418
        %v1619 = vmul.f32 %v1324, %v1419
        %v1620 = vmul.f32 %v1324, %v1420
        %v1621 = vmul.f32 %v1330, %v1417
        %v1622 = vmul.f32 %v1330, %v1418
        %v1623 = vmul.f32 %v1330, %v1419
        %v1624 = vmul.f32 %v1330, %v1420
        %v1625 = vmul.f32 %v1336, %v1417
        %v1626 = vmul.f32 %v1336, %v1418
        %v1627 = vmul.f32 %v1336, %v1419
        %v1628 = vmul.f32 %v1336, %v1420
        %v1629 = vmul.f32 %v1342, %v1417
        %v1630 = vmul.f32 %v1342, %v1418
        %v1631 = vmul.f32 %v1342, %v1419
        %v1632 = vmul.f32 %v1342, %v1420
        %v1633 = vmul.f32 %v1348, %v1417
        %v1634 = vmul.f32 %v1348, %v1418
        %v1635 = vmul.f32 %v1348, %v1419
        %v1636 = vmul.f32 %v1348, %v1420
        %v1637 = vmul.f32 %v1354, %v1417
        %v1638 = vmul.f32 %v1354, %v1418
        %v1639 = vmul.f32 %v1354, %v1419
        %v1640 = vmul.f32 %v1354, %v1420
        %v1641 = vmul.f32 %v1360, %v1417
        %v1642 = vmul.f32 %v1360, %v1418
        %v1643 = vmul.f32 %v1360, %v1419
        %v1644 = vmul.f32 %v1360, %v1420
        %v1645 = vmul.f32 %v1366, %v1417
        %v1646 = vmul.f32 %v1366, %v1418
        %v1647 = vmul.f32 %v1366, %v1419
        %v1648 = vmul.f32 %v1366, %v1420
        %v1649 = vmul.f32 %v1372, %v1417
        %v1650 = vmul.f32 %v1372, %v1418
        %v1651 = vmul.f32 %v1372, %v1419
        %v1652 = vmul.f32 %v1372, %v1420
        %v1653 = vmul.f32 %v1378, %v1417
        %v1654 = vmul.f32 %v1378, %v1418
        %v1655 = vmul.f32 %v1378, %v1419
        %v1656 = vmul.f32 %v1378, %v1420
        %v1657 = vmul.f32 %v1384, %v1417
        %v1658 = vmul.f32 %v1384, %v1418
        %v1659 = vmul.f32 %v1384, %v1419
        %v1660 = vmul.f32 %v1384, %v1420
        %v1661 = vmul.f32 %v1390, %v1417
        %v1662 = vmul.f32 %v1390, %v1418
        %v1663 = vmul.f32 %v1390, %v1419
        %v1664 = vmul.f32 %v1390, %v1420
        %v1665 = vmul.f32 %v1396, %v1417
        %v1666 = vmul.f32 %v1396, %v1418
        %v1667 = vmul.f32 %v1396, %v1419
        %v1668 = vmul.f32 %v1396, %v1420
        %v1669 = vmul.f32 %v1402, %v1417
        %v1670 = vmul.f32 %v1402, %v1418
        %v1671 = vmul.f32 %v1402, %v1419
        %v1672 = vmul.f32 %v1402, %v1420
        %v1673 = vmul.f32 %v1408, %v1417
        %v1674 = vmul.f32 %v1408, %v1418
        %v1675 = vmul.f32 %v1408, %v1419
        %v1676 = vmul.f32 %v1408, %v1420
        %v1677 = vadd.f32 %v757, %v1421
        %v1678 = vadd.f32 %v758, %v1422
        %v1679 = vadd.f32 %v759, %v1423
        %v1680 = vadd.f32 %v760, %v1424
        %v1681 = vadd.f32 %v761, %v1425
        %v1682 = vadd.f32 %v762, %v1426
        %v1683 = vadd.f32 %v763, %v1427
        %v1684 = vadd.f32 %v764, %v1428
        %v1685 = vadd.f32 %v765, %v1429
        %v1686 = vadd.f32 %v766, %v1430
        %v1687 = vadd.f32 %v767, %v1431
        %v1688 = vadd.f32 %v768, %v1432
        %v1689 = vadd.f32 %v769, %v1433
        %v1690 = vadd.f32 %v770, %v1434
        %v1691 = vadd.f32 %v771, %v1435
        %v1692 = vadd.f32 %v772, %v1436
        %v1693 = vadd.f32 %v773, %v1437
        %v1694 = vadd.f32 %v774, %v1438
        %v1695 = vadd.f32 %v775, %v1439
        %v1696 = vadd.f32 %v776, %v1440
        %v1697 = vadd.f32 %v777, %v1441
        %v1698 = vadd.f32 %v778, %v1442
        %v1699 = vadd.f32 %v779, %v1443
        %v1700 = vadd.f32 %v780, %v1444
        %v1701 = vadd.f32 %v781, %v1445
        %v1702 = vadd.f32 %v782, %v1446
        %v1703 = vadd.f32 %v783, %v1447
        %v1704 = vadd.f32 %v784, %v1448
        %v1705 = vadd.f32 %v785, %v1449
        %v1706 = vadd.f32 %v786, %v1450
        %v1707 = vadd.f32 %v787, %v1451
        %v1708 = vadd.f32 %v788, %v1452
        %v1709 = vadd.f32 %v789, %v1453
        %v1710 = vadd.f32 %v790, %v1454
        %v1711 = vadd.f32 %v791, %v1455
        %v1712 = vadd.f32 %v792, %v1456
        %v1713 = vadd.f32 %v793, %v1457
        %v1714 = vadd.f32 %v794, %v1458
        %v1715 = vadd.f32 %v795, %v1459
        %v1716 = vadd.f32 %v796, %v1460
        %v1717 = vadd.f32 %v797, %v1461
        %v1718 = vadd.f32 %v798, %v1462
        %v1719 = vadd.f32 %v799, %v1463
        %v1720 = vadd.f32 %v800, %v1464
        %v1721 = vadd.f32 %v801, %v1465
        %v1722 = vadd.f32 %v802, %v1466
        %v1723 = vadd.f32 %v803, %v1467
        %v1724 = vadd.f32 %v804, %v1468
        %v1725 = vadd.f32 %v805, %v1469
        %v1726 = vadd.f32 %v806, %v1470
        %v1727 = vadd.f32 %v807, %v1471
        %v1728 = vadd.f32 %v808, %v1472
        %v1729 = vadd.f32 %v809, %v1473
        %v1730 = vadd.f32 %v810, %v1474
        %v1731 = vadd.f32 %v811, %v1475
        %v1732 = vadd.f32 %v812, %v1476
        %v1733 = vadd.f32 %v813, %v1477
        %v1734 = vadd.f32 %v814, %v1478
        %v1735 = vadd.f32 %v815, %v1479
        %v1736 = vadd.f32 %v816, %v1480
        %v1737 = vadd.f32 %v817, %v1481
        %v1738 = vadd.f32 %v818, %v1482
        %v1739 = vadd.f32 %v819, %v1483
        %v1740 = vadd.f32 %v820, %v1484
        %v1741 = vadd.f32 %v821, %v1485
        %v1742 = vadd.f32 %v822, %v1486
        %v1743 = vadd.f32 %v823, %v1487
        %v1744 = vadd.f32 %v824, %v1488
        %v1745 = vadd.f32 %v825, %v1489
        %v1746 = vadd.f32 %v826, %v1490
        %v1747 = vadd.f32 %v827, %v1491
        %v1748 = vadd.f32 %v828, %v1492
        %v1749 = vadd.f32 %v829, %v1493
        %v1750 = vadd.f32 %v830, %v1494
        %v1751 = vadd.f32 %v831, %v1495
        %v1752 = vadd.f32 %v832, %v1496
        %v1753 = vadd.f32 %v833, %v1497
        %v1754 = vadd.f32 %v834, %v1498
        %v1755 = vadd.f32 %v835, %v1499
        %v1756 = vadd.f32 %v836, %v1500
        %v1757 = vadd.f32 %v837, %v1501
        %v1758 = vadd.f32 %v838, %v1502
        %v1759 = vadd.f32 %v839, %v1503
        %v1760 = vadd.f32 %v840, %v1504
        %v1761 = vadd.f32 %v841, %v1505
        %v1762 = vadd.f32 %v842, %v1506
        %v1763 = vadd.f32 %v843, %v1507
        %v1764 = vadd.f32 %v844, %v1508
        %v1765 = vadd.f32 %v845, %v1509
        %v1766 = vadd.f32 %v846, %v1510
        %v1767 = vadd.f32 %v847, %v1511
        %v1768 = vadd.f32 %v848, %v1512
        %v1769 = vadd.f32 %v849, %v1513
        %v1770 = vadd.f32 %v850, %v1514
        %v1771 = vadd.f32 %v851, %v1515
        %v1772 = vadd.f32 %v852, %v1516
        %v1773 = vadd.f32 %v853, %v1517
        %v1774 = vadd.f32 %v854, %v1518
        %v1775 = vadd.f32 %v855, %v1519
        %v1776 = vadd.f32 %v856, %v1520
        %v1777 = vadd.f32 %v857, %v1521
        %v1778 = vadd.f32 %v858, %v1522
        %v1779 = vadd.f32 %v859, %v1523
        %v1780 = vadd.f32 %v860, %v1524
        %v1781 = vadd.f32 %v861, %v1525
        %v1782 = vadd.f32 %v862, %v1526
        %v1783 = vadd.f32 %v863, %v1527
        %v1784 = vadd.f32 %v864, %v1528
        %v1785 = vadd.f32 %v865, %v1529
        %v1786 = vadd.f32 %v866, %v1530
        %v1787 = vadd.f32 %v867, %v1531
        %v1788 = vadd.f32 %v868, %v1532
        %v1789 = vadd.f32 %v869, %v1533
        %v1790 = vadd.f32 %v870, %v1534
        %v1791 = vadd.f32 %v871, %v1535
        %v1792 = vadd.f32 %v872, %v1536
        %v1793 = vadd.f32 %v873, %v1537
        %v1794 = vadd.f32 %v874, %v1538
        %v1795 = vadd.f32 %v875, %v1539
        %v1796 = vadd.f32 %v876, %v1540
        %v1797 = vadd.f32 %v877, %v1541
        %v1798 = vadd.f32 %v878, %v1542
        %v1799 = vadd.f32 %v879, %v1543
        %v1800 = vadd.f32 %v880, %v1544
        %v1801 = vadd.f32 %v881, %v1545
        %v1802 = vadd.f32 %v882, %v1546
        %v1803 = vadd.f32 %v883, %v1547
        %v1804 = vadd.f32 %v884, %v1548
        %v1805 = vadd.f32 %v885, %v1549
        %v1806 = vadd.f32 %v886, %v1550
        %v1807 = vadd.f32 %v887, %v1551
        %v1808 = vadd.f32 %v888, %v1552
        %v1809 = vadd.f32 %v889, %v1553
        %v1810 = vadd.f32 %v890, %v1554
        %v1811 = vadd.f32 %v891, %v1555
        %v1812 = vadd.f32 %v892, %v1556
        %v1813 = vadd.f32 %v893, %v1557
        %v1814 = vadd.f32 %v894, %v1558
        %v1815 = vadd.f32 %v895, %v1559
        %v1816 = vadd.f32 %v896, %v1560
        %v1817 = vadd.f32 %v897, %v1561
        %v1818 = vadd.f32 %v898, %v1562
        %v1819 = vadd.f32 %v899, %v1563
        %v1820 = vadd.f32 %v900, %v1564
        %v1821 = vadd.f32 %v901, %v1565
        %v1822 = vadd.f32 %v902, %v1566
        %v1823 = vadd.f32 %v903, %v1567
        %v1824 = vadd.f32 %v904, %v1568
        %v1825 = vadd.f32 %v905, %v1569
        %v1826 = vadd.f32 %v906, %v1570
        %v1827 = vadd.f32 %v907, %v1571
        %v1828 = vadd.f32 %v908, %v1572
        %v1829 = vadd.f32 %v909, %v1573
        %v1830 = vadd.f32 %v910, %v1574
        %v1831 = vadd.f32 %v911, %v1575
        %v1832 = vadd.f32 %v912, %v1576
        %v1833 = vadd.f32 %v913, %v1577
        %v1834 = vadd.f32 %v914, %v1578
        %v1835 = vadd.f32 %v915, %v1579
        %v1836 = vadd.f32 %v916, %v1580
        %v1837 = vadd.f32 %v917, %v1581
        %v1838 = vadd.f32 %v918, %v1582
        %v1839 = vadd.f32 %v919, %v1583
        %v1840 = vadd.f32 %v920, %v1584
        %v1841 = vadd.f32 %v921, %v1585
        %v1842 = vadd.f32 %v922, %v1586
        %v1843 = vadd.f32 %v923, %v1587
        %v1844 = vadd.f32 %v924, %v1588
        %v1845 = vadd.f32 %v925, %v1589
        %v1846 = vadd.f32 %v926, %v1590
        %v1847 = vadd.f32 %v927, %v1591
        %v1848 = vadd.f32 %v928, %v1592
        %v1849 = vadd.f32 %v929, %v1593
        %v1850 = vadd.f32 %v930, %v1594
        %v1851 = vadd.f32 %v931, %v1595
        %v1852 = vadd.f32 %v932, %v1596
        %v1853 = vadd.f32 %v933, %v1597
        %v1854 = vadd.f32 %v934, %v1598
        %v1855 = vadd.f32 %v935, %v1599
        %v1856 = vadd.f32 %v936, %v1600
        %v1857 = vadd.f32 %v937, %v1601
        %v1858 = vadd.f32 %v938, %v1602
        %v1859 = vadd.f32 %v939, %v1603
        %v1860 = vadd.f32 %v940, %v1604
        %v1861 = vadd.f32 %v941, %v1605
        %v1862 = vadd.f32 %v942, %v1606
        %v1863 = vadd.f32 %v943, %v1607
        %v1864 = vadd.f32 %v944, %v1608
        %v1865 = vadd.f32 %v945, %v1609
        %v1866 = vadd.f32 %v946, %v1610
        %v1867 = vadd.f32 %v947, %v1611
        %v1868 = vadd.f32 %v948, %v1612
        %v1869 = vadd.f32 %v949, %v1613
        %v1870 = vadd.f32 %v950, %v1614
        %v1871 = vadd.f32 %v951, %v1615
        %v1872 = vadd.f32 %v952, %v1616
        %v1873 = vadd.f32 %v953, %v1617
        %v1874 = vadd.f32 %v954, %v1618
        %v1875 = vadd.f32 %v955, %v1619
        %v1876 = vadd.f32 %v956, %v1620
        %v1877 = vadd.f32 %v957, %v1621
        %v1878 = vadd.f32 %v958, %v1622
        %v1879 = vadd.f32 %v959, %v1623
        %v1880 = vadd.f32 %v960, %v1624
        %v1881 = vadd.f32 %v961, %v1625
        %v1882 = vadd.f32 %v962, %v1626
        %v1883 = vadd.f32 %v963, %v1627
        %v1884 = vadd.f32 %v964, %v1628
        %v1885 = vadd.f32 %v965, %v1629
        %v1886 = vadd.f32 %v966, %v1630
        %v1887 = vadd.f32 %v967, %v1631
        %v1888 = vadd.f32 %v968, %v1632
        %v1889 = vadd.f32 %v969, %v1633
        %v1890 = vadd.f32 %v970, %v1634
        %v1891 = vadd.f32 %v971, %v1635
        %v1892 = vadd.f32 %v972, %v1636
        %v1893 = vadd.f32 %v973, %v1637
        %v1894 = vadd.f32 %v974, %v1638
        %v1895 = vadd.f32 %v975, %v1639
        %v1896 = vadd.f32 %v976, %v1640
        %v1897 = vadd.f32 %v977, %v1641
        %v1898 = vadd.f32 %v978, %v1642
        %v1899 = vadd.f32 %v979, %v1643
        %v1900 = vadd.f32 %v980, %v1644
        %v1901 = vadd.f32 %v981, %v1645
        %v1902 = vadd.f32 %v982, %v1646
        %v1903 = vadd.f32 %v983, %v1647
        %v1904 = vadd.f32 %v984, %v1648
        %v1905 = vadd.f32 %v985, %v1649
        %v1906 = vadd.f32 %v986, %v1650
        %v1907 = vadd.f32 %v987, %v1651
        %v1908 = vadd.f32 %v988, %v1652
        %v1909 = vadd.f32 %v989, %v1653
        %v1910 = vadd.f32 %v990, %v1654
        %v1911 = vadd.f32 %v991, %v1655
        %v1912 = vadd.f32 %v992, %v1656
        %v1913 = vadd.f32 %v993, %v1657
        %v1914 = vadd.f32 %v994, %v1658
        %v1915 = vadd.f32 %v995, %v1659
        %v1916 = vadd.f32 %v996, %v1660
        %v1917 = vadd.f32 %v997, %v1661
        %v1918 = vadd.f32 %v998, %v1662
        %v1919 = vadd.f32 %v999, %v1663
        %v1920 = vadd.f32 %v1000, %v1664
        %v1921 = vadd.f32 %v1001, %v1665
        %v1922 = vadd.f32 %v1002, %v1666
        %v1923 = vadd.f32 %v1003, %v1667
        %v1924 = vadd.f32 %v1004, %v1668
        %v1925 = vadd.f32 %v1005, %v1669
        %v1926 = vadd.f32 %v1006, %v1670
        %v1927 = vadd.f32 %v1007, %v1671
        %v1928 = vadd.f32 %v1008, %v1672
        %v1929 = vadd.f32 %v1009, %v1673
        %v1930 = vadd.f32 %v1010, %v1674
        %v1931 = vadd.f32 %v1011, %v1675
        %v1932 = vadd.f32 %v1012, %v1676
        %v1933 = vperm.slane %v341, 2
        %v1934 = vperm.slane %v341, 6
        %v1935 = vperm.slane %v342, 2
        %v1936 = vperm.slane %v342, 6
        %v1941 = vperm.slane %v1933, 2
        %v1942 = vlaneseq
        %v1943 = vshrl.u32 %v1942, 7
        %1945 = vset.pattern.permute.xlu0 %v1943
        %1946 = vperm.xlu0 %1945, %v1941
        %v1947 = vpop.permute.xlu0 %1946
        %v1948 = vlaneseq
        %v1949 = vshrl.u32 %v1948, 7
        %v1950 = vadd.s32 %v1949, 8
        %1951 = vset.pattern.permute.xlu0 %v1950
        %1952 = vperm.xlu0 %1951, %v1941
        %v1953 = vpop.permute.xlu0 %1952
        %v1954 = vlaneseq
        %v1955 = vshrl.u32 %v1954, 7
        %v1956 = vadd.s32 %v1955, 16
        %1957 = vset.pattern.permute.xlu0 %v1956
        %1958 = vperm.xlu0 %1957, %v1941
        %v1959 = vpop.permute.xlu0 %1958
        %v1960 = vlaneseq
        %v1961 = vshrl.u32 %v1960, 7
        %v1962 = vadd.s32 %v1961, 24
        %1963 = vset.pattern.permute.xlu0 %v1962
        %1964 = vperm.xlu0 %1963, %v1941
        %v1965 = vpop.permute.xlu0 %1964
        %v1966 = vlaneseq
        %v1967 = vshrl.u32 %v1966, 7
        %v1968 = vadd.s32 %v1967, 32
        %1969 = vset.pattern.permute.xlu0 %v1968
        %1970 = vperm.xlu0 %1969, %v1941
        %v1971 = vpop.permute.xlu0 %1970
        %v1972 = vlaneseq
        %v1973 = vshrl.u32 %v1972, 7
        %v1974 = vadd.s32 %v1973, 40
        %1975 = vset.pattern.permute.xlu0 %v1974
        %1976 = vperm.xlu0 %1975, %v1941
        %v1977 = vpop.permute.xlu0 %1976
        %v1978 = vlaneseq
        %v1979 = vshrl.u32 %v1978, 7
        %v1980 = vadd.s32 %v1979, 48
        %1981 = vset.pattern.permute.xlu0 %v1980
        %1982 = vperm.xlu0 %1981, %v1941
        %v1983 = vpop.permute.xlu0 %1982
        %v1984 = vlaneseq
        %v1985 = vshrl.u32 %v1984, 7
        %v1986 = vadd.s32 %v1985, 56
        %1987 = vset.pattern.permute.xlu0 %v1986
        %1988 = vperm.xlu0 %1987, %v1941
        %v1989 = vpop.permute.xlu0 %1988
        %v1990 = vlaneseq
        %v1991 = vshrl.u32 %v1990, 7
        %v1992 = vadd.s32 %v1991, 64
        %1993 = vset.pattern.permute.xlu0 %v1992
        %1994 = vperm.xlu0 %1993, %v1941
        %v1995 = vpop.permute.xlu0 %1994
        %v1996 = vlaneseq
        %v1997 = vshrl.u32 %v1996, 7
        %v1998 = vadd.s32 %v1997, 72
        %1999 = vset.pattern.permute.xlu0 %v1998
        %2000 = vperm.xlu0 %1999, %v1941
        %v2001 = vpop.permute.xlu0 %2000
        %v2002 = vlaneseq
        %v2003 = vshrl.u32 %v2002, 7
        %v2004 = vadd.s32 %v2003, 80
        %2005 = vset.pattern.permute.xlu0 %v2004
        %2006 = vperm.xlu0 %2005, %v1941
        %v2007 = vpop.permute.xlu0 %2006
        %v2008 = vlaneseq
        %v2009 = vshrl.u32 %v2008, 7
        %v2010 = vadd.s32 %v2009, 88
        %2011 = vset.pattern.permute.xlu0 %v2010
        %2012 = vperm.xlu0 %2011, %v1941
        %v2013 = vpop.permute.xlu0 %2012
        %v2014 = vlaneseq
        %v2015 = vshrl.u32 %v2014, 7
        %v2016 = vadd.s32 %v2015, 96
        %2017 = vset.pattern.permute.xlu0 %v2016
        %2018 = vperm.xlu0 %2017, %v1941
        %v2019 = vpop.permute.xlu0 %2018
        %v2020 = vlaneseq
        %v2021 = vshrl.u32 %v2020, 7
        %v2022 = vadd.s32 %v2021, 104
        %2023 = vset.pattern.permute.xlu0 %v2022
        %2024 = vperm.xlu0 %2023, %v1941
        %v2025 = vpop.permute.xlu0 %2024
        %v2026 = vlaneseq
        %v2027 = vshrl.u32 %v2026, 7
        %v2028 = vadd.s32 %v2027, 112
        %2029 = vset.pattern.permute.xlu0 %v2028
        %2030 = vperm.xlu0 %2029, %v1941
        %v2031 = vpop.permute.xlu0 %2030
        %v2032 = vlaneseq
        %v2033 = vshrl.u32 %v2032, 7
        %v2034 = vadd.s32 %v2033, 120
        %2035 = vset.pattern.permute.xlu0 %v2034
        %2036 = vperm.xlu0 %2035, %v1941
        %v2037 = vpop.permute.xlu0 %2036
        %v2038 = vperm.slane %v1934, 2
        %v2039 = vlaneseq
        %v2040 = vshrl.u32 %v2039, 7
        %2042 = vset.pattern.permute.xlu0 %v2040
        %2043 = vperm.xlu0 %2042, %v2038
        %v2044 = vpop.permute.xlu0 %2043
        %v2045 = vlaneseq
        %v2046 = vshrl.u32 %v2045, 7
        %v2047 = vadd.s32 %v2046, 8
        %2048 = vset.pattern.permute.xlu0 %v2047
        %2049 = vperm.xlu0 %2048, %v2038
        %v2050 = vpop.permute.xlu0 %2049
        %v2051 = vlaneseq
        %v2052 = vshrl.u32 %v2051, 7
        %v2053 = vadd.s32 %v2052, 16
        %2054 = vset.pattern.permute.xlu0 %v2053
        %2055 = vperm.xlu0 %2054, %v2038
        %v2056 = vpop.permute.xlu0 %2055
        %v2057 = vlaneseq
        %v2058 = vshrl.u32 %v2057, 7
        %v2059 = vadd.s32 %v2058, 24
        %2060 = vset.pattern.permute.xlu0 %v2059
        %2061 = vperm.xlu0 %2060, %v2038
        %v2062 = vpop.permute.xlu0 %2061
        %v2063 = vlaneseq
        %v2064 = vshrl.u32 %v2063, 7
        %v2065 = vadd.s32 %v2064, 32
        %2066 = vset.pattern.permute.xlu0 %v2065
        %2067 = vperm.xlu0 %2066, %v2038
        %v2068 = vpop.permute.xlu0 %2067
        %v2069 = vlaneseq
        %v2070 = vshrl.u32 %v2069, 7
        %v2071 = vadd.s32 %v2070, 40
        %2072 = vset.pattern.permute.xlu0 %v2071
        %2073 = vperm.xlu0 %2072, %v2038
        %v2074 = vpop.permute.xlu0 %2073
        %v2075 = vlaneseq
        %v2076 = vshrl.u32 %v2075, 7
        %v2077 = vadd.s32 %v2076, 48
        %2078 = vset.pattern.permute.xlu0 %v2077
        %2079 = vperm.xlu0 %2078, %v2038
        %v2080 = vpop.permute.xlu0 %2079
        %v2081 = vlaneseq
        %v2082 = vshrl.u32 %v2081, 7
        %v2083 = vadd.s32 %v2082, 56
        %2084 = vset.pattern.permute.xlu0 %v2083
        %2085 = vperm.xlu0 %2084, %v2038
        %v2086 = vpop.permute.xlu0 %2085
        %v2087 = vlaneseq
        %v2088 = vshrl.u32 %v2087, 7
        %v2089 = vadd.s32 %v2088, 64
        %2090 = vset.pattern.permute.xlu0 %v2089
        %2091 = vperm.xlu0 %2090, %v2038
        %v2092 = vpop.permute.xlu0 %2091
        %v2093 = vlaneseq
        %v2094 = vshrl.u32 %v2093, 7
        %v2095 = vadd.s32 %v2094, 72
        %2096 = vset.pattern.permute.xlu0 %v2095
        %2097 = vperm.xlu0 %2096, %v2038
        %v2098 = vpop.permute.xlu0 %2097
        %v2099 = vlaneseq
        %v2100 = vshrl.u32 %v2099, 7
        %v2101 = vadd.s32 %v2100, 80
        %2102 = vset.pattern.permute.xlu0 %v2101
        %2103 = vperm.xlu0 %2102, %v2038
        %v2104 = vpop.permute.xlu0 %2103
        %v2105 = vlaneseq
        %v2106 = vshrl.u32 %v2105, 7
        %v2107 = vadd.s32 %v2106, 88
        %2108 = vset.pattern.permute.xlu0 %v2107
        %2109 = vperm.xlu0 %2108, %v2038
        %v2110 = vpop.permute.xlu0 %2109
        %v2111 = vlaneseq
        %v2112 = vshrl.u32 %v2111, 7
        %v2113 = vadd.s32 %v2112, 96
        %2114 = vset.pattern.permute.xlu0 %v2113
        %2115 = vperm.xlu0 %2114, %v2038
        %v2116 = vpop.permute.xlu0 %2115
        %v2117 = vlaneseq
        %v2118 = vshrl.u32 %v2117, 7
        %v2119 = vadd.s32 %v2118, 104
        %2120 = vset.pattern.permute.xlu0 %v2119
        %2121 = vperm.xlu0 %2120, %v2038
        %v2122 = vpop.permute.xlu0 %2121
        %v2123 = vlaneseq
        %v2124 = vshrl.u32 %v2123, 7
        %v2125 = vadd.s32 %v2124, 112
        %2126 = vset.pattern.permute.xlu0 %v2125
        %2127 = vperm.xlu0 %2126, %v2038
        %v2128 = vpop.permute.xlu0 %2127
        %v2129 = vlaneseq
        %v2130 = vshrl.u32 %v2129, 7
        %v2131 = vadd.s32 %v2130, 120
        %2132 = vset.pattern.permute.xlu0 %v2131
        %2133 = vperm.xlu0 %2132, %v2038
        %v2134 = vpop.permute.xlu0 %2133
        %v2135 = vperm.slane %v1935, 2
        %v2136 = vlaneseq
        %v2137 = vshrl.u32 %v2136, 7
        %2139 = vset.pattern.permute.xlu0 %v2137
        %2140 = vperm.xlu0 %2139, %v2135
        %v2141 = vpop.permute.xlu0 %2140
        %v2142 = vlaneseq
        %v2143 = vshrl.u32 %v2142, 7
        %v2144 = vadd.s32 %v2143, 8
        %2145 = vset.pattern.permute.xlu0 %v2144
        %2146 = vperm.xlu0 %2145, %v2135
        %v2147 = vpop.permute.xlu0 %2146
        %v2148 = vlaneseq
        %v2149 = vshrl.u32 %v2148, 7
        %v2150 = vadd.s32 %v2149, 16
        %2151 = vset.pattern.permute.xlu0 %v2150
        %2152 = vperm.xlu0 %2151, %v2135
        %v2153 = vpop.permute.xlu0 %2152
        %v2154 = vlaneseq
        %v2155 = vshrl.u32 %v2154, 7
        %v2156 = vadd.s32 %v2155, 24
        %2157 = vset.pattern.permute.xlu0 %v2156
        %2158 = vperm.xlu0 %2157, %v2135
        %v2159 = vpop.permute.xlu0 %2158
        %v2160 = vlaneseq
        %v2161 = vshrl.u32 %v2160, 7
        %v2162 = vadd.s32 %v2161, 32
        %2163 = vset.pattern.permute.xlu0 %v2162
        %2164 = vperm.xlu0 %2163, %v2135
        %v2165 = vpop.permute.xlu0 %2164
        %v2166 = vlaneseq
        %v2167 = vshrl.u32 %v2166, 7
        %v2168 = vadd.s32 %v2167, 40
        %2169 = vset.pattern.permute.xlu0 %v2168
        %2170 = vperm.xlu0 %2169, %v2135
        %v2171 = vpop.permute.xlu0 %2170
        %v2172 = vlaneseq
        %v2173 = vshrl.u32 %v2172, 7
        %v2174 = vadd.s32 %v2173, 48
        %2175 = vset.pattern.permute.xlu0 %v2174
        %2176 = vperm.xlu0 %2175, %v2135
        %v2177 = vpop.permute.xlu0 %2176
        %v2178 = vlaneseq
        %v2179 = vshrl.u32 %v2178, 7
        %v2180 = vadd.s32 %v2179, 56
        %2181 = vset.pattern.permute.xlu0 %v2180
        %2182 = vperm.xlu0 %2181, %v2135
        %v2183 = vpop.permute.xlu0 %2182
        %v2184 = vlaneseq
        %v2185 = vshrl.u32 %v2184, 7
        %v2186 = vadd.s32 %v2185, 64
        %2187 = vset.pattern.permute.xlu0 %v2186
        %2188 = vperm.xlu0 %2187, %v2135
        %v2189 = vpop.permute.xlu0 %2188
        %v2190 = vlaneseq
        %v2191 = vshrl.u32 %v2190, 7
        %v2192 = vadd.s32 %v2191, 72
        %2193 = vset.pattern.permute.xlu0 %v2192
        %2194 = vperm.xlu0 %2193, %v2135
        %v2195 = vpop.permute.xlu0 %2194
        %v2196 = vlaneseq
        %v2197 = vshrl.u32 %v2196, 7
        %v2198 = vadd.s32 %v2197, 80
        %2199 = vset.pattern.permute.xlu0 %v2198
        %2200 = vperm.xlu0 %2199, %v2135
        %v2201 = vpop.permute.xlu0 %2200
        %v2202 = vlaneseq
        %v2203 = vshrl.u32 %v2202, 7
        %v2204 = vadd.s32 %v2203, 88
        %2205 = vset.pattern.permute.xlu0 %v2204
        %2206 = vperm.xlu0 %2205, %v2135
        %v2207 = vpop.permute.xlu0 %2206
        %v2208 = vlaneseq
        %v2209 = vshrl.u32 %v2208, 7
        %v2210 = vadd.s32 %v2209, 96
        %2211 = vset.pattern.permute.xlu0 %v2210
        %2212 = vperm.xlu0 %2211, %v2135
        %v2213 = vpop.permute.xlu0 %2212
        %v2214 = vlaneseq
        %v2215 = vshrl.u32 %v2214, 7
        %v2216 = vadd.s32 %v2215, 104
        %2217 = vset.pattern.permute.xlu0 %v2216
        %2218 = vperm.xlu0 %2217, %v2135
        %v2219 = vpop.permute.xlu0 %2218
        %v2220 = vlaneseq
        %v2221 = vshrl.u32 %v2220, 7
        %v2222 = vadd.s32 %v2221, 112
        %2223 = vset.pattern.permute.xlu0 %v2222
        %2224 = vperm.xlu0 %2223, %v2135
        %v2225 = vpop.permute.xlu0 %2224
        %v2226 = vlaneseq
        %v2227 = vshrl.u32 %v2226, 7
        %v2228 = vadd.s32 %v2227, 120
        %2229 = vset.pattern.permute.xlu0 %v2228
        %2230 = vperm.xlu0 %2229, %v2135
        %v2231 = vpop.permute.xlu0 %2230
        %v2232 = vperm.slane %v1936, 2
        %v2233 = vlaneseq
        %v2234 = vshrl.u32 %v2233, 7
        %2236 = vset.pattern.permute.xlu0 %v2234
        %2237 = vperm.xlu0 %2236, %v2232
        %v2238 = vpop.permute.xlu0 %2237
        %v2239 = vlaneseq
        %v2240 = vshrl.u32 %v2239, 7
        %v2241 = vadd.s32 %v2240, 8
        %2242 = vset.pattern.permute.xlu0 %v2241
        %2243 = vperm.xlu0 %2242, %v2232
        %v2244 = vpop.permute.xlu0 %2243
        %v2245 = vlaneseq
        %v2246 = vshrl.u32 %v2245, 7
        %v2247 = vadd.s32 %v2246, 16
        %2248 = vset.pattern.permute.xlu0 %v2247
        %2249 = vperm.xlu0 %2248, %v2232
        %v2250 = vpop.permute.xlu0 %2249
        %v2251 = vlaneseq
        %v2252 = vshrl.u32 %v2251, 7
        %v2253 = vadd.s32 %v2252, 24
        %2254 = vset.pattern.permute.xlu0 %v2253
        %2255 = vperm.xlu0 %2254, %v2232
        %v2256 = vpop.permute.xlu0 %2255
        %v2257 = vlaneseq
        %v2258 = vshrl.u32 %v2257, 7
        %v2259 = vadd.s32 %v2258, 32
        %2260 = vset.pattern.permute.xlu0 %v2259
        %2261 = vperm.xlu0 %2260, %v2232
        %v2262 = vpop.permute.xlu0 %2261
        %v2263 = vlaneseq
        %v2264 = vshrl.u32 %v2263, 7
        %v2265 = vadd.s32 %v2264, 40
        %2266 = vset.pattern.permute.xlu0 %v2265
        %2267 = vperm.xlu0 %2266, %v2232
        %v2268 = vpop.permute.xlu0 %2267
        %v2269 = vlaneseq
        %v2270 = vshrl.u32 %v2269, 7
        %v2271 = vadd.s32 %v2270, 48
        %2272 = vset.pattern.permute.xlu0 %v2271
        %2273 = vperm.xlu0 %2272, %v2232
        %v2274 = vpop.permute.xlu0 %2273
        %v2275 = vlaneseq
        %v2276 = vshrl.u32 %v2275, 7
        %v2277 = vadd.s32 %v2276, 56
        %2278 = vset.pattern.permute.xlu0 %v2277
        %2279 = vperm.xlu0 %2278, %v2232
        %v2280 = vpop.permute.xlu0 %2279
        %v2281 = vlaneseq
        %v2282 = vshrl.u32 %v2281, 7
        %v2283 = vadd.s32 %v2282, 64
        %2284 = vset.pattern.permute.xlu0 %v2283
        %2285 = vperm.xlu0 %2284, %v2232
        %v2286 = vpop.permute.xlu0 %2285
        %v2287 = vlaneseq
        %v2288 = vshrl.u32 %v2287, 7
        %v2289 = vadd.s32 %v2288, 72
        %2290 = vset.pattern.permute.xlu0 %v2289
        %2291 = vperm.xlu0 %2290, %v2232
        %v2292 = vpop.permute.xlu0 %2291
        %v2293 = vlaneseq
        %v2294 = vshrl.u32 %v2293, 7
        %v2295 = vadd.s32 %v2294, 80
        %2296 = vset.pattern.permute.xlu0 %v2295
        %2297 = vperm.xlu0 %2296, %v2232
        %v2298 = vpop.permute.xlu0 %2297
        %v2299 = vlaneseq
        %v2300 = vshrl.u32 %v2299, 7
        %v2301 = vadd.s32 %v2300, 88
        %2302 = vset.pattern.permute.xlu0 %v2301
        %2303 = vperm.xlu0 %2302, %v2232
        %v2304 = vpop.permute.xlu0 %2303
        %v2305 = vlaneseq
        %v2306 = vshrl.u32 %v2305, 7
        %v2307 = vadd.s32 %v2306, 96
        %2308 = vset.pattern.permute.xlu0 %v2307
        %2309 = vperm.xlu0 %2308, %v2232
        %v2310 = vpop.permute.xlu0 %2309
        %v2311 = vlaneseq
        %v2312 = vshrl.u32 %v2311, 7
        %v2313 = vadd.s32 %v2312, 104
        %2314 = vset.pattern.permute.xlu0 %v2313
        %2315 = vperm.xlu0 %2314, %v2232
        %v2316 = vpop.permute.xlu0 %2315
        %v2317 = vlaneseq
        %v2318 = vshrl.u32 %v2317, 7
        %v2319 = vadd.s32 %v2318, 112
        %2320 = vset.pattern.permute.xlu0 %v2319
        %2321 = vperm.xlu0 %2320, %v2232
        %v2322 = vpop.permute.xlu0 %2321
        %v2323 = vlaneseq
        %v2324 = vshrl.u32 %v2323, 7
        %v2325 = vadd.s32 %v2324, 120
        %2326 = vset.pattern.permute.xlu0 %v2325
        %2327 = vperm.xlu0 %2326, %v2232
        %v2328 = vpop.permute.xlu0 %2327
        %v2329 = vperm.slane %v343, 2
        %v2330 = vperm.slane %v343, 6
        %v2331 = vperm.slane %v344, 2
        %v2332 = vperm.slane %v344, 6
        %v2337 = vperm.slane %v2329, 2
        %v2338 = vperm.slane %v2330, 2
        %v2339 = vperm.slane %v2331, 2
        %v2340 = vperm.slane %v2332, 2
        %v2341 = vmul.f32 %v1947, %v2337
        %v2342 = vmul.f32 %v1947, %v2338
        %v2343 = vmul.f32 %v1947, %v2339
        %v2344 = vmul.f32 %v1947, %v2340
        %v2345 = vmul.f32 %v1953, %v2337
        %v2346 = vmul.f32 %v1953, %v2338
        %v2347 = vmul.f32 %v1953, %v2339
        %v2348 = vmul.f32 %v1953, %v2340
        %v2349 = vmul.f32 %v1959, %v2337
        %v2350 = vmul.f32 %v1959, %v2338
        %v2351 = vmul.f32 %v1959, %v2339
        %v2352 = vmul.f32 %v1959, %v2340
        %v2353 = vmul.f32 %v1965, %v2337
        %v2354 = vmul.f32 %v1965, %v2338
        %v2355 = vmul.f32 %v1965, %v2339
        %v2356 = vmul.f32 %v1965, %v2340
        %v2357 = vmul.f32 %v1971, %v2337
        %v2358 = vmul.f32 %v1971, %v2338
        %v2359 = vmul.f32 %v1971, %v2339
        %v2360 = vmul.f32 %v1971, %v2340
        %v2361 = vmul.f32 %v1977, %v2337
        %v2362 = vmul.f32 %v1977, %v2338
        %v2363 = vmul.f32 %v1977, %v2339
        %v2364 = vmul.f32 %v1977, %v2340
        %v2365 = vmul.f32 %v1983, %v2337
        %v2366 = vmul.f32 %v1983, %v2338
        %v2367 = vmul.f32 %v1983, %v2339
        %v2368 = vmul.f32 %v1983, %v2340
        %v2369 = vmul.f32 %v1989, %v2337
        %v2370 = vmul.f32 %v1989, %v2338
        %v2371 = vmul.f32 %v1989, %v2339
        %v2372 = vmul.f32 %v1989, %v2340
        %v2373 = vmul.f32 %v1995, %v2337
        %v2374 = vmul.f32 %v1995, %v2338
        %v2375 = vmul.f32 %v1995, %v2339
        %v2376 = vmul.f32 %v1995, %v2340
        %v2377 = vmul.f32 %v2001, %v2337
        %v2378 = vmul.f32 %v2001, %v2338
        %v2379 = vmul.f32 %v2001, %v2339
        %v2380 = vmul.f32 %v2001, %v2340
        %v2381 = vmul.f32 %v2007, %v2337
        %v2382 = vmul.f32 %v2007, %v2338
        %v2383 = vmul.f32 %v2007, %v2339
        %v2384 = vmul.f32 %v2007, %v2340
        %v2385 = vmul.f32 %v2013, %v2337
        %v2386 = vmul.f32 %v2013, %v2338
        %v2387 = vmul.f32 %v2013, %v2339
        %v2388 = vmul.f32 %v2013, %v2340
        %v2389 = vmul.f32 %v2019, %v2337
        %v2390 = vmul.f32 %v2019, %v2338
        %v2391 = vmul.f32 %v2019, %v2339
        %v2392 = vmul.f32 %v2019, %v2340
        %v2393 = vmul.f32 %v2025, %v2337
        %v2394 = vmul.f32 %v2025, %v2338
        %v2395 = vmul.f32 %v2025, %v2339
        %v2396 = vmul.f32 %v2025, %v2340
        %v2397 = vmul.f32 %v2031, %v2337
        %v2398 = vmul.f32 %v2031, %v2338
        %v2399 = vmul.f32 %v2031, %v2339
        %v2400 = vmul.f32 %v2031, %v2340
        %v2401 = vmul.f32 %v2037, %v2337
        %v2402 = vmul.f32 %v2037, %v2338
        %v2403 = vmul.f32 %v2037, %v2339
        %v2404 = vmul.f32 %v2037, %v2340
        %v2405 = vmul.f32 %v2044, %v2337
        %v2406 = vmul.f32 %v2044, %v2338
        %v2407 = vmul.f32 %v2044, %v2339
        %v2408 = vmul.f32 %v2044, %v2340
        %v2409 = vmul.f32 %v2050, %v2337
        %v2410 = vmul.f32 %v2050, %v2338
        %v2411 = vmul.f32 %v2050, %v2339
        %v2412 = vmul.f32 %v2050, %v2340
        %v2413 = vmul.f32 %v2056, %v2337
        %v2414 = vmul.f32 %v2056, %v2338
        %v2415 = vmul.f32 %v2056, %v2339
        %v2416 = vmul.f32 %v2056, %v2340
        %v2417 = vmul.f32 %v2062, %v2337
        %v2418 = vmul.f32 %v2062, %v2338
        %v2419 = vmul.f32 %v2062, %v2339
        %v2420 = vmul.f32 %v2062, %v2340
        %v2421 = vmul.f32 %v2068, %v2337
        %v2422 = vmul.f32 %v2068, %v2338
        %v2423 = vmul.f32 %v2068, %v2339
        %v2424 = vmul.f32 %v2068, %v2340
        %v2425 = vmul.f32 %v2074, %v2337
        %v2426 = vmul.f32 %v2074, %v2338
        %v2427 = vmul.f32 %v2074, %v2339
        %v2428 = vmul.f32 %v2074, %v2340
        %v2429 = vmul.f32 %v2080, %v2337
        %v2430 = vmul.f32 %v2080, %v2338
        %v2431 = vmul.f32 %v2080, %v2339
        %v2432 = vmul.f32 %v2080, %v2340
        %v2433 = vmul.f32 %v2086, %v2337
        %v2434 = vmul.f32 %v2086, %v2338
        %v2435 = vmul.f32 %v2086, %v2339
        %v2436 = vmul.f32 %v2086, %v2340
        %v2437 = vmul.f32 %v2092, %v2337
        %v2438 = vmul.f32 %v2092, %v2338
        %v2439 = vmul.f32 %v2092, %v2339
        %v2440 = vmul.f32 %v2092, %v2340
        %v2441 = vmul.f32 %v2098, %v2337
        %v2442 = vmul.f32 %v2098, %v2338
        %v2443 = vmul.f32 %v2098, %v2339
        %v2444 = vmul.f32 %v2098, %v2340
        %v2445 = vmul.f32 %v2104, %v2337
        %v2446 = vmul.f32 %v2104, %v2338
        %v2447 = vmul.f32 %v2104, %v2339
        %v2448 = vmul.f32 %v2104, %v2340
        %v2449 = vmul.f32 %v2110, %v2337
        %v2450 = vmul.f32 %v2110, %v2338
        %v2451 = vmul.f32 %v2110, %v2339
        %v2452 = vmul.f32 %v2110, %v2340
        %v2453 = vmul.f32 %v2116, %v2337
        %v2454 = vmul.f32 %v2116, %v2338
        %v2455 = vmul.f32 %v2116, %v2339
        %v2456 = vmul.f32 %v2116, %v2340
        %v2457 = vmul.f32 %v2122, %v2337
        %v2458 = vmul.f32 %v2122, %v2338
        %v2459 = vmul.f32 %v2122, %v2339
        %v2460 = vmul.f32 %v2122, %v2340
        %v2461 = vmul.f32 %v2128, %v2337
        %v2462 = vmul.f32 %v2128, %v2338
        %v2463 = vmul.f32 %v2128, %v2339
        %v2464 = vmul.f32 %v2128, %v2340
        %v2465 = vmul.f32 %v2134, %v2337
        %v2466 = vmul.f32 %v2134, %v2338
        %v2467 = vmul.f32 %v2134, %v2339
        %v2468 = vmul.f32 %v2134, %v2340
        %v2469 = vmul.f32 %v2141, %v2337
        %v2470 = vmul.f32 %v2141, %v2338
        %v2471 = vmul.f32 %v2141, %v2339
        %v2472 = vmul.f32 %v2141, %v2340
        %v2473 = vmul.f32 %v2147, %v2337
        %v2474 = vmul.f32 %v2147, %v2338
        %v2475 = vmul.f32 %v2147, %v2339
        %v2476 = vmul.f32 %v2147, %v2340
        %v2477 = vmul.f32 %v2153, %v2337
        %v2478 = vmul.f32 %v2153, %v2338
        %v2479 = vmul.f32 %v2153, %v2339
        %v2480 = vmul.f32 %v2153, %v2340
        %v2481 = vmul.f32 %v2159, %v2337
        %v2482 = vmul.f32 %v2159, %v2338
        %v2483 = vmul.f32 %v2159, %v2339
        %v2484 = vmul.f32 %v2159, %v2340
        %v2485 = vmul.f32 %v2165, %v2337
        %v2486 = vmul.f32 %v2165, %v2338
        %v2487 = vmul.f32 %v2165, %v2339
        %v2488 = vmul.f32 %v2165, %v2340
        %v2489 = vmul.f32 %v2171, %v2337
        %v2490 = vmul.f32 %v2171, %v2338
        %v2491 = vmul.f32 %v2171, %v2339
        %v2492 = vmul.f32 %v2171, %v2340
        %v2493 = vmul.f32 %v2177, %v2337
        %v2494 = vmul.f32 %v2177, %v2338
        %v2495 = vmul.f32 %v2177, %v2339
        %v2496 = vmul.f32 %v2177, %v2340
        %v2497 = vmul.f32 %v2183, %v2337
        %v2498 = vmul.f32 %v2183, %v2338
        %v2499 = vmul.f32 %v2183, %v2339
        %v2500 = vmul.f32 %v2183, %v2340
        %v2501 = vmul.f32 %v2189, %v2337
        %v2502 = vmul.f32 %v2189, %v2338
        %v2503 = vmul.f32 %v2189, %v2339
        %v2504 = vmul.f32 %v2189, %v2340
        %v2505 = vmul.f32 %v2195, %v2337
        %v2506 = vmul.f32 %v2195, %v2338
        %v2507 = vmul.f32 %v2195, %v2339
        %v2508 = vmul.f32 %v2195, %v2340
        %v2509 = vmul.f32 %v2201, %v2337
        %v2510 = vmul.f32 %v2201, %v2338
        %v2511 = vmul.f32 %v2201, %v2339
        %v2512 = vmul.f32 %v2201, %v2340
        %v2513 = vmul.f32 %v2207, %v2337
        %v2514 = vmul.f32 %v2207, %v2338
        %v2515 = vmul.f32 %v2207, %v2339
        %v2516 = vmul.f32 %v2207, %v2340
        %v2517 = vmul.f32 %v2213, %v2337
        %v2518 = vmul.f32 %v2213, %v2338
        %v2519 = vmul.f32 %v2213, %v2339
        %v2520 = vmul.f32 %v2213, %v2340
        %v2521 = vmul.f32 %v2219, %v2337
        %v2522 = vmul.f32 %v2219, %v2338
        %v2523 = vmul.f32 %v2219, %v2339
        %v2524 = vmul.f32 %v2219, %v2340
        %v2525 = vmul.f32 %v2225, %v2337
        %v2526 = vmul.f32 %v2225, %v2338
        %v2527 = vmul.f32 %v2225, %v2339
        %v2528 = vmul.f32 %v2225, %v2340
        %v2529 = vmul.f32 %v2231, %v2337
        %v2530 = vmul.f32 %v2231, %v2338
        %v2531 = vmul.f32 %v2231, %v2339
        %v2532 = vmul.f32 %v2231, %v2340
        %v2533 = vmul.f32 %v2238, %v2337
        %v2534 = vmul.f32 %v2238, %v2338
        %v2535 = vmul.f32 %v2238, %v2339
        %v2536 = vmul.f32 %v2238, %v2340
        %v2537 = vmul.f32 %v2244, %v2337
        %v2538 = vmul.f32 %v2244, %v2338
        %v2539 = vmul.f32 %v2244, %v2339
        %v2540 = vmul.f32 %v2244, %v2340
        %v2541 = vmul.f32 %v2250, %v2337
        %v2542 = vmul.f32 %v2250, %v2338
        %v2543 = vmul.f32 %v2250, %v2339
        %v2544 = vmul.f32 %v2250, %v2340
        %v2545 = vmul.f32 %v2256, %v2337
        %v2546 = vmul.f32 %v2256, %v2338
        %v2547 = vmul.f32 %v2256, %v2339
        %v2548 = vmul.f32 %v2256, %v2340
        %v2549 = vmul.f32 %v2262, %v2337
        %v2550 = vmul.f32 %v2262, %v2338
        %v2551 = vmul.f32 %v2262, %v2339
        %v2552 = vmul.f32 %v2262, %v2340
        %v2553 = vmul.f32 %v2268, %v2337
        %v2554 = vmul.f32 %v2268, %v2338
        %v2555 = vmul.f32 %v2268, %v2339
        %v2556 = vmul.f32 %v2268, %v2340
        %v2557 = vmul.f32 %v2274, %v2337
        %v2558 = vmul.f32 %v2274, %v2338
        %v2559 = vmul.f32 %v2274, %v2339
        %v2560 = vmul.f32 %v2274, %v2340
        %v2561 = vmul.f32 %v2280, %v2337
        %v2562 = vmul.f32 %v2280, %v2338
        %v2563 = vmul.f32 %v2280, %v2339
        %v2564 = vmul.f32 %v2280, %v2340
        %v2565 = vmul.f32 %v2286, %v2337
        %v2566 = vmul.f32 %v2286, %v2338
        %v2567 = vmul.f32 %v2286, %v2339
        %v2568 = vmul.f32 %v2286, %v2340
        %v2569 = vmul.f32 %v2292, %v2337
        %v2570 = vmul.f32 %v2292, %v2338
        %v2571 = vmul.f32 %v2292, %v2339
        %v2572 = vmul.f32 %v2292, %v2340
        %v2573 = vmul.f32 %v2298, %v2337
        %v2574 = vmul.f32 %v2298, %v2338
        %v2575 = vmul.f32 %v2298, %v2339
        %v2576 = vmul.f32 %v2298, %v2340
        %v2577 = vmul.f32 %v2304, %v2337
        %v2578 = vmul.f32 %v2304, %v2338
        %v2579 = vmul.f32 %v2304, %v2339
        %v2580 = vmul.f32 %v2304, %v2340
        %v2581 = vmul.f32 %v2310, %v2337
        %v2582 = vmul.f32 %v2310, %v2338
        %v2583 = vmul.f32 %v2310, %v2339
        %v2584 = vmul.f32 %v2310, %v2340
        %v2585 = vmul.f32 %v2316, %v2337
        %v2586 = vmul.f32 %v2316, %v2338
        %v2587 = vmul.f32 %v2316, %v2339
        %v2588 = vmul.f32 %v2316, %v2340
        %v2589 = vmul.f32 %v2322, %v2337
        %v2590 = vmul.f32 %v2322, %v2338
        %v2591 = vmul.f32 %v2322, %v2339
        %v2592 = vmul.f32 %v2322, %v2340
        %v2593 = vmul.f32 %v2328, %v2337
        %v2594 = vmul.f32 %v2328, %v2338
        %v2595 = vmul.f32 %v2328, %v2339
        %v2596 = vmul.f32 %v2328, %v2340
        %v2597 = vadd.f32 %v1677, %v2341
        %v2598 = vadd.f32 %v1678, %v2342
        %v2599 = vadd.f32 %v1679, %v2343
        %v2600 = vadd.f32 %v1680, %v2344
        %v2601 = vadd.f32 %v1681, %v2345
        %v2602 = vadd.f32 %v1682, %v2346
        %v2603 = vadd.f32 %v1683, %v2347
        %v2604 = vadd.f32 %v1684, %v2348
        %v2605 = vadd.f32 %v1685, %v2349
        %v2606 = vadd.f32 %v1686, %v2350
        %v2607 = vadd.f32 %v1687, %v2351
        %v2608 = vadd.f32 %v1688, %v2352
        %v2609 = vadd.f32 %v1689, %v2353
        %v2610 = vadd.f32 %v1690, %v2354
        %v2611 = vadd.f32 %v1691, %v2355
        %v2612 = vadd.f32 %v1692, %v2356
        %v2613 = vadd.f32 %v1693, %v2357
        %v2614 = vadd.f32 %v1694, %v2358
        %v2615 = vadd.f32 %v1695, %v2359
        %v2616 = vadd.f32 %v1696, %v2360
        %v2617 = vadd.f32 %v1697, %v2361
        %v2618 = vadd.f32 %v1698, %v2362
        %v2619 = vadd.f32 %v1699, %v2363
        %v2620 = vadd.f32 %v1700, %v2364
        %v2621 = vadd.f32 %v1701, %v2365
        %v2622 = vadd.f32 %v1702, %v2366
        %v2623 = vadd.f32 %v1703, %v2367
        %v2624 = vadd.f32 %v1704, %v2368
        %v2625 = vadd.f32 %v1705, %v2369
        %v2626 = vadd.f32 %v1706, %v2370
        %v2627 = vadd.f32 %v1707, %v2371
        %v2628 = vadd.f32 %v1708, %v2372
        %v2629 = vadd.f32 %v1709, %v2373
        %v2630 = vadd.f32 %v1710, %v2374
        %v2631 = vadd.f32 %v1711, %v2375
        %v2632 = vadd.f32 %v1712, %v2376
        %v2633 = vadd.f32 %v1713, %v2377
        %v2634 = vadd.f32 %v1714, %v2378
        %v2635 = vadd.f32 %v1715, %v2379
        %v2636 = vadd.f32 %v1716, %v2380
        %v2637 = vadd.f32 %v1717, %v2381
        %v2638 = vadd.f32 %v1718, %v2382
        %v2639 = vadd.f32 %v1719, %v2383
        %v2640 = vadd.f32 %v1720, %v2384
        %v2641 = vadd.f32 %v1721, %v2385
        %v2642 = vadd.f32 %v1722, %v2386
        %v2643 = vadd.f32 %v1723, %v2387
        %v2644 = vadd.f32 %v1724, %v2388
        %v2645 = vadd.f32 %v1725, %v2389
        %v2646 = vadd.f32 %v1726, %v2390
        %v2647 = vadd.f32 %v1727, %v2391
        %v2648 = vadd.f32 %v1728, %v2392
        %v2649 = vadd.f32 %v1729, %v2393
        %v2650 = vadd.f32 %v1730, %v2394
        %v2651 = vadd.f32 %v1731, %v2395
        %v2652 = vadd.f32 %v1732, %v2396
        %v2653 = vadd.f32 %v1733, %v2397
        %v2654 = vadd.f32 %v1734, %v2398
        %v2655 = vadd.f32 %v1735, %v2399
        %v2656 = vadd.f32 %v1736, %v2400
        %v2657 = vadd.f32 %v1737, %v2401
        %v2658 = vadd.f32 %v1738, %v2402
        %v2659 = vadd.f32 %v1739, %v2403
        %v2660 = vadd.f32 %v1740, %v2404
        %v2661 = vadd.f32 %v1741, %v2405
        %v2662 = vadd.f32 %v1742, %v2406
        %v2663 = vadd.f32 %v1743, %v2407
        %v2664 = vadd.f32 %v1744, %v2408
        %v2665 = vadd.f32 %v1745, %v2409
        %v2666 = vadd.f32 %v1746, %v2410
        %v2667 = vadd.f32 %v1747, %v2411
        %v2668 = vadd.f32 %v1748, %v2412
        %v2669 = vadd.f32 %v1749, %v2413
        %v2670 = vadd.f32 %v1750, %v2414
        %v2671 = vadd.f32 %v1751, %v2415
        %v2672 = vadd.f32 %v1752, %v2416
        %v2673 = vadd.f32 %v1753, %v2417
        %v2674 = vadd.f32 %v1754, %v2418
        %v2675 = vadd.f32 %v1755, %v2419
        %v2676 = vadd.f32 %v1756, %v2420
        %v2677 = vadd.f32 %v1757, %v2421
        %v2678 = vadd.f32 %v1758, %v2422
        %v2679 = vadd.f32 %v1759, %v2423
        %v2680 = vadd.f32 %v1760, %v2424
        %v2681 = vadd.f32 %v1761, %v2425
        %v2682 = vadd.f32 %v1762, %v2426
        %v2683 = vadd.f32 %v1763, %v2427
        %v2684 = vadd.f32 %v1764, %v2428
        %v2685 = vadd.f32 %v1765, %v2429
        %v2686 = vadd.f32 %v1766, %v2430
        %v2687 = vadd.f32 %v1767, %v2431
        %v2688 = vadd.f32 %v1768, %v2432
        %v2689 = vadd.f32 %v1769, %v2433
        %v2690 = vadd.f32 %v1770, %v2434
        %v2691 = vadd.f32 %v1771, %v2435
        %v2692 = vadd.f32 %v1772, %v2436
        %v2693 = vadd.f32 %v1773, %v2437
        %v2694 = vadd.f32 %v1774, %v2438
        %v2695 = vadd.f32 %v1775, %v2439
        %v2696 = vadd.f32 %v1776, %v2440
        %v2697 = vadd.f32 %v1777, %v2441
        %v2698 = vadd.f32 %v1778, %v2442
        %v2699 = vadd.f32 %v1779, %v2443
        %v2700 = vadd.f32 %v1780, %v2444
        %v2701 = vadd.f32 %v1781, %v2445
        %v2702 = vadd.f32 %v1782, %v2446
        %v2703 = vadd.f32 %v1783, %v2447
        %v2704 = vadd.f32 %v1784, %v2448
        %v2705 = vadd.f32 %v1785, %v2449
        %v2706 = vadd.f32 %v1786, %v2450
        %v2707 = vadd.f32 %v1787, %v2451
        %v2708 = vadd.f32 %v1788, %v2452
        %v2709 = vadd.f32 %v1789, %v2453
        %v2710 = vadd.f32 %v1790, %v2454
        %v2711 = vadd.f32 %v1791, %v2455
        %v2712 = vadd.f32 %v1792, %v2456
        %v2713 = vadd.f32 %v1793, %v2457
        %v2714 = vadd.f32 %v1794, %v2458
        %v2715 = vadd.f32 %v1795, %v2459
        %v2716 = vadd.f32 %v1796, %v2460
        %v2717 = vadd.f32 %v1797, %v2461
        %v2718 = vadd.f32 %v1798, %v2462
        %v2719 = vadd.f32 %v1799, %v2463
        %v2720 = vadd.f32 %v1800, %v2464
        %v2721 = vadd.f32 %v1801, %v2465
        %v2722 = vadd.f32 %v1802, %v2466
        %v2723 = vadd.f32 %v1803, %v2467
        %v2724 = vadd.f32 %v1804, %v2468
        %v2725 = vadd.f32 %v1805, %v2469
        %v2726 = vadd.f32 %v1806, %v2470
        %v2727 = vadd.f32 %v1807, %v2471
        %v2728 = vadd.f32 %v1808, %v2472
        %v2729 = vadd.f32 %v1809, %v2473
        %v2730 = vadd.f32 %v1810, %v2474
        %v2731 = vadd.f32 %v1811, %v2475
        %v2732 = vadd.f32 %v1812, %v2476
        %v2733 = vadd.f32 %v1813, %v2477
        %v2734 = vadd.f32 %v1814, %v2478
        %v2735 = vadd.f32 %v1815, %v2479
        %v2736 = vadd.f32 %v1816, %v2480
        %v2737 = vadd.f32 %v1817, %v2481
        %v2738 = vadd.f32 %v1818, %v2482
        %v2739 = vadd.f32 %v1819, %v2483
        %v2740 = vadd.f32 %v1820, %v2484
        %v2741 = vadd.f32 %v1821, %v2485
        %v2742 = vadd.f32 %v1822, %v2486
        %v2743 = vadd.f32 %v1823, %v2487
        %v2744 = vadd.f32 %v1824, %v2488
        %v2745 = vadd.f32 %v1825, %v2489
        %v2746 = vadd.f32 %v1826, %v2490
        %v2747 = vadd.f32 %v1827, %v2491
        %v2748 = vadd.f32 %v1828, %v2492
        %v2749 = vadd.f32 %v1829, %v2493
        %v2750 = vadd.f32 %v1830, %v2494
        %v2751 = vadd.f32 %v1831, %v2495
        %v2752 = vadd.f32 %v1832, %v2496
        %v2753 = vadd.f32 %v1833, %v2497
        %v2754 = vadd.f32 %v1834, %v2498
        %v2755 = vadd.f32 %v1835, %v2499
        %v2756 = vadd.f32 %v1836, %v2500
        %v2757 = vadd.f32 %v1837, %v2501
        %v2758 = vadd.f32 %v1838, %v2502
        %v2759 = vadd.f32 %v1839, %v2503
        %v2760 = vadd.f32 %v1840, %v2504
        %v2761 = vadd.f32 %v1841, %v2505
        %v2762 = vadd.f32 %v1842, %v2506
        %v2763 = vadd.f32 %v1843, %v2507
        %v2764 = vadd.f32 %v1844, %v2508
        %v2765 = vadd.f32 %v1845, %v2509
        %v2766 = vadd.f32 %v1846, %v2510
        %v2767 = vadd.f32 %v1847, %v2511
        %v2768 = vadd.f32 %v1848, %v2512
        %v2769 = vadd.f32 %v1849, %v2513
        %v2770 = vadd.f32 %v1850, %v2514
        %v2771 = vadd.f32 %v1851, %v2515
        %v2772 = vadd.f32 %v1852, %v2516
        %v2773 = vadd.f32 %v1853, %v2517
        %v2774 = vadd.f32 %v1854, %v2518
        %v2775 = vadd.f32 %v1855, %v2519
        %v2776 = vadd.f32 %v1856, %v2520
        %v2777 = vadd.f32 %v1857, %v2521
        %v2778 = vadd.f32 %v1858, %v2522
        %v2779 = vadd.f32 %v1859, %v2523
        %v2780 = vadd.f32 %v1860, %v2524
        %v2781 = vadd.f32 %v1861, %v2525
        %v2782 = vadd.f32 %v1862, %v2526
        %v2783 = vadd.f32 %v1863, %v2527
        %v2784 = vadd.f32 %v1864, %v2528
        %v2785 = vadd.f32 %v1865, %v2529
        %v2786 = vadd.f32 %v1866, %v2530
        %v2787 = vadd.f32 %v1867, %v2531
        %v2788 = vadd.f32 %v1868, %v2532
        %v2789 = vadd.f32 %v1869, %v2533
        %v2790 = vadd.f32 %v1870, %v2534
        %v2791 = vadd.f32 %v1871, %v2535
        %v2792 = vadd.f32 %v1872, %v2536
        %v2793 = vadd.f32 %v1873, %v2537
        %v2794 = vadd.f32 %v1874, %v2538
        %v2795 = vadd.f32 %v1875, %v2539
        %v2796 = vadd.f32 %v1876, %v2540
        %v2797 = vadd.f32 %v1877, %v2541
        %v2798 = vadd.f32 %v1878, %v2542
        %v2799 = vadd.f32 %v1879, %v2543
        %v2800 = vadd.f32 %v1880, %v2544
        %v2801 = vadd.f32 %v1881, %v2545
        %v2802 = vadd.f32 %v1882, %v2546
        %v2803 = vadd.f32 %v1883, %v2547
        %v2804 = vadd.f32 %v1884, %v2548
        %v2805 = vadd.f32 %v1885, %v2549
        %v2806 = vadd.f32 %v1886, %v2550
        %v2807 = vadd.f32 %v1887, %v2551
        %v2808 = vadd.f32 %v1888, %v2552
        %v2809 = vadd.f32 %v1889, %v2553
        %v2810 = vadd.f32 %v1890, %v2554
        %v2811 = vadd.f32 %v1891, %v2555
        %v2812 = vadd.f32 %v1892, %v2556
        %v2813 = vadd.f32 %v1893, %v2557
        %v2814 = vadd.f32 %v1894, %v2558
        %v2815 = vadd.f32 %v1895, %v2559
        %v2816 = vadd.f32 %v1896, %v2560
        %v2817 = vadd.f32 %v1897, %v2561
        %v2818 = vadd.f32 %v1898, %v2562
        %v2819 = vadd.f32 %v1899, %v2563
        %v2820 = vadd.f32 %v1900, %v2564
        %v2821 = vadd.f32 %v1901, %v2565
        %v2822 = vadd.f32 %v1902, %v2566
        %v2823 = vadd.f32 %v1903, %v2567
        %v2824 = vadd.f32 %v1904, %v2568
        %v2825 = vadd.f32 %v1905, %v2569
        %v2826 = vadd.f32 %v1906, %v2570
        %v2827 = vadd.f32 %v1907, %v2571
        %v2828 = vadd.f32 %v1908, %v2572
        %v2829 = vadd.f32 %v1909, %v2573
        %v2830 = vadd.f32 %v1910, %v2574
        %v2831 = vadd.f32 %v1911, %v2575
        %v2832 = vadd.f32 %v1912, %v2576
        %v2833 = vadd.f32 %v1913, %v2577
        %v2834 = vadd.f32 %v1914, %v2578
        %v2835 = vadd.f32 %v1915, %v2579
        %v2836 = vadd.f32 %v1916, %v2580
        %v2837 = vadd.f32 %v1917, %v2581
        %v2838 = vadd.f32 %v1918, %v2582
        %v2839 = vadd.f32 %v1919, %v2583
        %v2840 = vadd.f32 %v1920, %v2584
        %v2841 = vadd.f32 %v1921, %v2585
        %v2842 = vadd.f32 %v1922, %v2586
        %v2843 = vadd.f32 %v1923, %v2587
        %v2844 = vadd.f32 %v1924, %v2588
        %v2845 = vadd.f32 %v1925, %v2589
        %v2846 = vadd.f32 %v1926, %v2590
        %v2847 = vadd.f32 %v1927, %v2591
        %v2848 = vadd.f32 %v1928, %v2592
        %v2849 = vadd.f32 %v1929, %v2593
        %v2850 = vadd.f32 %v1930, %v2594
        %v2851 = vadd.f32 %v1931, %v2595
        %v2852 = vadd.f32 %v1932, %v2596
        %v2853 = vld [vmem:[%s333] sm:$0xf]
        %v2855 = vperm.slane %v2853, 0
        %v2856 = vperm.slane %v2853, 1
        %v2857 = vperm.slane %v2853, 2
        %v2858 = vperm.slane %v2853, 3
        %v2863 = vadd.f32 %v2597, %v2855
        %v2864 = vadd.f32 %v2598, %v2856
        %v2865 = vadd.f32 %v2599, %v2857
        %v2866 = vadd.f32 %v2600, %v2858
        %v2867 = vadd.f32 %v2601, %v2855
        %v2868 = vadd.f32 %v2602, %v2856
        %v2869 = vadd.f32 %v2603, %v2857
        %v2870 = vadd.f32 %v2604, %v2858
        %v2871 = vadd.f32 %v2605, %v2855
        %v2872 = vadd.f32 %v2606, %v2856
        %v2873 = vadd.f32 %v2607, %v2857
        %v2874 = vadd.f32 %v2608, %v2858
        %v2875 = vadd.f32 %v2609, %v2855
        %v2876 = vadd.f32 %v2610, %v2856
        %v2877 = vadd.f32 %v2611, %v2857
        %v2878 = vadd.f32 %v2612, %v2858
        %v2879 = vadd.f32 %v2613, %v2855
        %v2880 = vadd.f32 %v2614, %v2856
        %v2881 = vadd.f32 %v2615, %v2857
        %v2882 = vadd.f32 %v2616, %v2858
        %v2883 = vadd.f32 %v2617, %v2855
        %v2884 = vadd.f32 %v2618, %v2856
        %v2885 = vadd.f32 %v2619, %v2857
        %v2886 = vadd.f32 %v2620, %v2858
        %v2887 = vadd.f32 %v2621, %v2855
        %v2888 = vadd.f32 %v2622, %v2856
        %v2889 = vadd.f32 %v2623, %v2857
        %v2890 = vadd.f32 %v2624, %v2858
        %v2891 = vadd.f32 %v2625, %v2855
        %v2892 = vadd.f32 %v2626, %v2856
        %v2893 = vadd.f32 %v2627, %v2857
        %v2894 = vadd.f32 %v2628, %v2858
        %v2895 = vadd.f32 %v2629, %v2855
        %v2896 = vadd.f32 %v2630, %v2856
        %v2897 = vadd.f32 %v2631, %v2857
        %v2898 = vadd.f32 %v2632, %v2858
        %v2899 = vadd.f32 %v2633, %v2855
        %v2900 = vadd.f32 %v2634, %v2856
        %v2901 = vadd.f32 %v2635, %v2857
        %v2902 = vadd.f32 %v2636, %v2858
        %v2903 = vadd.f32 %v2637, %v2855
        %v2904 = vadd.f32 %v2638, %v2856
        %v2905 = vadd.f32 %v2639, %v2857
        %v2906 = vadd.f32 %v2640, %v2858
        %v2907 = vadd.f32 %v2641, %v2855
        %v2908 = vadd.f32 %v2642, %v2856
        %v2909 = vadd.f32 %v2643, %v2857
        %v2910 = vadd.f32 %v2644, %v2858
        %v2911 = vadd.f32 %v2645, %v2855
        %v2912 = vadd.f32 %v2646, %v2856
        %v2913 = vadd.f32 %v2647, %v2857
        %v2914 = vadd.f32 %v2648, %v2858
        %v2915 = vadd.f32 %v2649, %v2855
        %v2916 = vadd.f32 %v2650, %v2856
        %v2917 = vadd.f32 %v2651, %v2857
        %v2918 = vadd.f32 %v2652, %v2858
        %v2919 = vadd.f32 %v2653, %v2855
        %v2920 = vadd.f32 %v2654, %v2856
        %v2921 = vadd.f32 %v2655, %v2857
        %v2922 = vadd.f32 %v2656, %v2858
        %v2923 = vadd.f32 %v2657, %v2855
        %v2924 = vadd.f32 %v2658, %v2856
        %v2925 = vadd.f32 %v2659, %v2857
        %v2926 = vadd.f32 %v2660, %v2858
        %v2927 = vadd.f32 %v2661, %v2855
        %v2928 = vadd.f32 %v2662, %v2856
        %v2929 = vadd.f32 %v2663, %v2857
        %v2930 = vadd.f32 %v2664, %v2858
        %v2931 = vadd.f32 %v2665, %v2855
        %v2932 = vadd.f32 %v2666, %v2856
        %v2933 = vadd.f32 %v2667, %v2857
        %v2934 = vadd.f32 %v2668, %v2858
        %v2935 = vadd.f32 %v2669, %v2855
        %v2936 = vadd.f32 %v2670, %v2856
        %v2937 = vadd.f32 %v2671, %v2857
        %v2938 = vadd.f32 %v2672, %v2858
        %v2939 = vadd.f32 %v2673, %v2855
        %v2940 = vadd.f32 %v2674, %v2856
        %v2941 = vadd.f32 %v2675, %v2857
        %v2942 = vadd.f32 %v2676, %v2858
        %v2943 = vadd.f32 %v2677, %v2855
        %v2944 = vadd.f32 %v2678, %v2856
        %v2945 = vadd.f32 %v2679, %v2857
        %v2946 = vadd.f32 %v2680, %v2858
        %v2947 = vadd.f32 %v2681, %v2855
        %v2948 = vadd.f32 %v2682, %v2856
        %v2949 = vadd.f32 %v2683, %v2857
        %v2950 = vadd.f32 %v2684, %v2858
        %v2951 = vadd.f32 %v2685, %v2855
        %v2952 = vadd.f32 %v2686, %v2856
        %v2953 = vadd.f32 %v2687, %v2857
        %v2954 = vadd.f32 %v2688, %v2858
        %v2955 = vadd.f32 %v2689, %v2855
        %v2956 = vadd.f32 %v2690, %v2856
        %v2957 = vadd.f32 %v2691, %v2857
        %v2958 = vadd.f32 %v2692, %v2858
        %v2959 = vadd.f32 %v2693, %v2855
        %v2960 = vadd.f32 %v2694, %v2856
        %v2961 = vadd.f32 %v2695, %v2857
        %v2962 = vadd.f32 %v2696, %v2858
        %v2963 = vadd.f32 %v2697, %v2855
        %v2964 = vadd.f32 %v2698, %v2856
        %v2965 = vadd.f32 %v2699, %v2857
        %v2966 = vadd.f32 %v2700, %v2858
        %v2967 = vadd.f32 %v2701, %v2855
        %v2968 = vadd.f32 %v2702, %v2856
        %v2969 = vadd.f32 %v2703, %v2857
        %v2970 = vadd.f32 %v2704, %v2858
        %v2971 = vadd.f32 %v2705, %v2855
        %v2972 = vadd.f32 %v2706, %v2856
        %v2973 = vadd.f32 %v2707, %v2857
        %v2974 = vadd.f32 %v2708, %v2858
        %v2975 = vadd.f32 %v2709, %v2855
        %v2976 = vadd.f32 %v2710, %v2856
        %v2977 = vadd.f32 %v2711, %v2857
        %v2978 = vadd.f32 %v2712, %v2858
        %v2979 = vadd.f32 %v2713, %v2855
        %v2980 = vadd.f32 %v2714, %v2856
        %v2981 = vadd.f32 %v2715, %v2857
        %v2982 = vadd.f32 %v2716, %v2858
        %v2983 = vadd.f32 %v2717, %v2855
        %v2984 = vadd.f32 %v2718, %v2856
        %v2985 = vadd.f32 %v2719, %v2857
        %v2986 = vadd.f32 %v2720, %v2858
        %v2987 = vadd.f32 %v2721, %v2855
        %v2988 = vadd.f32 %v2722, %v2856
        %v2989 = vadd.f32 %v2723, %v2857
        %v2990 = vadd.f32 %v2724, %v2858
        %v2991 = vadd.f32 %v2725, %v2855
        %v2992 = vadd.f32 %v2726, %v2856
        %v2993 = vadd.f32 %v2727, %v2857
        %v2994 = vadd.f32 %v2728, %v2858
        %v2995 = vadd.f32 %v2729, %v2855
        %v2996 = vadd.f32 %v2730, %v2856
        %v2997 = vadd.f32 %v2731, %v2857
        %v2998 = vadd.f32 %v2732, %v2858
        %v2999 = vadd.f32 %v2733, %v2855
        %v3000 = vadd.f32 %v2734, %v2856
        %v3001 = vadd.f32 %v2735, %v2857
        %v3002 = vadd.f32 %v2736, %v2858
        %v3003 = vadd.f32 %v2737, %v2855
        %v3004 = vadd.f32 %v2738, %v2856
        %v3005 = vadd.f32 %v2739, %v2857
        %v3006 = vadd.f32 %v2740, %v2858
        %v3007 = vadd.f32 %v2741, %v2855
        %v3008 = vadd.f32 %v2742, %v2856
        %v3009 = vadd.f32 %v2743, %v2857
        %v3010 = vadd.f32 %v2744, %v2858
        %v3011 = vadd.f32 %v2745, %v2855
        %v3012 = vadd.f32 %v2746, %v2856
        %v3013 = vadd.f32 %v2747, %v2857
        %v3014 = vadd.f32 %v2748, %v2858
        %v3015 = vadd.f32 %v2749, %v2855
        %v3016 = vadd.f32 %v2750, %v2856
        %v3017 = vadd.f32 %v2751, %v2857
        %v3018 = vadd.f32 %v2752, %v2858
        %v3019 = vadd.f32 %v2753, %v2855
        %v3020 = vadd.f32 %v2754, %v2856
        %v3021 = vadd.f32 %v2755, %v2857
        %v3022 = vadd.f32 %v2756, %v2858
        %v3023 = vadd.f32 %v2757, %v2855
        %v3024 = vadd.f32 %v2758, %v2856
        %v3025 = vadd.f32 %v2759, %v2857
        %v3026 = vadd.f32 %v2760, %v2858
        %v3027 = vadd.f32 %v2761, %v2855
        %v3028 = vadd.f32 %v2762, %v2856
        %v3029 = vadd.f32 %v2763, %v2857
        %v3030 = vadd.f32 %v2764, %v2858
        %v3031 = vadd.f32 %v2765, %v2855
        %v3032 = vadd.f32 %v2766, %v2856
        %v3033 = vadd.f32 %v2767, %v2857
        %v3034 = vadd.f32 %v2768, %v2858
        %v3035 = vadd.f32 %v2769, %v2855
        %v3036 = vadd.f32 %v2770, %v2856
        %v3037 = vadd.f32 %v2771, %v2857
        %v3038 = vadd.f32 %v2772, %v2858
        %v3039 = vadd.f32 %v2773, %v2855
        %v3040 = vadd.f32 %v2774, %v2856
        %v3041 = vadd.f32 %v2775, %v2857
        %v3042 = vadd.f32 %v2776, %v2858
        %v3043 = vadd.f32 %v2777, %v2855
        %v3044 = vadd.f32 %v2778, %v2856
        %v3045 = vadd.f32 %v2779, %v2857
        %v3046 = vadd.f32 %v2780, %v2858
        %v3047 = vadd.f32 %v2781, %v2855
        %v3048 = vadd.f32 %v2782, %v2856
        %v3049 = vadd.f32 %v2783, %v2857
        %v3050 = vadd.f32 %v2784, %v2858
        %v3051 = vadd.f32 %v2785, %v2855
        %v3052 = vadd.f32 %v2786, %v2856
        %v3053 = vadd.f32 %v2787, %v2857
        %v3054 = vadd.f32 %v2788, %v2858
        %v3055 = vadd.f32 %v2789, %v2855
        %v3056 = vadd.f32 %v2790, %v2856
        %v3057 = vadd.f32 %v2791, %v2857
        %v3058 = vadd.f32 %v2792, %v2858
        %v3059 = vadd.f32 %v2793, %v2855
        %v3060 = vadd.f32 %v2794, %v2856
        %v3061 = vadd.f32 %v2795, %v2857
        %v3062 = vadd.f32 %v2796, %v2858
        %v3063 = vadd.f32 %v2797, %v2855
        %v3064 = vadd.f32 %v2798, %v2856
        %v3065 = vadd.f32 %v2799, %v2857
        %v3066 = vadd.f32 %v2800, %v2858
        %v3067 = vadd.f32 %v2801, %v2855
        %v3068 = vadd.f32 %v2802, %v2856
        %v3069 = vadd.f32 %v2803, %v2857
        %v3070 = vadd.f32 %v2804, %v2858
        %v3071 = vadd.f32 %v2805, %v2855
        %v3072 = vadd.f32 %v2806, %v2856
        %v3073 = vadd.f32 %v2807, %v2857
        %v3074 = vadd.f32 %v2808, %v2858
        %v3075 = vadd.f32 %v2809, %v2855
        %v3076 = vadd.f32 %v2810, %v2856
        %v3077 = vadd.f32 %v2811, %v2857
        %v3078 = vadd.f32 %v2812, %v2858
        %v3079 = vadd.f32 %v2813, %v2855
        %v3080 = vadd.f32 %v2814, %v2856
        %v3081 = vadd.f32 %v2815, %v2857
        %v3082 = vadd.f32 %v2816, %v2858
        %v3083 = vadd.f32 %v2817, %v2855
        %v3084 = vadd.f32 %v2818, %v2856
        %v3085 = vadd.f32 %v2819, %v2857
        %v3086 = vadd.f32 %v2820, %v2858
        %v3087 = vadd.f32 %v2821, %v2855
        %v3088 = vadd.f32 %v2822, %v2856
        %v3089 = vadd.f32 %v2823, %v2857
        %v3090 = vadd.f32 %v2824, %v2858
        %v3091 = vadd.f32 %v2825, %v2855
        %v3092 = vadd.f32 %v2826, %v2856
        %v3093 = vadd.f32 %v2827, %v2857
        %v3094 = vadd.f32 %v2828, %v2858
        %v3095 = vadd.f32 %v2829, %v2855
        %v3096 = vadd.f32 %v2830, %v2856
        %v3097 = vadd.f32 %v2831, %v2857
        %v3098 = vadd.f32 %v2832, %v2858
        %v3099 = vadd.f32 %v2833, %v2855
        %v3100 = vadd.f32 %v2834, %v2856
        %v3101 = vadd.f32 %v2835, %v2857
        %v3102 = vadd.f32 %v2836, %v2858
        %v3103 = vadd.f32 %v2837, %v2855
        %v3104 = vadd.f32 %v2838, %v2856
        %v3105 = vadd.f32 %v2839, %v2857
        %v3106 = vadd.f32 %v2840, %v2858
        %v3107 = vadd.f32 %v2841, %v2855
        %v3108 = vadd.f32 %v2842, %v2856
        %v3109 = vadd.f32 %v2843, %v2857
        %v3110 = vadd.f32 %v2844, %v2858
        %v3111 = vadd.f32 %v2845, %v2855
        %v3112 = vadd.f32 %v2846, %v2856
        %v3113 = vadd.f32 %v2847, %v2857
        %v3114 = vadd.f32 %v2848, %v2858
        %v3115 = vadd.f32 %v2849, %v2855
        %v3116 = vadd.f32 %v2850, %v2856
        %v3117 = vadd.f32 %v2851, %v2857
        %v3118 = vadd.f32 %v2852, %v2858
        %v3119 = vmax.f32 %v2863, 0.0
        %v3120 = vmax.f32 %v2864, 0.0
        %v3121 = vmax.f32 %v2865, 0.0
        %v3122 = vmax.f32 %v2866, 0.0
        %v3123 = vmax.f32 %v2867, 0.0
        %v3124 = vmax.f32 %v2868, 0.0
        %v3125 = vmax.f32 %v2869, 0.0
        %v3126 = vmax.f32 %v2870, 0.0
        %v3127 = vmax.f32 %v2871, 0.0
        %v3128 = vmax.f32 %v2872, 0.0
        %v3129 = vmax.f32 %v2873, 0.0
        %v3130 = vmax.f32 %v2874, 0.0
        %v3131 = vmax.f32 %v2875, 0.0
        %v3132 = vmax.f32 %v2876, 0.0
        %v3133 = vmax.f32 %v2877, 0.0
        %v3134 = vmax.f32 %v2878, 0.0
        %v3135 = vmax.f32 %v2879, 0.0
        %v3136 = vmax.f32 %v2880, 0.0
        %v3137 = vmax.f32 %v2881, 0.0
        %v3138 = vmax.f32 %v2882, 0.0
        %v3139 = vmax.f32 %v2883, 0.0
        %v3140 = vmax.f32 %v2884, 0.0
        %v3141 = vmax.f32 %v2885, 0.0
        %v3142 = vmax.f32 %v2886, 0.0
        %v3143 = vmax.f32 %v2887, 0.0
        %v3144 = vmax.f32 %v2888, 0.0
        %v3145 = vmax.f32 %v2889, 0.0
        %v3146 = vmax.f32 %v2890, 0.0
        %v3147 = vmax.f32 %v2891, 0.0
        %v3148 = vmax.f32 %v2892, 0.0
        %v3149 = vmax.f32 %v2893, 0.0
        %v3150 = vmax.f32 %v2894, 0.0
        %v3151 = vmax.f32 %v2895, 0.0
        %v3152 = vmax.f32 %v2896, 0.0
        %v3153 = vmax.f32 %v2897, 0.0
        %v3154 = vmax.f32 %v2898, 0.0
        %v3155 = vmax.f32 %v2899, 0.0
        %v3156 = vmax.f32 %v2900, 0.0
        %v3157 = vmax.f32 %v2901, 0.0
        %v3158 = vmax.f32 %v2902, 0.0
        %v3159 = vmax.f32 %v2903, 0.0
        %v3160 = vmax.f32 %v2904, 0.0
        %v3161 = vmax.f32 %v2905, 0.0
        %v3162 = vmax.f32 %v2906, 0.0
        %v3163 = vmax.f32 %v2907, 0.0
        %v3164 = vmax.f32 %v2908, 0.0
        %v3165 = vmax.f32 %v2909, 0.0
        %v3166 = vmax.f32 %v2910, 0.0
        %v3167 = vmax.f32 %v2911, 0.0
        %v3168 = vmax.f32 %v2912, 0.0
        %v3169 = vmax.f32 %v2913, 0.0
        %v3170 = vmax.f32 %v2914, 0.0
        %v3171 = vmax.f32 %v2915, 0.0
        %v3172 = vmax.f32 %v2916, 0.0
        %v3173 = vmax.f32 %v2917, 0.0
        %v3174 = vmax.f32 %v2918, 0.0
        %v3175 = vmax.f32 %v2919, 0.0
        %v3176 = vmax.f32 %v2920, 0.0
        %v3177 = vmax.f32 %v2921, 0.0
        %v3178 = vmax.f32 %v2922, 0.0
        %v3179 = vmax.f32 %v2923, 0.0
        %v3180 = vmax.f32 %v2924, 0.0
        %v3181 = vmax.f32 %v2925, 0.0
        %v3182 = vmax.f32 %v2926, 0.0
        %v3183 = vmax.f32 %v2927, 0.0
        %v3184 = vmax.f32 %v2928, 0.0
        %v3185 = vmax.f32 %v2929, 0.0
        %v3186 = vmax.f32 %v2930, 0.0
        %v3187 = vmax.f32 %v2931, 0.0
        %v3188 = vmax.f32 %v2932, 0.0
        %v3189 = vmax.f32 %v2933, 0.0
        %v3190 = vmax.f32 %v2934, 0.0
        %v3191 = vmax.f32 %v2935, 0.0
        %v3192 = vmax.f32 %v2936, 0.0
        %v3193 = vmax.f32 %v2937, 0.0
        %v3194 = vmax.f32 %v2938, 0.0
        %v3195 = vmax.f32 %v2939, 0.0
        %v3196 = vmax.f32 %v2940, 0.0
        %v3197 = vmax.f32 %v2941, 0.0
        %v3198 = vmax.f32 %v2942, 0.0
        %v3199 = vmax.f32 %v2943, 0.0
        %v3200 = vmax.f32 %v2944, 0.0
        %v3201 = vmax.f32 %v2945, 0.0
        %v3202 = vmax.f32 %v2946, 0.0
        %v3203 = vmax.f32 %v2947, 0.0
        %v3204 = vmax.f32 %v2948, 0.0
        %v3205 = vmax.f32 %v2949, 0.0
        %v3206 = vmax.f32 %v2950, 0.0
        %v3207 = vmax.f32 %v2951, 0.0
        %v3208 = vmax.f32 %v2952, 0.0
        %v3209 = vmax.f32 %v2953, 0.0
        %v3210 = vmax.f32 %v2954, 0.0
        %v3211 = vmax.f32 %v2955, 0.0
        %v3212 = vmax.f32 %v2956, 0.0
        %v3213 = vmax.f32 %v2957, 0.0
        %v3214 = vmax.f32 %v2958, 0.0
        %v3215 = vmax.f32 %v2959, 0.0
        %v3216 = vmax.f32 %v2960, 0.0
        %v3217 = vmax.f32 %v2961, 0.0
        %v3218 = vmax.f32 %v2962, 0.0
        %v3219 = vmax.f32 %v2963, 0.0
        %v3220 = vmax.f32 %v2964, 0.0
        %v3221 = vmax.f32 %v2965, 0.0
        %v3222 = vmax.f32 %v2966, 0.0
        %v3223 = vmax.f32 %v2967, 0.0
        %v3224 = vmax.f32 %v2968, 0.0
        %v3225 = vmax.f32 %v2969, 0.0
        %v3226 = vmax.f32 %v2970, 0.0
        %v3227 = vmax.f32 %v2971, 0.0
        %v3228 = vmax.f32 %v2972, 0.0
        %v3229 = vmax.f32 %v2973, 0.0
        %v3230 = vmax.f32 %v2974, 0.0
        %v3231 = vmax.f32 %v2975, 0.0
        %v3232 = vmax.f32 %v2976, 0.0
        %v3233 = vmax.f32 %v2977, 0.0
        %v3234 = vmax.f32 %v2978, 0.0
        %v3235 = vmax.f32 %v2979, 0.0
        %v3236 = vmax.f32 %v2980, 0.0
        %v3237 = vmax.f32 %v2981, 0.0
        %v3238 = vmax.f32 %v2982, 0.0
        %v3239 = vmax.f32 %v2983, 0.0
        %v3240 = vmax.f32 %v2984, 0.0
        %v3241 = vmax.f32 %v2985, 0.0
        %v3242 = vmax.f32 %v2986, 0.0
        %v3243 = vmax.f32 %v2987, 0.0
        %v3244 = vmax.f32 %v2988, 0.0
        %v3245 = vmax.f32 %v2989, 0.0
        %v3246 = vmax.f32 %v2990, 0.0
        %v3247 = vmax.f32 %v2991, 0.0
        %v3248 = vmax.f32 %v2992, 0.0
        %v3249 = vmax.f32 %v2993, 0.0
        %v3250 = vmax.f32 %v2994, 0.0
        %v3251 = vmax.f32 %v2995, 0.0
        %v3252 = vmax.f32 %v2996, 0.0
        %v3253 = vmax.f32 %v2997, 0.0
        %v3254 = vmax.f32 %v2998, 0.0
        %v3255 = vmax.f32 %v2999, 0.0
        %v3256 = vmax.f32 %v3000, 0.0
        %v3257 = vmax.f32 %v3001, 0.0
        %v3258 = vmax.f32 %v3002, 0.0
        %v3259 = vmax.f32 %v3003, 0.0
        %v3260 = vmax.f32 %v3004, 0.0
        %v3261 = vmax.f32 %v3005, 0.0
        %v3262 = vmax.f32 %v3006, 0.0
        %v3263 = vmax.f32 %v3007, 0.0
        %v3264 = vmax.f32 %v3008, 0.0
        %v3265 = vmax.f32 %v3009, 0.0
        %v3266 = vmax.f32 %v3010, 0.0
        %v3267 = vmax.f32 %v3011, 0.0
        %v3268 = vmax.f32 %v3012, 0.0
        %v3269 = vmax.f32 %v3013, 0.0
        %v3270 = vmax.f32 %v3014, 0.0
        %v3271 = vmax.f32 %v3015, 0.0
        %v3272 = vmax.f32 %v3016, 0.0
        %v3273 = vmax.f32 %v3017, 0.0
        %v3274 = vmax.f32 %v3018, 0.0
        %v3275 = vmax.f32 %v3019, 0.0
        %v3276 = vmax.f32 %v3020, 0.0
        %v3277 = vmax.f32 %v3021, 0.0
        %v3278 = vmax.f32 %v3022, 0.0
        %v3279 = vmax.f32 %v3023, 0.0
        %v3280 = vmax.f32 %v3024, 0.0
        %v3281 = vmax.f32 %v3025, 0.0
        %v3282 = vmax.f32 %v3026, 0.0
        %v3283 = vmax.f32 %v3027, 0.0
        %v3284 = vmax.f32 %v3028, 0.0
        %v3285 = vmax.f32 %v3029, 0.0
        %v3286 = vmax.f32 %v3030, 0.0
        %v3287 = vmax.f32 %v3031, 0.0
        %v3288 = vmax.f32 %v3032, 0.0
        %v3289 = vmax.f32 %v3033, 0.0
        %v3290 = vmax.f32 %v3034, 0.0
        %v3291 = vmax.f32 %v3035, 0.0
        %v3292 = vmax.f32 %v3036, 0.0
        %v3293 = vmax.f32 %v3037, 0.0
        %v3294 = vmax.f32 %v3038, 0.0
        %v3295 = vmax.f32 %v3039, 0.0
        %v3296 = vmax.f32 %v3040, 0.0
        %v3297 = vmax.f32 %v3041, 0.0
        %v3298 = vmax.f32 %v3042, 0.0
        %v3299 = vmax.f32 %v3043, 0.0
        %v3300 = vmax.f32 %v3044, 0.0
        %v3301 = vmax.f32 %v3045, 0.0
        %v3302 = vmax.f32 %v3046, 0.0
        %v3303 = vmax.f32 %v3047, 0.0
        %v3304 = vmax.f32 %v3048, 0.0
        %v3305 = vmax.f32 %v3049, 0.0
        %v3306 = vmax.f32 %v3050, 0.0
        %v3307 = vmax.f32 %v3051, 0.0
        %v3308 = vmax.f32 %v3052, 0.0
        %v3309 = vmax.f32 %v3053, 0.0
        %v3310 = vmax.f32 %v3054, 0.0
        %v3311 = vmax.f32 %v3055, 0.0
        %v3312 = vmax.f32 %v3056, 0.0
        %v3313 = vmax.f32 %v3057, 0.0
        %v3314 = vmax.f32 %v3058, 0.0
        %v3315 = vmax.f32 %v3059, 0.0
        %v3316 = vmax.f32 %v3060, 0.0
        %v3317 = vmax.f32 %v3061, 0.0
        %v3318 = vmax.f32 %v3062, 0.0
        %v3319 = vmax.f32 %v3063, 0.0
        %v3320 = vmax.f32 %v3064, 0.0
        %v3321 = vmax.f32 %v3065, 0.0
        %v3322 = vmax.f32 %v3066, 0.0
        %v3323 = vmax.f32 %v3067, 0.0
        %v3324 = vmax.f32 %v3068, 0.0
        %v3325 = vmax.f32 %v3069, 0.0
        %v3326 = vmax.f32 %v3070, 0.0
        %v3327 = vmax.f32 %v3071, 0.0
        %v3328 = vmax.f32 %v3072, 0.0
        %v3329 = vmax.f32 %v3073, 0.0
        %v3330 = vmax.f32 %v3074, 0.0
        %v3331 = vmax.f32 %v3075, 0.0
        %v3332 = vmax.f32 %v3076, 0.0
        %v3333 = vmax.f32 %v3077, 0.0
        %v3334 = vmax.f32 %v3078, 0.0
        %v3335 = vmax.f32 %v3079, 0.0
        %v3336 = vmax.f32 %v3080, 0.0
        %v3337 = vmax.f32 %v3081, 0.0
        %v3338 = vmax.f32 %v3082, 0.0
        %v3339 = vmax.f32 %v3083, 0.0
        %v3340 = vmax.f32 %v3084, 0.0
        %v3341 = vmax.f32 %v3085, 0.0
        %v3342 = vmax.f32 %v3086, 0.0
        %v3343 = vmax.f32 %v3087, 0.0
        %v3344 = vmax.f32 %v3088, 0.0
        %v3345 = vmax.f32 %v3089, 0.0
        %v3346 = vmax.f32 %v3090, 0.0
        %v3347 = vmax.f32 %v3091, 0.0
        %v3348 = vmax.f32 %v3092, 0.0
        %v3349 = vmax.f32 %v3093, 0.0
        %v3350 = vmax.f32 %v3094, 0.0
        %v3351 = vmax.f32 %v3095, 0.0
        %v3352 = vmax.f32 %v3096, 0.0
        %v3353 = vmax.f32 %v3097, 0.0
        %v3354 = vmax.f32 %v3098, 0.0
        %v3355 = vmax.f32 %v3099, 0.0
        %v3356 = vmax.f32 %v3100, 0.0
        %v3357 = vmax.f32 %v3101, 0.0
        %v3358 = vmax.f32 %v3102, 0.0
        %v3359 = vmax.f32 %v3103, 0.0
        %v3360 = vmax.f32 %v3104, 0.0
        %v3361 = vmax.f32 %v3105, 0.0
        %v3362 = vmax.f32 %v3106, 0.0
        %v3363 = vmax.f32 %v3107, 0.0
        %v3364 = vmax.f32 %v3108, 0.0
        %v3365 = vmax.f32 %v3109, 0.0
        %v3366 = vmax.f32 %v3110, 0.0
        %v3367 = vmax.f32 %v3111, 0.0
        %v3368 = vmax.f32 %v3112, 0.0
        %v3369 = vmax.f32 %v3113, 0.0
        %v3370 = vmax.f32 %v3114, 0.0
        %v3371 = vmax.f32 %v3115, 0.0
        %v3372 = vmax.f32 %v3116, 0.0
        %v3373 = vmax.f32 %v3117, 0.0
        %v3374 = vmax.f32 %v3118, 0.0
        %v3375 = vadd.f32 %v3119, %v3123
        %v3376 = vadd.f32 %v3375, %v3127
        %v3377 = vadd.f32 %v3376, %v3131
        %v3378 = vadd.f32 %v3377, %v3135
        %v3379 = vadd.f32 %v3378, %v3139
        %v3380 = vadd.f32 %v3379, %v3143
        %v3381 = vadd.f32 %v3380, %v3147
        %v3382 = vadd.f32 %v3381, %v3151
        %v3383 = vadd.f32 %v3382, %v3155
        %v3384 = vadd.f32 %v3383, %v3159
        %v3385 = vadd.f32 %v3384, %v3163
        %v3386 = vadd.f32 %v3385, %v3167
        %v3387 = vadd.f32 %v3386, %v3171
        %v3388 = vadd.f32 %v3387, %v3175
        %v3389 = vadd.f32 %v3388, %v3179
        %v3390 = vadd.f32 %v3389, %v3183
        %v3391 = vadd.f32 %v3390, %v3187
        %v3392 = vadd.f32 %v3391, %v3191
        %v3393 = vadd.f32 %v3392, %v3195
        %v3394 = vadd.f32 %v3393, %v3199
        %v3395 = vadd.f32 %v3394, %v3203
        %v3396 = vadd.f32 %v3395, %v3207
        %v3397 = vadd.f32 %v3396, %v3211
        %v3398 = vadd.f32 %v3397, %v3215
        %v3399 = vadd.f32 %v3398, %v3219
        %v3400 = vadd.f32 %v3399, %v3223
        %v3401 = vadd.f32 %v3400, %v3227
        %v3402 = vadd.f32 %v3401, %v3231
        %v3403 = vadd.f32 %v3402, %v3235
        %v3404 = vadd.f32 %v3403, %v3239
        %v3405 = vadd.f32 %v3404, %v3243
        %v3406 = vrot.slane %v3405, 4
        %v3407 = vadd.f32 %v3405, %v3406
        %v3408 = vrot.slane %v3407, 2
        %v3409 = vadd.f32 %v3407, %v3408
        %v3410 = vrot.slane %v3409, 1
        %v3411 = vadd.f32 %v3409, %v3410
        %v3412 = vadd.f32 %v3120, %v3124
        %v3413 = vadd.f32 %v3412, %v3128
        %v3414 = vadd.f32 %v3413, %v3132
        %v3415 = vadd.f32 %v3414, %v3136
        %v3416 = vadd.f32 %v3415, %v3140
        %v3417 = vadd.f32 %v3416, %v3144
        %v3418 = vadd.f32 %v3417, %v3148
        %v3419 = vadd.f32 %v3418, %v3152
        %v3420 = vadd.f32 %v3419, %v3156
        %v3421 = vadd.f32 %v3420, %v3160
        %v3422 = vadd.f32 %v3421, %v3164
        %v3423 = vadd.f32 %v3422, %v3168
        %v3424 = vadd.f32 %v3423, %v3172
        %v3425 = vadd.f32 %v3424, %v3176
        %v3426 = vadd.f32 %v3425, %v3180
        %v3427 = vadd.f32 %v3426, %v3184
        %v3428 = vadd.f32 %v3427, %v3188
        %v3429 = vadd.f32 %v3428, %v3192
        %v3430 = vadd.f32 %v3429, %v3196
        %v3431 = vadd.f32 %v3430, %v3200
        %v3432 = vadd.f32 %v3431, %v3204
        %v3433 = vadd.f32 %v3432, %v3208
        %v3434 = vadd.f32 %v3433, %v3212
        %v3435 = vadd.f32 %v3434, %v3216
        %v3436 = vadd.f32 %v3435, %v3220
        %v3437 = vadd.f32 %v3436, %v3224
        %v3438 = vadd.f32 %v3437, %v3228
        %v3439 = vadd.f32 %v3438, %v3232
        %v3440 = vadd.f32 %v3439, %v3236
        %v3441 = vadd.f32 %v3440, %v3240
        %v3442 = vadd.f32 %v3441, %v3244
        %v3443 = vrot.slane %v3442, 4
        %v3444 = vadd.f32 %v3442, %v3443
        %v3445 = vrot.slane %v3444, 2
        %v3446 = vadd.f32 %v3444, %v3445
        %v3447 = vrot.slane %v3446, 1
        %v3448 = vadd.f32 %v3446, %v3447
        %v3449 = vadd.f32 %v3121, %v3125
        %v3450 = vadd.f32 %v3449, %v3129
        %v3451 = vadd.f32 %v3450, %v3133
        %v3452 = vadd.f32 %v3451, %v3137
        %v3453 = vadd.f32 %v3452, %v3141
        %v3454 = vadd.f32 %v3453, %v3145
        %v3455 = vadd.f32 %v3454, %v3149
        %v3456 = vadd.f32 %v3455, %v3153
        %v3457 = vadd.f32 %v3456, %v3157
        %v3458 = vadd.f32 %v3457, %v3161
        %v3459 = vadd.f32 %v3458, %v3165
        %v3460 = vadd.f32 %v3459, %v3169
        %v3461 = vadd.f32 %v3460, %v3173
        %v3462 = vadd.f32 %v3461, %v3177
        %v3463 = vadd.f32 %v3462, %v3181
        %v3464 = vadd.f32 %v3463, %v3185
        %v3465 = vadd.f32 %v3464, %v3189
        %v3466 = vadd.f32 %v3465, %v3193
        %v3467 = vadd.f32 %v3466, %v3197
        %v3468 = vadd.f32 %v3467, %v3201
        %v3469 = vadd.f32 %v3468, %v3205
        %v3470 = vadd.f32 %v3469, %v3209
        %v3471 = vadd.f32 %v3470, %v3213
        %v3472 = vadd.f32 %v3471, %v3217
        %v3473 = vadd.f32 %v3472, %v3221
        %v3474 = vadd.f32 %v3473, %v3225
        %v3475 = vadd.f32 %v3474, %v3229
        %v3476 = vadd.f32 %v3475, %v3233
        %v3477 = vadd.f32 %v3476, %v3237
        %v3478 = vadd.f32 %v3477, %v3241
        %v3479 = vadd.f32 %v3478, %v3245
        %v3480 = vrot.slane %v3479, 4
        %v3481 = vadd.f32 %v3479, %v3480
        %v3482 = vrot.slane %v3481, 2
        %v3483 = vadd.f32 %v3481, %v3482
        %v3484 = vrot.slane %v3483, 1
        %v3485 = vadd.f32 %v3483, %v3484
        %v3486 = vadd.f32 %v3122, %v3126
        %v3487 = vadd.f32 %v3486, %v3130
        %v3488 = vadd.f32 %v3487, %v3134
        %v3489 = vadd.f32 %v3488, %v3138
        %v3490 = vadd.f32 %v3489, %v3142
        %v3491 = vadd.f32 %v3490, %v3146
        %v3492 = vadd.f32 %v3491, %v3150
        %v3493 = vadd.f32 %v3492, %v3154
        %v3494 = vadd.f32 %v3493, %v3158
        %v3495 = vadd.f32 %v3494, %v3162
        %v3496 = vadd.f32 %v3495, %v3166
        %v3497 = vadd.f32 %v3496, %v3170
        %v3498 = vadd.f32 %v3497, %v3174
        %v3499 = vadd.f32 %v3498, %v3178
        %v3500 = vadd.f32 %v3499, %v3182
        %v3501 = vadd.f32 %v3500, %v3186
        %v3502 = vadd.f32 %v3501, %v3190
        %v3503 = vadd.f32 %v3502, %v3194
        %v3504 = vadd.f32 %v3503, %v3198
        %v3505 = vadd.f32 %v3504, %v3202
        %v3506 = vadd.f32 %v3505, %v3206
        %v3507 = vadd.f32 %v3506, %v3210
        %v3508 = vadd.f32 %v3507, %v3214
        %v3509 = vadd.f32 %v3508, %v3218
        %v3510 = vadd.f32 %v3509, %v3222
        %v3511 = vadd.f32 %v3510, %v3226
        %v3512 = vadd.f32 %v3511, %v3230
        %v3513 = vadd.f32 %v3512, %v3234
        %v3514 = vadd.f32 %v3513, %v3238
        %v3515 = vadd.f32 %v3514, %v3242
        %v3516 = vadd.f32 %v3515, %v3246
        %v3517 = vrot.slane %v3516, 4
        %v3518 = vadd.f32 %v3516, %v3517
        %v3519 = vrot.slane %v3518, 2
        %v3520 = vadd.f32 %v3518, %v3519
        %v3521 = vrot.slane %v3520, 1
        %v3522 = vadd.f32 %v3520, %v3521
        %v3523 = vadd.f32 %v3247, %v3251
        %v3524 = vadd.f32 %v3523, %v3255
        %v3525 = vadd.f32 %v3524, %v3259
        %v3526 = vadd.f32 %v3525, %v3263
        %v3527 = vadd.f32 %v3526, %v3267
        %v3528 = vadd.f32 %v3527, %v3271
        %v3529 = vadd.f32 %v3528, %v3275
        %v3530 = vadd.f32 %v3529, %v3279
        %v3531 = vadd.f32 %v3530, %v3283
        %v3532 = vadd.f32 %v3531, %v3287
        %v3533 = vadd.f32 %v3532, %v3291
        %v3534 = vadd.f32 %v3533, %v3295
        %v3535 = vadd.f32 %v3534, %v3299
        %v3536 = vadd.f32 %v3535, %v3303
        %v3537 = vadd.f32 %v3536, %v3307
        %v3538 = vadd.f32 %v3537, %v3311
        %v3539 = vadd.f32 %v3538, %v3315
        %v3540 = vadd.f32 %v3539, %v3319
        %v3541 = vadd.f32 %v3540, %v3323
        %v3542 = vadd.f32 %v3541, %v3327
        %v3543 = vadd.f32 %v3542, %v3331
        %v3544 = vadd.f32 %v3543, %v3335
        %v3545 = vadd.f32 %v3544, %v3339
        %v3546 = vadd.f32 %v3545, %v3343
        %v3547 = vadd.f32 %v3546, %v3347
        %v3548 = vadd.f32 %v3547, %v3351
        %v3549 = vadd.f32 %v3548, %v3355
        %v3550 = vadd.f32 %v3549, %v3359
        %v3551 = vadd.f32 %v3550, %v3363
        %v3552 = vadd.f32 %v3551, %v3367
        %v3553 = vadd.f32 %v3552, %v3371
        %v3554 = vrot.slane %v3553, 4
        %v3555 = vadd.f32 %v3553, %v3554
        %v3556 = vrot.slane %v3555, 2
        %v3557 = vadd.f32 %v3555, %v3556
        %v3558 = vrot.slane %v3557, 1
        %v3559 = vadd.f32 %v3557, %v3558
        %v3560 = vadd.f32 %v3248, %v3252
        %v3561 = vadd.f32 %v3560, %v3256
        %v3562 = vadd.f32 %v3561, %v3260
        %v3563 = vadd.f32 %v3562, %v3264
        %v3564 = vadd.f32 %v3563, %v3268
        %v3565 = vadd.f32 %v3564, %v3272
        %v3566 = vadd.f32 %v3565, %v3276
        %v3567 = vadd.f32 %v3566, %v3280
        %v3568 = vadd.f32 %v3567, %v3284
        %v3569 = vadd.f32 %v3568, %v3288
        %v3570 = vadd.f32 %v3569, %v3292
        %v3571 = vadd.f32 %v3570, %v3296
        %v3572 = vadd.f32 %v3571, %v3300
        %v3573 = vadd.f32 %v3572, %v3304
        %v3574 = vadd.f32 %v3573, %v3308
        %v3575 = vadd.f32 %v3574, %v3312
        %v3576 = vadd.f32 %v3575, %v3316
        %v3577 = vadd.f32 %v3576, %v3320
        %v3578 = vadd.f32 %v3577, %v3324
        %v3579 = vadd.f32 %v3578, %v3328
        %v3580 = vadd.f32 %v3579, %v3332
        %v3581 = vadd.f32 %v3580, %v3336
        %v3582 = vadd.f32 %v3581, %v3340
        %v3583 = vadd.f32 %v3582, %v3344
        %v3584 = vadd.f32 %v3583, %v3348
        %v3585 = vadd.f32 %v3584, %v3352
        %v3586 = vadd.f32 %v3585, %v3356
        %v3587 = vadd.f32 %v3586, %v3360
        %v3588 = vadd.f32 %v3587, %v3364
        %v3589 = vadd.f32 %v3588, %v3368
        %v3590 = vadd.f32 %v3589, %v3372
        %v3591 = vrot.slane %v3590, 4
        %v3592 = vadd.f32 %v3590, %v3591
        %v3593 = vrot.slane %v3592, 2
        %v3594 = vadd.f32 %v3592, %v3593
        %v3595 = vrot.slane %v3594, 1
        %v3596 = vadd.f32 %v3594, %v3595
        %v3597 = vadd.f32 %v3249, %v3253
        %v3598 = vadd.f32 %v3597, %v3257
        %v3599 = vadd.f32 %v3598, %v3261
        %v3600 = vadd.f32 %v3599, %v3265
        %v3601 = vadd.f32 %v3600, %v3269
        %v3602 = vadd.f32 %v3601, %v3273
        %v3603 = vadd.f32 %v3602, %v3277
        %v3604 = vadd.f32 %v3603, %v3281
        %v3605 = vadd.f32 %v3604, %v3285
        %v3606 = vadd.f32 %v3605, %v3289
        %v3607 = vadd.f32 %v3606, %v3293
        %v3608 = vadd.f32 %v3607, %v3297
        %v3609 = vadd.f32 %v3608, %v3301
        %v3610 = vadd.f32 %v3609, %v3305
        %v3611 = vadd.f32 %v3610, %v3309
        %v3612 = vadd.f32 %v3611, %v3313
        %v3613 = vadd.f32 %v3612, %v3317
        %v3614 = vadd.f32 %v3613, %v3321
        %v3615 = vadd.f32 %v3614, %v3325
        %v3616 = vadd.f32 %v3615, %v3329
        %v3617 = vadd.f32 %v3616, %v3333
        %v3618 = vadd.f32 %v3617, %v3337
        %v3619 = vadd.f32 %v3618, %v3341
        %v3620 = vadd.f32 %v3619, %v3345
        %v3621 = vadd.f32 %v3620, %v3349
        %v3622 = vadd.f32 %v3621, %v3353
        %v3623 = vadd.f32 %v3622, %v3357
        %v3624 = vadd.f32 %v3623, %v3361
        %v3625 = vadd.f32 %v3624, %v3365
        %v3626 = vadd.f32 %v3625, %v3369
        %v3627 = vadd.f32 %v3626, %v3373
        %v3628 = vrot.slane %v3627, 4
        %v3629 = vadd.f32 %v3627, %v3628
        %v3630 = vrot.slane %v3629, 2
        %v3631 = vadd.f32 %v3629, %v3630
        %v3632 = vrot.slane %v3631, 1
        %v3633 = vadd.f32 %v3631, %v3632
        %v3634 = vadd.f32 %v3250, %v3254
        %v3635 = vadd.f32 %v3634, %v3258
        %v3636 = vadd.f32 %v3635, %v3262
        %v3637 = vadd.f32 %v3636, %v3266
        %v3638 = vadd.f32 %v3637, %v3270
        %v3639 = vadd.f32 %v3638, %v3274
        %v3640 = vadd.f32 %v3639, %v3278
        %v3641 = vadd.f32 %v3640, %v3282
        %v3642 = vadd.f32 %v3641, %v3286
        %v3643 = vadd.f32 %v3642, %v3290
        %v3644 = vadd.f32 %v3643, %v3294
        %v3645 = vadd.f32 %v3644, %v3298
        %v3646 = vadd.f32 %v3645, %v3302
        %v3647 = vadd.f32 %v3646, %v3306
        %v3648 = vadd.f32 %v3647, %v3310
        %v3649 = vadd.f32 %v3648, %v3314
        %v3650 = vadd.f32 %v3649, %v3318
        %v3651 = vadd.f32 %v3650, %v3322
        %v3652 = vadd.f32 %v3651, %v3326
        %v3653 = vadd.f32 %v3652, %v3330
        %v3654 = vadd.f32 %v3653, %v3334
        %v3655 = vadd.f32 %v3654, %v3338
        %v3656 = vadd.f32 %v3655, %v3342
        %v3657 = vadd.f32 %v3656, %v3346
        %v3658 = vadd.f32 %v3657, %v3350
        %v3659 = vadd.f32 %v3658, %v3354
        %v3660 = vadd.f32 %v3659, %v3358
        %v3661 = vadd.f32 %v3660, %v3362
        %v3662 = vadd.f32 %v3661, %v3366
        %v3663 = vadd.f32 %v3662, %v3370
        %v3664 = vadd.f32 %v3663, %v3374
        %v3665 = vrot.slane %v3664, 4
        %v3666 = vadd.f32 %v3664, %v3665
        %v3667 = vrot.slane %v3666, 2
        %v3668 = vadd.f32 %v3666, %v3667
        %v3669 = vrot.slane %v3668, 1
        %v3670 = vadd.f32 %v3668, %v3669
        %v3671 = vld [vmem:[#allocation2] sm:$0x3]
        %v3672 = vpack.c.bf16 %v3411, %v3411
        %v3673 = vpack.c.bf16 %v3448, %v3448
        %v3674 = vpack.c.bf16 %v3485, %v3485
        %v3675 = vpack.c.bf16 %v3522, %v3522
        %v3676 = vpack.c.bf16 %v3559, %v3559
        %v3677 = vpack.c.bf16 %v3596, %v3596
        %v3678 = vpack.c.bf16 %v3633, %v3633
        %v3679 = vpack.c.bf16 %v3670, %v3670
        %v3680 = vld [vmem:[%s284] sm:$0xff]
        %v3681 = vld [vmem:[%s284 + $0x8] sm:$0xff]
        %v3682 = vld [vmem:[%s284 + $0x10] sm:$0xff]
        %v3683 = vld [vmem:[%s284 + $0x18] sm:$0xff]
        %v3684 = vld [vmem:[%s284 + $0x20] sm:$0xff]
        %v3685 = vld [vmem:[%s284 + $0x28] sm:$0xff]
        %v3686 = vld [vmem:[%s284 + $0x30] sm:$0xff]
        %v3687 = vld [vmem:[%s284 + $0x38] sm:$0xff]
        %v3688 = vld [vmem:[%s284 + $0x40] sm:$0xff]
        %v3689 = vld [vmem:[%s284 + $0x48] sm:$0xff]
        %v3690 = vld [vmem:[%s284 + $0x50] sm:$0xff]
        %v3691 = vld [vmem:[%s284 + $0x58] sm:$0xff]
        %v3692 = vld [vmem:[%s284 + $0x60] sm:$0xff]
        %v3693 = vld [vmem:[%s284 + $0x68] sm:$0xff]
        %v3694 = vld [vmem:[%s284 + $0x70] sm:$0xff]
        %v3695 = vld [vmem:[%s284 + $0x78] sm:$0xff]
        %v3696 = vld [vmem:[%s284 + $0x80] sm:$0xff]
        %v3697 = vld [vmem:[%s284 + $0x88] sm:$0xff]
        %v3698 = vld [vmem:[%s284 + $0x90] sm:$0xff]
        %v3699 = vld [vmem:[%s284 + $0x98] sm:$0xff]
        %v3700 = vld [vmem:[%s284 + $0xa0] sm:$0xff]
        %v3701 = vld [vmem:[%s284 + $0xa8] sm:$0xff]
        %v3702 = vld [vmem:[%s284 + $0xb0] sm:$0xff]
        %v3703 = vld [vmem:[%s284 + $0xb8] sm:$0xff]
        %v3704 = vld [vmem:[%s284 + $0xc0] sm:$0xff]
        %v3705 = vld [vmem:[%s284 + $0xc8] sm:$0xff]
        %v3706 = vld [vmem:[%s284 + $0xd0] sm:$0xff]
        %v3707 = vld [vmem:[%s284 + $0xd8] sm:$0xff]
        %v3708 = vld [vmem:[%s284 + $0xe0] sm:$0xff]
        %v3709 = vld [vmem:[%s284 + $0xe8] sm:$0xff]
        %v3710 = vld [vmem:[%s284 + $0xf0] sm:$0xff]
        %v3711 = vld [vmem:[%s284 + $0xf8] sm:$0xff]
        %v3712 = vld [vmem:[%s284 + $0x100] sm:$0xff]
        %v3713 = vld [vmem:[%s284 + $0x108] sm:$0xff]
        %v3714 = vld [vmem:[%s284 + $0x110] sm:$0xff]
        %v3715 = vld [vmem:[%s284 + $0x118] sm:$0xff]
        %v3716 = vld [vmem:[%s284 + $0x120] sm:$0xff]
        %v3717 = vld [vmem:[%s284 + $0x128] sm:$0xff]
        %v3718 = vld [vmem:[%s284 + $0x130] sm:$0xff]
        %v3719 = vld [vmem:[%s284 + $0x138] sm:$0xff]
        %v3720 = vld [vmem:[%s284 + $0x140] sm:$0xff]
        %v3721 = vld [vmem:[%s284 + $0x148] sm:$0xff]
        %v3722 = vld [vmem:[%s284 + $0x150] sm:$0xff]
        %v3723 = vld [vmem:[%s284 + $0x158] sm:$0xff]
        %v3724 = vld [vmem:[%s284 + $0x160] sm:$0xff]
        %v3725 = vld [vmem:[%s284 + $0x168] sm:$0xff]
        %v3726 = vld [vmem:[%s284 + $0x170] sm:$0xff]
        %v3727 = vld [vmem:[%s284 + $0x178] sm:$0xff]
        %v3728 = vld [vmem:[%s284 + $0x180] sm:$0xff]
        %v3729 = vld [vmem:[%s284 + $0x188] sm:$0xff]
        %v3730 = vld [vmem:[%s284 + $0x190] sm:$0xff]
        %v3731 = vld [vmem:[%s284 + $0x198] sm:$0xff]
        %v3732 = vld [vmem:[%s284 + $0x1a0] sm:$0xff]
        %v3733 = vld [vmem:[%s284 + $0x1a8] sm:$0xff]
        %v3734 = vld [vmem:[%s284 + $0x1b0] sm:$0xff]
        %v3735 = vld [vmem:[%s284 + $0x1b8] sm:$0xff]
        %v3736 = vld [vmem:[%s284 + $0x1c0] sm:$0xff]
        %v3737 = vld [vmem:[%s284 + $0x1c8] sm:$0xff]
        %v3738 = vld [vmem:[%s284 + $0x1d0] sm:$0xff]
        %v3739 = vld [vmem:[%s284 + $0x1d8] sm:$0xff]
        %v3740 = vld [vmem:[%s284 + $0x1e0] sm:$0xff]
        %v3741 = vld [vmem:[%s284 + $0x1e8] sm:$0xff]
        %v3742 = vld [vmem:[%s284 + $0x1f0] sm:$0xff]
        %v3743 = vld [vmem:[%s284 + $0x1f8] sm:$0xff]
        %v3744 = vpack.c.bf16 %v3681, %v3680
        %v3745 = vpack.c.bf16 %v3683, %v3682
        %v3746 = vpack.c.bf16 %v3685, %v3684
        %v3747 = vpack.c.bf16 %v3687, %v3686
        %v3748 = vpack.c.bf16 %v3689, %v3688
        %v3749 = vpack.c.bf16 %v3691, %v3690
        %v3750 = vpack.c.bf16 %v3693, %v3692
        %v3751 = vpack.c.bf16 %v3695, %v3694
        %v3752 = vpack.c.bf16 %v3697, %v3696
        %v3753 = vpack.c.bf16 %v3699, %v3698
        %v3754 = vpack.c.bf16 %v3701, %v3700
        %v3755 = vpack.c.bf16 %v3703, %v3702
        %v3756 = vpack.c.bf16 %v3705, %v3704
        %v3757 = vpack.c.bf16 %v3707, %v3706
        %v3758 = vpack.c.bf16 %v3709, %v3708
        %v3759 = vpack.c.bf16 %v3711, %v3710
        %v3760 = vpack.c.bf16 %v3713, %v3712
        %v3761 = vpack.c.bf16 %v3715, %v3714
        %v3762 = vpack.c.bf16 %v3717, %v3716
        %v3763 = vpack.c.bf16 %v3719, %v3718
        %v3764 = vpack.c.bf16 %v3721, %v3720
        %v3765 = vpack.c.bf16 %v3723, %v3722
        %v3766 = vpack.c.bf16 %v3725, %v3724
        %v3767 = vpack.c.bf16 %v3727, %v3726
        %v3768 = vpack.c.bf16 %v3729, %v3728
        %v3769 = vpack.c.bf16 %v3731, %v3730
        %v3770 = vpack.c.bf16 %v3733, %v3732
        %v3771 = vpack.c.bf16 %v3735, %v3734
        %v3772 = vpack.c.bf16 %v3737, %v3736
        %v3773 = vpack.c.bf16 %v3739, %v3738
        %v3774 = vpack.c.bf16 %v3741, %v3740
        %v3775 = vpack.c.bf16 %v3743, %v3742
        %v3784 = vunpack.c.l.b16 %v3672
        %v3785 = vunpack.c.l.b16 %v3673
        %v3786 = vunpack.c.l.b16 %v3674
        %v3787 = vunpack.c.l.b16 %v3675
        %v3788 = vunpack.c.l.b16 %v3676
        %v3789 = vunpack.c.l.b16 %v3677
        %v3790 = vunpack.c.l.b16 %v3678
        %v3791 = vunpack.c.l.b16 %v3679
        %vm3792 = vcmask 1041409
        %v3793 = vsel %vm3792, %v3788, %v3784
        %v3794 = vsel %vm3792, %v3789, %v3785
        %v3795 = vsel %vm3792, %v3790, %v3786
        %v3796 = vsel %vm3792, %v3791, %v3787
        %v3797 = vpack.c.b16 %v3793, %v3793
        %v3798 = vpack.c.b16 %v3794, %v3794
        %v3799 = vpack.c.b16 %v3795, %v3795
        %v3800 = vpack.c.b16 %v3796, %v3796
        %3805 = vmatpush.bf16.msra.mxu0 %v3751
        %3806 = vmatpush.bf16.msra.mxu0 %v3750
        %3807 = vmatpush.bf16.msra.mxu0 %v3749
        %3808 = vmatpush.bf16.msra.mxu0 %v3748
        %3809 = vmatpush.bf16.msra.mxu0 %v3747
        %3810 = vmatpush.bf16.msra.mxu0 %v3746
        %3811 = vmatpush.bf16.msra.mxu0 %v3745
        %3812 = vmatpush.bf16.msra.mxu0 %v3744
        %3813 = vmatmul.bf16.gmra.mxu0 %v3797
        %v3814 = vpop.f32.mrf.mxu0
        %v3815 = vadd.f32 0.0, %v3814
        %v3816 = vpop.f32.mrf.mxu0
        %3817 = vdwg.mxu0
        %3818 = vmatpush.bf16.msra.mxu0 %v3759
        %3819 = vmatpush.bf16.msra.mxu0 %v3758
        %3820 = vmatpush.bf16.msra.mxu0 %v3757
        %3821 = vmatpush.bf16.msra.mxu0 %v3756
        %3822 = vmatpush.bf16.msra.mxu0 %v3755
        %3823 = vmatpush.bf16.msra.mxu0 %v3754
        %3824 = vmatpush.bf16.msra.mxu0 %v3753
        %3825 = vmatpush.bf16.msra.mxu0 %v3752
        %3826 = vmatmul.bf16.gmra.mxu0 %v3798
        %v3827 = vpop.f32.mrf.mxu0
        %v3828 = vadd.f32 %v3815, %v3827
        %v3829 = vpop.f32.mrf.mxu0
        %3830 = vdwg.mxu0
        %3831 = vmatpush.bf16.msra.mxu0 %v3767
        %3832 = vmatpush.bf16.msra.mxu0 %v3766
        %3833 = vmatpush.bf16.msra.mxu0 %v3765
        %3834 = vmatpush.bf16.msra.mxu0 %v3764
        %3835 = vmatpush.bf16.msra.mxu0 %v3763
        %3836 = vmatpush.bf16.msra.mxu0 %v3762
        %3837 = vmatpush.bf16.msra.mxu0 %v3761
        %3838 = vmatpush.bf16.msra.mxu0 %v3760
        %3839 = vmatmul.bf16.gmra.mxu0 %v3799
        %v3840 = vpop.f32.mrf.mxu0
        %v3841 = vadd.f32 %v3828, %v3840
        %v3842 = vpop.f32.mrf.mxu0
        %3843 = vdwg.mxu0
        %3844 = vmatpush.bf16.msra.mxu0 %v3775
        %3845 = vmatpush.bf16.msra.mxu0 %v3774
        %3846 = vmatpush.bf16.msra.mxu0 %v3773
        %3847 = vmatpush.bf16.msra.mxu0 %v3772
        %3848 = vmatpush.bf16.msra.mxu0 %v3771
        %3849 = vmatpush.bf16.msra.mxu0 %v3770
        %3850 = vmatpush.bf16.msra.mxu0 %v3769
        %3851 = vmatpush.bf16.msra.mxu0 %v3768
        %3852 = vmatmul.bf16.gmra.mxu0 %v3800
        %v3853 = vpop.f32.mrf.mxu0
        %v3854 = vadd.f32 %v3841, %v3853
        %v3855 = vpop.f32.mrf.mxu0
        %3856 = vdwg.mxu0
        %v3857 = vadd.f32 %v3671, %v3854
        %3858 = vst [vmem:[#allocation2] sm:$0x3] %v3857
        %p3859 = scmp.eq.s32.totalorder %s28, 3
        // Predicated region
        $region53: #{tpu_custom_call.1} parent=39 // pred_check
          %p3860 = pneg %p3859
        $region54: #{tpu_custom_call.1} parent=39 // pred_check_branch
          %3862 = sbr.rel (%p3860) target = $region56
        $region55: #{tpu_custom_call.1} parent=39 // pred_region
          %v3863 = vld [vmem:[#allocation2] sm:$0x3]
          %v3864 = vld [vmem:[%s4] sm:$0x1]
          %v3866 = vperm.slane %v3864, 0
          %v3868 = vadd.f32 %v3863, %v3866
          %3869 = vst [vmem:[#allocation8] sm:$0x3] %v3868
        $region56: #{tpu_custom_call.1} parent=39 // pred_fallthru
          _
        // Predicated region
        $region57: #{tpu_custom_call.1} parent=39 // pred_check
          %p3870 = pneg %p178
        $region58: #{tpu_custom_call.1} parent=39 // pred_check_branch
          %3872 = sbr.rel (%p3870) target = $region60
        $region59: #{tpu_custom_call.1} parent=39 // pred_region
          %3874 = vsyncadd [#allocation5], 0
          %s3875 = smul.addr %s27, 2
          %s3876 = scalar_lea.hbm %s5, %s3875
          %s3878 = sshll.u32 [#allocation8], 4
          %s3879 = int_to_ptr.vmem [resolvable:$true] %s3878
          %s3880 = sshll.u32 %s3876, 4
          %s3881 = int_to_ptr.hbm [resolvable:$true] %s3880
          %3883 = dma.vmem_to_hbm [thread:$0]  %s3879, 32, %s3881, [#allocation5]
        $region60: #{tpu_custom_call.1} parent=39 // pred_fallthru
          _
        // Predicated region
        $region61: #{tpu_custom_call.1} parent=39 // pred_check
          %p3884 = pneg %p178
        $region62: #{tpu_custom_call.1} parent=39 // pred_check_branch
          %3886 = sbr.rel (%p3884) target = $region64
        $region63: #{tpu_custom_call.1} parent=39 // pred_region
          %3888 = dma.done [#allocation5], 32
        $region64: #{tpu_custom_call.1} parent=39 // pred_fallthru
          _
      $region40: #{tpu_custom_call.1} parent=5 // pred_fallthru
        _
      %p3889 = scmp.le.s32.totalorder 2, %s18
      // Predicated region
      $region65: #{tpu_custom_call.1} parent=5 // pred_check
        %p3890 = pneg %p3889
      $region66: #{tpu_custom_call.1} parent=5 // pred_check_branch
        %3892 = sbr.rel (%p3890) target = $region68
      $region67: #{tpu_custom_call.1} parent=5 // pred_region
        %s3893 = ssub.s32 %s18, 2
      $region68: #{tpu_custom_call.1} parent=5 // pred_fallthru
        _
    $region6: #{tpu_custom_call.1} parent=1 // loop_footer
      %s22 = sadd.s32 1, %s18
    $region7: #{tpu_custom_call.1} parent=1 // loop_footer_branch
      %17 = sbr.rel target = $region3
    $region8: #{tpu_custom_call.1} parent=1 // loop_exit
      _
    %3894 = vsyncpa [#allocation4], 1
    %s3895 = scalar_lea.sflag [#allocation4], 1
    %3896 = vsyncpa %s3895, 1
    %3897 = vsyncpa [#allocation7], 1
    %s3898 = scalar_lea.sflag [#allocation7], 1
    %3899 = vsyncpa %s3898, 1
    %3900 = vsyncpa [#allocation5], 1
    %s3901 = scalar_lea.sflag [#allocation5], 1
    %3902 = vsyncpa %s3901, 1

</llo_original>
